<compile_context>
chip_gen: v7x
topology: tpu7x:2x2x1
jax: 0.10.0
libtpu: 0.0.40
codegen_flags: <defaults>
</compile_context>

<pallas_src>
import functools
import math

import jax
import jax.numpy as jnp
from jax.experimental import pallas as pl
from jax.experimental.pallas import tpu as pltpu

HID = 128                      # hid_dim
N_HEADS = 4
HEAD = HID // N_HEADS          # 32
F_AGENT, F_LMK, F_CAG = 13, 5, 14
# fused per-row observation matrix (lane layout):
#   cols [0:16)  agent features (13 used)
#   cols [16:24) landmark features (5 used)
#   cols [24:40) central-agent features (14 used)
F_OBS = 40
# packed logits row: lanes [0:4) = final_linear_mov, [8:8+A) = final_linear_inter
MOV_OFF, INT_OFF = 0, 8


# ----------------------------------------------------------------------------- kernel
def _make_kernel(n_agents, n_landmarks):
    NA, NL = n_agents, n_landmarks
    S = NA + NL + 1

    def kernel(x_ref, hx_ref, cx_ref, wobs_ref, whid_ref, wlstm_ref, b_ref,
               hxo_ref, cxo_ref, act_ref):
        f32 = jnp.float32
        relu = lambda v: jnp.maximum(v, 0.0)
        sigmoid = lambda v: 1.0 / (1.0 + jnp.exp(-v))
        dot = lambda a_, b_: jnp.dot(a_, b_, preferred_element_type=f32)

        x = x_ref[...]                                 # (S, F_OBS)
        b = b_ref[...]                                 # (16, HID) bias slab

        # one fused MXU pass for all three input linears (block-diagonal weights)
        xw = dot(x, wobs_ref[...])                     # (S, HID)

        # central-agent feature c = relu(c_obs @ Wc + bc)  (== row S-1 of xw + bc)
        c = relu(xw[S - 1:S, :] + b[0:1])              # (1, HID)

        # per-row additive c-projection + bias, selected by segment (no concat/repeat)
        ca = dot(c, whid_ref[pl.ds(0, HID), :])        # c @ Wa_c
        cl = dot(c, whid_ref[pl.ds(HID, HID), :])      # c @ Wl_c
        ids = jax.lax.broadcasted_iota(jnp.int32, (S, 1), 0)
        sel_a = (ids < NA).astype(f32)
        sel_l = jnp.logical_and(ids >= NA, ids < NA + NL).astype(f32)
        sel_c = (ids == S - 1).astype(f32)
        seq = relu(xw
                   + sel_a * (ca + b[1:2])
                   + sel_l * (cl + b[2:3])
                   + sel_c * b[0:1])                   # (S, HID)

        # multi-head self-attention (4 heads x 32); out-proj folded per head
        q = dot(seq, whid_ref[pl.ds(2 * HID, HID), :]) + b[3:4]
        k = dot(seq, whid_ref[pl.ds(3 * HID, HID), :]) + b[4:5]
        v = dot(seq, whid_ref[pl.ds(4 * HID, HID), :]) + b[5:6]
        scale = 1.0 / math.sqrt(float(HEAD))
        acc = None
        for h in range(N_HEADS):
            qh = q[:, h * HEAD:(h + 1) * HEAD]
            kh = k[:, h * HEAD:(h + 1) * HEAD]
            vh = v[:, h * HEAD:(h + 1) * HEAD]
            s = jnp.einsum("qd,kd->qk", qh, kh,
                           preferred_element_type=f32) * scale          # (S, S)
            s = s - jnp.max(s, axis=-1, keepdims=True)
            p = jnp.exp(s)
            p = p / jnp.sum(p, axis=-1, keepdims=True)
            oh = dot(p, vh)                                              # (S, HEAD)
            part = dot(oh, whid_ref[pl.ds(5 * HID + h * HEAD, HEAD), :]) # (S, HID)
            acc = part if acc is None else acc + part
        attn = acc + b[6:7]                                              # out_proj bias

        # residual projection + mean over sequence (1/S folded into W_ih rows)
        r = attn + dot(attn, whid_ref[pl.ds(6 * HID, HID), :]) + b[7:8]
        rsum = jnp.sum(r, axis=0, keepdims=True)                         # (1, HID)

        # LSTMCell(2*HID, HID): input concat eliminated by splitting W_ih
        gates = (dot(rsum, wlstm_ref[pl.ds(0, HID), :])
                 + dot(c, wlstm_ref[pl.ds(HID, HID), :])
                 + dot(hx_ref[...], wlstm_ref[pl.ds(2 * HID, HID), :]))  # (1, 4*HID)
        i_g = sigmoid(gates[:, 0 * HID:1 * HID] + b[9:10])
        f_g = sigmoid(gates[:, 1 * HID:2 * HID] + b[10:11])
        g_g = jnp.tanh(gates[:, 2 * HID:3 * HID] + b[11:12])
        o_g = sigmoid(gates[:, 3 * HID:4 * HID] + b[12:13])
        cx_new = f_g * cx_ref[...] + i_g * g_g
        hx_new = o_g * jnp.tanh(cx_new)

        # both action heads in one lane-dense (1, 128) matmul / output
        act = dot(hx_new, whid_ref[pl.ds(7 * HID, HID), :]) + b[8:9]

        hxo_ref[...] = hx_new
        cxo_ref[...] = cx_new
        act_ref[...] = act

    return kernel


# ----------------------------------------------------------------------------- wrapper
def gcn_attn_forward(agents_obs, landmarks_obs, c_agent_obs, hx, cx, packed,
                     action_dim):
    """Batched forward: B environments per call; grid over envs ("parallel")."""
    B, NA, _ = agents_obs.shape
    NL = landmarks_obs.shape[1]
    S = NA + NL + 1
    f32 = jnp.float32

    # fused, pre-padded per-row observation matrix (one obs DMA instead of three)
    x = jnp.zeros((B, S, F_OBS), f32)
    x = x.at[:, :NA, 0:F_AGENT].set(agents_obs.astype(f32))
    x = x.at[:, NA:NA + NL, 16:16 + F_LMK].set(landmarks_obs.astype(f32))
    x = x.at[:, S - 1, 24:24 + F_CAG].set(c_agent_obs.astype(f32))
    hx3 = hx.astype(f32).reshape(B, 1, HID)
    cx3 = cx.astype(f32).reshape(B, 1, HID)

    kernel = _make_kernel(NA, NL)

    def blk_env(shape):   # per-env block: leading batch dim squeezed
        return pl.BlockSpec((None,) + shape, lambda b: (b,) + (0,) * len(shape))

    def blk_full(arr):    # whole-array block, constant index -> loaded once
        return pl.BlockSpec(arr.shape, lambda b: (0,) * arr.ndim)

    flops = 2 * B * (S * F_OBS * HID + 2 * HID * HID + 3 * S * HID * HID
                     + N_HEADS * (2 * S * S * HEAD + S * HEAD * HID)
                     + S * HID * HID + 3 * HID * 4 * HID + HID * HID)
    cost = pl.CostEstimate(
        flops=flops,
        transcendentals=B * (N_HEADS * S * S + 8 * HID),
        bytes_accessed=4 * (B * (S * F_OBS + 7 * HID)
                            + sum(int(a.size) for a in packed.values())))

    hx_new, cx_new, act = pl.pallas_call(
        kernel,
        grid=(B,),
        in_specs=[
            blk_env((S, F_OBS)),                 # fused observations
            blk_env((1, HID)),                   # hx
            blk_env((1, HID)),                   # cx
            blk_full(packed["w_obs"]),           # (40, 128)
            blk_full(packed["w_hid"]),           # (1024, 128)
            blk_full(packed["w_lstm"]),          # (384, 512)
            blk_full(packed["b_all"]),           # (16, 128)
        ],
        out_specs=(blk_env((1, HID)), blk_env((1, HID)), blk_env((1, HID))),
        out_shape=(jax.ShapeDtypeStruct((B, 1, HID), f32),
                   jax.ShapeDtypeStruct((B, 1, HID), f32),
                   jax.ShapeDtypeStruct((B, 1, HID), f32)),
        compiler_params=pltpu.CompilerParams(dimension_semantics=("parallel",)),
        cost_estimate=cost,
    )(x, hx3, cx3, packed["w_obs"], packed["w_hid"], packed["w_lstm"],
      packed["b_all"])

    hx_new = hx_new[:, 0, :]
    cx_new = cx_new[:, 0, :]
    act_mov = act[:, 0, MOV_OFF:MOV_OFF + 4]
    act_inter = act[:, 0, INT_OFF:INT_OFF + action_dim]
    return (jnp.argmax(act_mov, axis=-1), jnp.argmax(act_inter, axis=-1),
            act_mov, act_inter, hx_new, cx_new)


# ----------------------------------------------------------------------------- params
def init_params(key, action_dim):
    """PyTorch-style uniform(+/-1/sqrt(fan_in)) init, weights stored as (in, out)."""
    def lin(k, fi, fo):
        kw, kb = jax.random.split(k)
        bound = 1.0 / math.sqrt(float(fi))
        w = jax.random.uniform(kw, (fi, fo), jnp.float32, -bound, bound)
        b = jax.random.uniform(kb, (fo,), jnp.float32, -bound, bound)
        return w, b

    ks = jax.random.split(key, 12)
    p = {}
    p["wc"], p["bc"] = lin(ks[0], F_CAG, HID)                 # c_agent_linear
    p["wa"], p["ba"] = lin(ks[1], F_AGENT + HID, HID)         # agents_linear
    p["wl"], p["bl"] = lin(ks[2], F_LMK + HID, HID)           # landmarks_linear
    p["wq"], p["bq"] = lin(ks[3], HID, HID)                   # MHA in_proj (q)
    p["wk"], p["bk"] = lin(ks[4], HID, HID)                   # MHA in_proj (k)
    p["wv"], p["bv"] = lin(ks[5], HID, HID)                   # MHA in_proj (v)
    p["wo"], p["bo"] = lin(ks[6], HID, HID)                   # MHA out_proj
    p["wm"], p["bm"] = lin(ks[7], HID, HID)                   # multihead_linear
    p["w_ih"], p["b_ih"] = lin(ks[8], 2 * HID, 4 * HID)       # LSTMCell ih
    p["w_hh"], p["b_hh"] = lin(ks[9], HID, 4 * HID)           # LSTMCell hh
    p["wmov"], p["bmov"] = lin(ks[10], HID, 4)                # final_linear_mov
    p["wint"], p["bint"] = lin(ks[11], HID, action_dim)       # final_linear_inter
    return p


def pack_params(p, n_agents, n_landmarks, action_dim):
    """Pack all parameters into 4 pre-padded VMEM slabs (few DMAs, no in-kernel concat)."""
    S = n_agents + n_landmarks + 1
    f32 = jnp.float32

    def pad_rows(w, rows):
        return jnp.zeros((rows, w.shape[1]), f32).at[:w.shape[0]].set(w)

    wa_obs, wa_c = p["wa"][:F_AGENT], p["wa"][F_AGENT:]
    wl_obs, wl_c = p["wl"][:F_LMK], p["wl"][F_LMK:]
    # block-diagonal obs weights: rows [0:16)=Wa_obs, [16:24)=Wl_obs, [24:40)=Wc
    w_obs = jnp.concatenate(
        [pad_rows(wa_obs, 16), pad_rows(wl_obs, 8), pad_rows(p["wc"], 16)], axis=0)

    # both action heads packed into one lane-dense (128,128) weight
    wact = (jnp.zeros((HID, HID), f32)
            .at[:, MOV_OFF:MOV_OFF + 4].set(p["wmov"])
            .at[:, INT_OFF:INT_OFF + action_dim].set(p["wint"]))
    w_hid = jnp.concatenate(
        [wa_c, wl_c, p["wq"], p["wk"], p["wv"], p["wo"], p["wm"], wact], axis=0)

    # LSTM: gates = [mean(r), c] @ W_ih + hx @ W_hh + b; fold 1/S into the mean rows
    w_lstm = jnp.concatenate(
        [p["w_ih"][:HID] / float(S), p["w_ih"][HID:], p["w_hh"]], axis=0)

    bact = (jnp.zeros((HID,), f32)
            .at[MOV_OFF:MOV_OFF + 4].set(p["bmov"])
            .at[INT_OFF:INT_OFF + action_dim].set(p["bint"]))
    b_lstm = (p["b_ih"] + p["b_hh"]).reshape(4, HID)          # rows i, f, g, o
    b_all = jnp.stack([p["bc"], p["ba"], p["bl"], p["bq"], p["bk"], p["bv"],
                       p["bo"], p["bm"], bact], axis=0)        # rows 0..8
    b_all = jnp.concatenate([b_all, b_lstm, jnp.zeros((3, HID), f32)], axis=0)
    return dict(w_obs=w_obs, w_hid=w_hid, w_lstm=w_lstm, b_all=b_all)


# ----------------------------------------------------------------------------- reference
def reference_forward(p, agents, landmarks, c_obs, hx, cx):
    """Pure-JAX reference mirroring the PyTorch GCNAttnPolicy.forward (non-empty path)."""
    def single(a, l, co, h0, c0):
        relu = lambda v: jnp.maximum(v, 0.0)
        c = relu(co[None, :] @ p["wc"] + p["bc"])                        # (1,128)
        NA, NL = a.shape[0], l.shape[0]
        ha = relu(jnp.concatenate([a, jnp.tile(c, (NA, 1))], 1) @ p["wa"] + p["ba"])
        hl = relu(jnp.concatenate([l, jnp.tile(c, (NL, 1))], 1) @ p["wl"] + p["bl"])
        xx = jnp.concatenate([ha, hl, c], axis=0)                        # (S,128)
        S = xx.shape[0]
        q = xx @ p["wq"] + p["bq"]
        k = xx @ p["wk"] + p["bk"]
        v = xx @ p["wv"] + p["bv"]
        qh = jnp.transpose(q.reshape(S, N_HEADS, HEAD), (1, 0, 2))
        kh = jnp.transpose(k.reshape(S, N_HEADS, HEAD), (1, 0, 2))
        vh = jnp.transpose(v.reshape(S, N_HEADS, HEAD), (1, 0, 2))
        s = jnp.einsum("hqd,hkd->hqk", qh, kh) / math.sqrt(float(HEAD))
        pr = jax.nn.softmax(s, axis=-1)
        oh = jnp.einsum("hqk,hkd->hqd", pr, vh)
        o = jnp.transpose(oh, (1, 0, 2)).reshape(S, HID)
        attn = o @ p["wo"] + p["bo"]
        r = attn + (attn @ p["wm"] + p["bm"])
        rmean = jnp.mean(r, axis=0, keepdims=True)
        res = jnp.concatenate([rmean, c], axis=1)                        # (1,256)
        gates = res @ p["w_ih"] + h0[None, :] @ p["w_hh"] + p["b_ih"] + p["b_hh"]
        i_g, f_g, g_g, o_g = jnp.split(gates, 4, axis=1)
        i_g, f_g, o_g = jax.nn.sigmoid(i_g), jax.nn.sigmoid(f_g), jax.nn.sigmoid(o_g)
        g_g = jnp.tanh(g_g)
        c1 = f_g * c0[None, :] + i_g * g_g
        h1 = o_g * jnp.tanh(c1)
        mov = h1 @ p["wmov"] + p["bmov"]
        inter = h1 @ p["wint"] + p["bint"]
        return mov[0], inter[0], h1[0], c1[0]

    return jax.vmap(single)(agents, landmarks, c_obs, hx, cx)


# ----------------------------------------------------------------------------- main
if __name__ == "__main__":
    key = jax.random.PRNGKey(0)
    k1, k2, k3, kp = jax.random.split(key, 4)

    B, n_agents, n_landmarks, action_dim = 8, 3, 4, 5
    agents = jax.random.normal(k1, (B, n_agents, F_AGENT), jnp.float32)
    landmarks = jax.random.normal(k2, (B, n_landmarks, F_LMK), jnp.float32)
    c_agent = jax.random.normal(k3, (B, F_CAG), jnp.float32)
    hx0 = jnp.zeros((B, HID), jnp.float32)   # module initializes hx/cx to zeros
    cx0 = jnp.zeros((B, HID), jnp.float32)

    params = init_params(kp, action_dim)
    packed = pack_params(params, n_agents, n_landmarks, action_dim)

    fwd = jax.jit(functools.partial(gcn_attn_forward, action_dim=action_dim))
    idx_mov, idx_int, mov, inter, hx1, cx1 = fwd(agents, landmarks, c_agent,
                                                 hx0, cx0, packed)
    jax.block_until_ready((idx_mov, idx_int, mov, inter, hx1, cx1))

    r_mov, r_int, r_hx, r_cx = reference_forward(params, agents, landmarks,
                                                 c_agent, hx0, cx0)
    assert jnp.allclose(mov, r_mov, atol=1e-3, rtol=1e-3), (mov, r_mov)
    assert jnp.allclose(inter, r_int, atol=1e-3, rtol=1e-3), (inter, r_int)
    assert jnp.allclose(hx1, r_hx, atol=1e-3, rtol=1e-3)
    assert jnp.allclose(cx1, r_cx, atol=1e-3, rtol=1e-3)
    assert jnp.array_equal(idx_mov, jnp.argmax(r_mov, axis=-1))
    assert jnp.array_equal(idx_int, jnp.argmax(r_int, axis=-1))

    print("KERNEL_OK")
</pallas_src>

<mosaic_0001>
module attributes {stable_mosaic.version = 11 : i64} {
  func.func @kernel(%arg0: i32, %arg1: memref<1x8x40xf32, #tpu.memory_space<vmem>>, %arg2: memref<1x1x128xf32, #tpu.memory_space<vmem>>, %arg3: memref<1x1x128xf32, #tpu.memory_space<vmem>>, %arg4: memref<40x128xf32, #tpu.memory_space<vmem>>, %arg5: memref<1024x128xf32, #tpu.memory_space<vmem>>, %arg6: memref<384x512xf32, #tpu.memory_space<vmem>>, %arg7: memref<16x128xf32, #tpu.memory_space<vmem>>, %arg8: memref<1x1x128xf32, #tpu.memory_space<vmem>>, %arg9: memref<1x1x128xf32, #tpu.memory_space<vmem>>, %arg10: memref<1x1x128xf32, #tpu.memory_space<vmem>>) attributes {dimension_semantics = [#tpu.dimension_semantics<parallel>], iteration_bounds = array<i64: 8>, scalar_prefetch = 0 : i64, scratch_operands = 0 : i64, tpu.core_type = #tpu.core_type<tc>, window_params = [{transform_indices = @transform_0, window_bounds = array<i64: 1, 8, 40>}, {transform_indices = @transform_1, window_bounds = array<i64: 1, 1, 128>}, {transform_indices = @transform_2, window_bounds = array<i64: 1, 1, 128>}, {pipeline_mode = #tpu.pipeline_mode<synchronous>, transform_indices = @transform_3, window_bounds = array<i64: 40, 128>}, {pipeline_mode = #tpu.pipeline_mode<synchronous>, transform_indices = @transform_4, window_bounds = array<i64: 1024, 128>}, {pipeline_mode = #tpu.pipeline_mode<synchronous>, transform_indices = @transform_5, window_bounds = array<i64: 384, 512>}, {pipeline_mode = #tpu.pipeline_mode<synchronous>, transform_indices = @transform_6, window_bounds = array<i64: 16, 128>}, {transform_indices = @transform_7, window_bounds = array<i64: 1, 1, 128>}, {transform_indices = @transform_8, window_bounds = array<i64: 1, 1, 128>}, {transform_indices = @transform_9, window_bounds = array<i64: 1, 1, 128>}]} {
    %c0 = arith.constant 0 : index
    %c0_0 = arith.constant 0 : index
    %c0_1 = arith.constant 0 : index
    %0 = vector.load %arg1[%c0, %c0_0, %c0_1] : memref<1x8x40xf32, #tpu.memory_space<vmem>>, vector<1x8x40xf32>
    %1 = vector.shape_cast %0 : vector<1x8x40xf32> to vector<8x40xf32>
    %c0_2 = arith.constant 0 : index
    %c0_3 = arith.constant 0 : index
    %2 = vector.load %arg7[%c0_2, %c0_3] : memref<16x128xf32, #tpu.memory_space<vmem>>, vector<16x128xf32>
    %c0_4 = arith.constant 0 : index
    %c0_5 = arith.constant 0 : index
    %3 = vector.load %arg4[%c0_4, %c0_5] : memref<40x128xf32, #tpu.memory_space<vmem>>, vector<40x128xf32>
    %cst = arith.constant dense<0.000000e+00> : vector<8x128xf32>
    %4 = tpu.matmul %1, %3, %cst {dimension_numbers = #tpu.dot_dimension_numbers<[1], [0], [0], [1], [0, 0, 1, 1], [], []>} : vector<8x40xf32>, vector<40x128xf32>, vector<8x128xf32> -> vector<8x128xf32>
    %5 = vector.extract_strided_slice %4 {offsets = [7, 0], sizes = [1, 128], strides = [1, 1]} : vector<8x128xf32> to vector<1x128xf32>
    %6 = vector.extract_strided_slice %2 {offsets = [0, 0], sizes = [1, 128], strides = [1, 1]} : vector<16x128xf32> to vector<1x128xf32>
    %7 = arith.addf %5, %6 : vector<1x128xf32>
    %cst_6 = arith.constant 0.000000e+00 : f32
    %8 = vector.broadcast %cst_6 : f32 to vector<1x128xf32>
    %9 = arith.maximumf %7, %8 : vector<1x128xf32>
    %c0_7 = arith.constant 0 : index
    %c0_8 = arith.constant 0 : index
    %10 = vector.load %arg5[%c0_7, %c0_8] : memref<1024x128xf32, #tpu.memory_space<vmem>>, vector<128x128xf32>
    %cst_9 = arith.constant dense<0.000000e+00> : vector<1x128xf32>
    %11 = tpu.matmul %9, %10, %cst_9 {dimension_numbers = #tpu.dot_dimension_numbers<[1], [0], [0], [1], [0, 0, 1, 1], [], []>} : vector<1x128xf32>, vector<128x128xf32>, vector<1x128xf32> -> vector<1x128xf32>
    %c128 = arith.constant 128 : index
    %c0_10 = arith.constant 0 : index
    %12 = vector.load %arg5[%c128, %c0_10] : memref<1024x128xf32, #tpu.memory_space<vmem>>, vector<128x128xf32>
    %cst_11 = arith.constant dense<0.000000e+00> : vector<1x128xf32>
    %13 = tpu.matmul %9, %12, %cst_11 {dimension_numbers = #tpu.dot_dimension_numbers<[1], [0], [0], [1], [0, 0, 1, 1], [], []>} : vector<1x128xf32>, vector<128x128xf32>, vector<1x128xf32> -> vector<1x128xf32>
    %14 = tpu.iota {dimensions = array<i32: 0>} : vector<8x1xi32>
    %c3_i32 = arith.constant 3 : i32
    %15 = vector.broadcast %c3_i32 : i32 to vector<8x1xi32>
    %16 = arith.cmpi slt, %14, %15 : vector<8x1xi32>
    %17 = arith.extui %16 : vector<8x1xi1> to vector<8x1xi32>
    %18 = arith.sitofp %17 : vector<8x1xi32> to vector<8x1xf32>
    %c3_i32_12 = arith.constant 3 : i32
    %19 = vector.broadcast %c3_i32_12 : i32 to vector<8x1xi32>
    %20 = arith.cmpi sge, %14, %19 : vector<8x1xi32>
    %c7_i32 = arith.constant 7 : i32
    %21 = vector.broadcast %c7_i32 : i32 to vector<8x1xi32>
    %22 = arith.cmpi slt, %14, %21 : vector<8x1xi32>
    %23 = arith.andi %20, %22 : vector<8x1xi1>
    %24 = arith.extui %23 : vector<8x1xi1> to vector<8x1xi32>
    %25 = arith.sitofp %24 : vector<8x1xi32> to vector<8x1xf32>
    %c7_i32_13 = arith.constant 7 : i32
    %26 = vector.broadcast %c7_i32_13 : i32 to vector<8x1xi32>
    %27 = arith.cmpi eq, %14, %26 : vector<8x1xi32>
    %28 = arith.extui %27 : vector<8x1xi1> to vector<8x1xi32>
    %29 = arith.sitofp %28 : vector<8x1xi32> to vector<8x1xf32>
    %30 = vector.extract_strided_slice %2 {offsets = [1, 0], sizes = [1, 128], strides = [1, 1]} : vector<16x128xf32> to vector<1x128xf32>
    %31 = arith.addf %11, %30 : vector<1x128xf32>
    %32 = vector.broadcast %18 : vector<8x1xf32> to vector<8x128xf32>
    %33 = vector.broadcast %31 : vector<1x128xf32> to vector<8x128xf32>
    %34 = arith.mulf %32, %33 : vector<8x128xf32>
    %35 = arith.addf %4, %34 : vector<8x128xf32>
    %36 = vector.extract_strided_slice %2 {offsets = [2, 0], sizes = [1, 128], strides = [1, 1]} : vector<16x128xf32> to vector<1x128xf32>
    %37 = arith.addf %13, %36 : vector<1x128xf32>
    %38 = vector.broadcast %25 : vector<8x1xf32> to vector<8x128xf32>
    %39 = vector.broadcast %37 : vector<1x128xf32> to vector<8x128xf32>
    %40 = arith.mulf %38, %39 : vector<8x128xf32>
    %41 = arith.addf %35, %40 : vector<8x128xf32>
    %42 = vector.extract_strided_slice %2 {offsets = [0, 0], sizes = [1, 128], strides = [1, 1]} : vector<16x128xf32> to vector<1x128xf32>
    %43 = vector.broadcast %29 : vector<8x1xf32> to vector<8x128xf32>
    %44 = vector.broadcast %42 : vector<1x128xf32> to vector<8x128xf32>
    %45 = arith.mulf %43, %44 : vector<8x128xf32>
    %46 = arith.addf %41, %45 : vector<8x128xf32>
    %cst_14 = arith.constant 0.000000e+00 : f32
    %47 = vector.broadcast %cst_14 : f32 to vector<8x128xf32>
    %48 = arith.maximumf %46, %47 : vector<8x128xf32>
    %c256 = arith.constant 256 : index
    %c0_15 = arith.constant 0 : index
    %49 = vector.load %arg5[%c256, %c0_15] : memref<1024x128xf32, #tpu.memory_space<vmem>>, vector<128x128xf32>
    %cst_16 = arith.constant dense<0.000000e+00> : vector<8x128xf32>
    %50 = tpu.matmul %48, %49, %cst_16 {dimension_numbers = #tpu.dot_dimension_numbers<[1], [0], [0], [1], [0, 0, 1, 1], [], []>} : vector<8x128xf32>, vector<128x128xf32>, vector<8x128xf32> -> vector<8x128xf32>
    %51 = vector.extract_strided_slice %2 {offsets = [3, 0], sizes = [1, 128], strides = [1, 1]} : vector<16x128xf32> to vector<1x128xf32>
    %52 = vector.broadcast %51 : vector<1x128xf32> to vector<8x128xf32>
    %53 = arith.addf %50, %52 : vector<8x128xf32>
    %c384 = arith.constant 384 : index
    %c0_17 = arith.constant 0 : index
    %54 = vector.load %arg5[%c384, %c0_17] : memref<1024x128xf32, #tpu.memory_space<vmem>>, vector<128x128xf32>
    %cst_18 = arith.constant dense<0.000000e+00> : vector<8x128xf32>
    %55 = tpu.matmul %48, %54, %cst_18 {dimension_numbers = #tpu.dot_dimension_numbers<[1], [0], [0], [1], [0, 0, 1, 1], [], []>} : vector<8x128xf32>, vector<128x128xf32>, vector<8x128xf32> -> vector<8x128xf32>
    %56 = vector.extract_strided_slice %2 {offsets = [4, 0], sizes = [1, 128], strides = [1, 1]} : vector<16x128xf32> to vector<1x128xf32>
    %57 = vector.broadcast %56 : vector<1x128xf32> to vector<8x128xf32>
    %58 = arith.addf %55, %57 : vector<8x128xf32>
    %c512 = arith.constant 512 : index
    %c0_19 = arith.constant 0 : index
    %59 = vector.load %arg5[%c512, %c0_19] : memref<1024x128xf32, #tpu.memory_space<vmem>>, vector<128x128xf32>
    %cst_20 = arith.constant dense<0.000000e+00> : vector<8x128xf32>
    %60 = tpu.matmul %48, %59, %cst_20 {dimension_numbers = #tpu.dot_dimension_numbers<[1], [0], [0], [1], [0, 0, 1, 1], [], []>} : vector<8x128xf32>, vector<128x128xf32>, vector<8x128xf32> -> vector<8x128xf32>
    %61 = vector.extract_strided_slice %2 {offsets = [5, 0], sizes = [1, 128], strides = [1, 1]} : vector<16x128xf32> to vector<1x128xf32>
    %62 = vector.broadcast %61 : vector<1x128xf32> to vector<8x128xf32>
    %63 = arith.addf %60, %62 : vector<8x128xf32>
    %64 = vector.extract_strided_slice %53 {offsets = [0, 0], sizes = [8, 32], strides = [1, 1]} : vector<8x128xf32> to vector<8x32xf32>
    %65 = vector.extract_strided_slice %58 {offsets = [0, 0], sizes = [8, 32], strides = [1, 1]} : vector<8x128xf32> to vector<8x32xf32>
    %66 = vector.extract_strided_slice %63 {offsets = [0, 0], sizes = [8, 32], strides = [1, 1]} : vector<8x128xf32> to vector<8x32xf32>
    "tpu.trace_start"() <{level = 10 : i32, message = "qd,kd->qk"}> : () -> ()
    %cst_21 = arith.constant dense<0.000000e+00> : vector<8x8xf32>
    %67 = tpu.matmul %64, %65, %cst_21 {dimension_numbers = #tpu.dot_dimension_numbers<[1], [1], [0], [0], [0, 0, 1, 0], [], []>} : vector<8x32xf32>, vector<8x32xf32>, vector<8x8xf32> -> vector<8x8xf32>
    "tpu.trace_stop"() : () -> ()
    %cst_22 = arith.constant 0.176776692 : f32
    %68 = vector.broadcast %cst_22 : f32 to vector<8x8xf32>
    %69 = arith.mulf %67, %68 : vector<8x8xf32>
    %cst_23 = arith.constant dense<0xFF800000> : vector<8xf32>
    %70 = vector.multi_reduction <maximumf>, %69, %cst_23 [1] : vector<8x8xf32> to vector<8xf32>
    %71 = vector.shape_cast %70 : vector<8xf32> to vector<8x1xf32>
    %72 = vector.broadcast %71 : vector<8x1xf32> to vector<8x8xf32>
    %73 = arith.subf %69, %72 : vector<8x8xf32>
    %74 = math.exp %73 : vector<8x8xf32>
    %cst_24 = arith.constant dense<0.000000e+00> : vector<8xf32>
    %75 = vector.multi_reduction <add>, %74, %cst_24 [1] : vector<8x8xf32> to vector<8xf32>
    %76 = vector.shape_cast %75 : vector<8xf32> to vector<8x1xf32>
    %77 = vector.broadcast %76 : vector<8x1xf32> to vector<8x8xf32>
    %78 = arith.divf %74, %77 : vector<8x8xf32>
    %cst_25 = arith.constant dense<0.000000e+00> : vector<8x32xf32>
    %79 = tpu.matmul %78, %66, %cst_25 {dimension_numbers = #tpu.dot_dimension_numbers<[1], [0], [0], [1], [0, 0, 1, 1], [], []>} : vector<8x8xf32>, vector<8x32xf32>, vector<8x32xf32> -> vector<8x32xf32>
    %c640 = arith.constant 640 : index
    %c0_26 = arith.constant 0 : index
    %80 = vector.load %arg5[%c640, %c0_26] : memref<1024x128xf32, #tpu.memory_space<vmem>>, vector<32x128xf32>
    %cst_27 = arith.constant dense<0.000000e+00> : vector<8x128xf32>
    %81 = tpu.matmul %79, %80, %cst_27 {dimension_numbers = #tpu.dot_dimension_numbers<[1], [0], [0], [1], [0, 0, 1, 1], [], []>} : vector<8x32xf32>, vector<32x128xf32>, vector<8x128xf32> -> vector<8x128xf32>
    %82 = vector.extract_strided_slice %53 {offsets = [0, 32], sizes = [8, 32], strides = [1, 1]} : vector<8x128xf32> to vector<8x32xf32>
    %83 = vector.extract_strided_slice %58 {offsets = [0, 32], sizes = [8, 32], strides = [1, 1]} : vector<8x128xf32> to vector<8x32xf32>
    %84 = vector.extract_strided_slice %63 {offsets = [0, 32], sizes = [8, 32], strides = [1, 1]} : vector<8x128xf32> to vector<8x32xf32>
    "tpu.trace_start"() <{level = 10 : i32, message = "qd,kd->qk"}> : () -> ()
    %cst_28 = arith.constant dense<0.000000e+00> : vector<8x8xf32>
    %85 = tpu.matmul %82, %83, %cst_28 {dimension_numbers = #tpu.dot_dimension_numbers<[1], [1], [0], [0], [0, 0, 1, 0], [], []>} : vector<8x32xf32>, vector<8x32xf32>, vector<8x8xf32> -> vector<8x8xf32>
    "tpu.trace_stop"() : () -> ()
    %cst_29 = arith.constant 0.176776692 : f32
    %86 = vector.broadcast %cst_29 : f32 to vector<8x8xf32>
    %87 = arith.mulf %85, %86 : vector<8x8xf32>
    %cst_30 = arith.constant dense<0xFF800000> : vector<8xf32>
    %88 = vector.multi_reduction <maximumf>, %87, %cst_30 [1] : vector<8x8xf32> to vector<8xf32>
    %89 = vector.shape_cast %88 : vector<8xf32> to vector<8x1xf32>
    %90 = vector.broadcast %89 : vector<8x1xf32> to vector<8x8xf32>
    %91 = arith.subf %87, %90 : vector<8x8xf32>
    %92 = math.exp %91 : vector<8x8xf32>
    %cst_31 = arith.constant dense<0.000000e+00> : vector<8xf32>
    %93 = vector.multi_reduction <add>, %92, %cst_31 [1] : vector<8x8xf32> to vector<8xf32>
    %94 = vector.shape_cast %93 : vector<8xf32> to vector<8x1xf32>
    %95 = vector.broadcast %94 : vector<8x1xf32> to vector<8x8xf32>
    %96 = arith.divf %92, %95 : vector<8x8xf32>
    %cst_32 = arith.constant dense<0.000000e+00> : vector<8x32xf32>
    %97 = tpu.matmul %96, %84, %cst_32 {dimension_numbers = #tpu.dot_dimension_numbers<[1], [0], [0], [1], [0, 0, 1, 1], [], []>} : vector<8x8xf32>, vector<8x32xf32>, vector<8x32xf32> -> vector<8x32xf32>
    %c672 = arith.constant 672 : index
    %c0_33 = arith.constant 0 : index
    %98 = vector.load %arg5[%c672, %c0_33] : memref<1024x128xf32, #tpu.memory_space<vmem>>, vector<32x128xf32>
    %cst_34 = arith.constant dense<0.000000e+00> : vector<8x128xf32>
    %99 = tpu.matmul %97, %98, %cst_34 {dimension_numbers = #tpu.dot_dimension_numbers<[1], [0], [0], [1], [0, 0, 1, 1], [], []>} : vector<8x32xf32>, vector<32x128xf32>, vector<8x128xf32> -> vector<8x128xf32>
    %100 = arith.addf %81, %99 : vector<8x128xf32>
    %101 = vector.extract_strided_slice %53 {offsets = [0, 64], sizes = [8, 32], strides = [1, 1]} : vector<8x128xf32> to vector<8x32xf32>
    %102 = vector.extract_strided_slice %58 {offsets = [0, 64], sizes = [8, 32], strides = [1, 1]} : vector<8x128xf32> to vector<8x32xf32>
    %103 = vector.extract_strided_slice %63 {offsets = [0, 64], sizes = [8, 32], strides = [1, 1]} : vector<8x128xf32> to vector<8x32xf32>
    "tpu.trace_start"() <{level = 10 : i32, message = "qd,kd->qk"}> : () -> ()
    %cst_35 = arith.constant dense<0.000000e+00> : vector<8x8xf32>
    %104 = tpu.matmul %101, %102, %cst_35 {dimension_numbers = #tpu.dot_dimension_numbers<[1], [1], [0], [0], [0, 0, 1, 0], [], []>} : vector<8x32xf32>, vector<8x32xf32>, vector<8x8xf32> -> vector<8x8xf32>
    "tpu.trace_stop"() : () -> ()
    %cst_36 = arith.constant 0.176776692 : f32
    %105 = vector.broadcast %cst_36 : f32 to vector<8x8xf32>
    %106 = arith.mulf %104, %105 : vector<8x8xf32>
    %cst_37 = arith.constant dense<0xFF800000> : vector<8xf32>
    %107 = vector.multi_reduction <maximumf>, %106, %cst_37 [1] : vector<8x8xf32> to vector<8xf32>
    %108 = vector.shape_cast %107 : vector<8xf32> to vector<8x1xf32>
    %109 = vector.broadcast %108 : vector<8x1xf32> to vector<8x8xf32>
    %110 = arith.subf %106, %109 : vector<8x8xf32>
    %111 = math.exp %110 : vector<8x8xf32>
    %cst_38 = arith.constant dense<0.000000e+00> : vector<8xf32>
    %112 = vector.multi_reduction <add>, %111, %cst_38 [1] : vector<8x8xf32> to vector<8xf32>
    %113 = vector.shape_cast %112 : vector<8xf32> to vector<8x1xf32>
    %114 = vector.broadcast %113 : vector<8x1xf32> to vector<8x8xf32>
    %115 = arith.divf %111, %114 : vector<8x8xf32>
    %cst_39 = arith.constant dense<0.000000e+00> : vector<8x32xf32>
    %116 = tpu.matmul %115, %103, %cst_39 {dimension_numbers = #tpu.dot_dimension_numbers<[1], [0], [0], [1], [0, 0, 1, 1], [], []>} : vector<8x8xf32>, vector<8x32xf32>, vector<8x32xf32> -> vector<8x32xf32>
    %c704 = arith.constant 704 : index
    %c0_40 = arith.constant 0 : index
    %117 = vector.load %arg5[%c704, %c0_40] : memref<1024x128xf32, #tpu.memory_space<vmem>>, vector<32x128xf32>
    %cst_41 = arith.constant dense<0.000000e+00> : vector<8x128xf32>
    %118 = tpu.matmul %116, %117, %cst_41 {dimension_numbers = #tpu.dot_dimension_numbers<[1], [0], [0], [1], [0, 0, 1, 1], [], []>} : vector<8x32xf32>, vector<32x128xf32>, vector<8x128xf32> -> vector<8x128xf32>
    %119 = arith.addf %100, %118 : vector<8x128xf32>
    %120 = vector.extract_strided_slice %53 {offsets = [0, 96], sizes = [8, 32], strides = [1, 1]} : vector<8x128xf32> to vector<8x32xf32>
    %121 = vector.extract_strided_slice %58 {offsets = [0, 96], sizes = [8, 32], strides = [1, 1]} : vector<8x128xf32> to vector<8x32xf32>
    %122 = vector.extract_strided_slice %63 {offsets = [0, 96], sizes = [8, 32], strides = [1, 1]} : vector<8x128xf32> to vector<8x32xf32>
    "tpu.trace_start"() <{level = 10 : i32, message = "qd,kd->qk"}> : () -> ()
    %cst_42 = arith.constant dense<0.000000e+00> : vector<8x8xf32>
    %123 = tpu.matmul %120, %121, %cst_42 {dimension_numbers = #tpu.dot_dimension_numbers<[1], [1], [0], [0], [0, 0, 1, 0], [], []>} : vector<8x32xf32>, vector<8x32xf32>, vector<8x8xf32> -> vector<8x8xf32>
    "tpu.trace_stop"() : () -> ()
    %cst_43 = arith.constant 0.176776692 : f32
    %124 = vector.broadcast %cst_43 : f32 to vector<8x8xf32>
    %125 = arith.mulf %123, %124 : vector<8x8xf32>
    %cst_44 = arith.constant dense<0xFF800000> : vector<8xf32>
    %126 = vector.multi_reduction <maximumf>, %125, %cst_44 [1] : vector<8x8xf32> to vector<8xf32>
    %127 = vector.shape_cast %126 : vector<8xf32> to vector<8x1xf32>
    %128 = vector.broadcast %127 : vector<8x1xf32> to vector<8x8xf32>
    %129 = arith.subf %125, %128 : vector<8x8xf32>
    %130 = math.exp %129 : vector<8x8xf32>
    %cst_45 = arith.constant dense<0.000000e+00> : vector<8xf32>
    %131 = vector.multi_reduction <add>, %130, %cst_45 [1] : vector<8x8xf32> to vector<8xf32>
    %132 = vector.shape_cast %131 : vector<8xf32> to vector<8x1xf32>
    %133 = vector.broadcast %132 : vector<8x1xf32> to vector<8x8xf32>
    %134 = arith.divf %130, %133 : vector<8x8xf32>
    %cst_46 = arith.constant dense<0.000000e+00> : vector<8x32xf32>
    %135 = tpu.matmul %134, %122, %cst_46 {dimension_numbers = #tpu.dot_dimension_numbers<[1], [0], [0], [1], [0, 0, 1, 1], [], []>} : vector<8x8xf32>, vector<8x32xf32>, vector<8x32xf32> -> vector<8x32xf32>
    %c736 = arith.constant 736 : index
    %c0_47 = arith.constant 0 : index
    %136 = vector.load %arg5[%c736, %c0_47] : memref<1024x128xf32, #tpu.memory_space<vmem>>, vector<32x128xf32>
    %cst_48 = arith.constant dense<0.000000e+00> : vector<8x128xf32>
    %137 = tpu.matmul %135, %136, %cst_48 {dimension_numbers = #tpu.dot_dimension_numbers<[1], [0], [0], [1], [0, 0, 1, 1], [], []>} : vector<8x32xf32>, vector<32x128xf32>, vector<8x128xf32> -> vector<8x128xf32>
    %138 = arith.addf %119, %137 : vector<8x128xf32>
    %139 = vector.extract_strided_slice %2 {offsets = [6, 0], sizes = [1, 128], strides = [1, 1]} : vector<16x128xf32> to vector<1x128xf32>
    %140 = vector.broadcast %139 : vector<1x128xf32> to vector<8x128xf32>
    %141 = arith.addf %138, %140 : vector<8x128xf32>
    %c768 = arith.constant 768 : index
    %c0_49 = arith.constant 0 : index
    %142 = vector.load %arg5[%c768, %c0_49] : memref<1024x128xf32, #tpu.memory_space<vmem>>, vector<128x128xf32>
    %cst_50 = arith.constant dense<0.000000e+00> : vector<8x128xf32>
    %143 = tpu.matmul %141, %142, %cst_50 {dimension_numbers = #tpu.dot_dimension_numbers<[1], [0], [0], [1], [0, 0, 1, 1], [], []>} : vector<8x128xf32>, vector<128x128xf32>, vector<8x128xf32> -> vector<8x128xf32>
    %144 = arith.addf %141, %143 : vector<8x128xf32>
    %145 = vector.extract_strided_slice %2 {offsets = [7, 0], sizes = [1, 128], strides = [1, 1]} : vector<16x128xf32> to vector<1x128xf32>
    %146 = vector.broadcast %145 : vector<1x128xf32> to vector<8x128xf32>
    %147 = arith.addf %144, %146 : vector<8x128xf32>
    %cst_51 = arith.constant dense<0.000000e+00> : vector<128xf32>
    %148 = vector.multi_reduction <add>, %147, %cst_51 [0] : vector<8x128xf32> to vector<128xf32>
    %149 = vector.shape_cast %148 : vector<128xf32> to vector<1x128xf32>
    %c0_52 = arith.constant 0 : index
    %c0_53 = arith.constant 0 : index
    %150 = vector.load %arg6[%c0_52, %c0_53] : memref<384x512xf32, #tpu.memory_space<vmem>>, vector<128x512xf32>
    %cst_54 = arith.constant dense<0.000000e+00> : vector<1x512xf32>
    %151 = tpu.matmul %149, %150, %cst_54 {dimension_numbers = #tpu.dot_dimension_numbers<[1], [0], [0], [1], [0, 0, 1, 1], [], []>} : vector<1x128xf32>, vector<128x512xf32>, vector<1x512xf32> -> vector<1x512xf32>
    %c128_55 = arith.constant 128 : index
    %c0_56 = arith.constant 0 : index
    %152 = vector.load %arg6[%c128_55, %c0_56] : memref<384x512xf32, #tpu.memory_space<vmem>>, vector<128x512xf32>
    %cst_57 = arith.constant dense<0.000000e+00> : vector<1x512xf32>
    %153 = tpu.matmul %9, %152, %cst_57 {dimension_numbers = #tpu.dot_dimension_numbers<[1], [0], [0], [1], [0, 0, 1, 1], [], []>} : vector<1x128xf32>, vector<128x512xf32>, vector<1x512xf32> -> vector<1x512xf32>
    %154 = arith.addf %151, %153 : vector<1x512xf32>
    %c0_58 = arith.constant 0 : index
    %c0_59 = arith.constant 0 : index
    %c0_60 = arith.constant 0 : index
    %155 = vector.load %arg2[%c0_58, %c0_59, %c0_60] : memref<1x1x128xf32, #tpu.memory_space<vmem>>, vector<1x1x128xf32>
    %156 = vector.shape_cast %155 : vector<1x1x128xf32> to vector<1x128xf32>
    %c256_61 = arith.constant 256 : index
    %c0_62 = arith.constant 0 : index
    %157 = vector.load %arg6[%c256_61, %c0_62] : memref<384x512xf32, #tpu.memory_space<vmem>>, vector<128x512xf32>
    %cst_63 = arith.constant dense<0.000000e+00> : vector<1x512xf32>
    %158 = tpu.matmul %156, %157, %cst_63 {dimension_numbers = #tpu.dot_dimension_numbers<[1], [0], [0], [1], [0, 0, 1, 1], [], []>} : vector<1x128xf32>, vector<128x512xf32>, vector<1x512xf32> -> vector<1x512xf32>
    %159 = arith.addf %154, %158 : vector<1x512xf32>
    %160 = vector.extract_strided_slice %159 {offsets = [0, 0], sizes = [1, 128], strides = [1, 1]} : vector<1x512xf32> to vector<1x128xf32>
    %161 = vector.extract_strided_slice %2 {offsets = [9, 0], sizes = [1, 128], strides = [1, 1]} : vector<16x128xf32> to vector<1x128xf32>
    %162 = arith.addf %160, %161 : vector<1x128xf32>
    %cst_64 = arith.constant 0.000000e+00 : f32
    %163 = vector.broadcast %cst_64 : f32 to vector<1x128xf32>
    %164 = arith.subf %163, %162 : vector<1x128xf32>
    %165 = math.exp %164 : vector<1x128xf32>
    %cst_65 = arith.constant 1.000000e+00 : f32
    %166 = vector.broadcast %cst_65 : f32 to vector<1x128xf32>
    %167 = arith.addf %166, %165 : vector<1x128xf32>
    %cst_66 = arith.constant 1.000000e+00 : f32
    %168 = vector.broadcast %cst_66 : f32 to vector<1x128xf32>
    %169 = arith.divf %168, %167 : vector<1x128xf32>
    %170 = vector.extract_strided_slice %159 {offsets = [0, 128], sizes = [1, 128], strides = [1, 1]} : vector<1x512xf32> to vector<1x128xf32>
    %171 = vector.extract_strided_slice %2 {offsets = [10, 0], sizes = [1, 128], strides = [1, 1]} : vector<16x128xf32> to vector<1x128xf32>
    %172 = arith.addf %170, %171 : vector<1x128xf32>
    %cst_67 = arith.constant 0.000000e+00 : f32
    %173 = vector.broadcast %cst_67 : f32 to vector<1x128xf32>
    %174 = arith.subf %173, %172 : vector<1x128xf32>
    %175 = math.exp %174 : vector<1x128xf32>
    %cst_68 = arith.constant 1.000000e+00 : f32
    %176 = vector.broadcast %cst_68 : f32 to vector<1x128xf32>
    %177 = arith.addf %176, %175 : vector<1x128xf32>
    %cst_69 = arith.constant 1.000000e+00 : f32
    %178 = vector.broadcast %cst_69 : f32 to vector<1x128xf32>
    %179 = arith.divf %178, %177 : vector<1x128xf32>
    %180 = vector.extract_strided_slice %159 {offsets = [0, 256], sizes = [1, 128], strides = [1, 1]} : vector<1x512xf32> to vector<1x128xf32>
    %181 = vector.extract_strided_slice %2 {offsets = [11, 0], sizes = [1, 128], strides = [1, 1]} : vector<16x128xf32> to vector<1x128xf32>
    %182 = arith.addf %180, %181 : vector<1x128xf32>
    %183 = math.tanh %182 : vector<1x128xf32>
    %184 = vector.extract_strided_slice %159 {offsets = [0, 384], sizes = [1, 128], strides = [1, 1]} : vector<1x512xf32> to vector<1x128xf32>
    %185 = vector.extract_strided_slice %2 {offsets = [12, 0], sizes = [1, 128], strides = [1, 1]} : vector<16x128xf32> to vector<1x128xf32>
    %186 = arith.addf %184, %185 : vector<1x128xf32>
    %cst_70 = arith.constant 0.000000e+00 : f32
    %187 = vector.broadcast %cst_70 : f32 to vector<1x128xf32>
    %188 = arith.subf %187, %186 : vector<1x128xf32>
    %189 = math.exp %188 : vector<1x128xf32>
    %cst_71 = arith.constant 1.000000e+00 : f32
    %190 = vector.broadcast %cst_71 : f32 to vector<1x128xf32>
    %191 = arith.addf %190, %189 : vector<1x128xf32>
    %cst_72 = arith.constant 1.000000e+00 : f32
    %192 = vector.broadcast %cst_72 : f32 to vector<1x128xf32>
    %193 = arith.divf %192, %191 : vector<1x128xf32>
    %c0_73 = arith.constant 0 : index
    %c0_74 = arith.constant 0 : index
    %c0_75 = arith.constant 0 : index
    %194 = vector.load %arg3[%c0_73, %c0_74, %c0_75] : memref<1x1x128xf32, #tpu.memory_space<vmem>>, vector<1x1x128xf32>
    %195 = vector.shape_cast %194 : vector<1x1x128xf32> to vector<1x128xf32>
    %196 = arith.mulf %179, %195 : vector<1x128xf32>
    %197 = arith.mulf %169, %183 : vector<1x128xf32>
    %198 = arith.addf %196, %197 : vector<1x128xf32>
    %199 = math.tanh %198 : vector<1x128xf32>
    %200 = arith.mulf %193, %199 : vector<1x128xf32>
    %c896 = arith.constant 896 : index
    %c0_76 = arith.constant 0 : index
    %201 = vector.load %arg5[%c896, %c0_76] : memref<1024x128xf32, #tpu.memory_space<vmem>>, vector<128x128xf32>
    %cst_77 = arith.constant dense<0.000000e+00> : vector<1x128xf32>
    %202 = tpu.matmul %200, %201, %cst_77 {dimension_numbers = #tpu.dot_dimension_numbers<[1], [0], [0], [1], [0, 0, 1, 1], [], []>} : vector<1x128xf32>, vector<128x128xf32>, vector<1x128xf32> -> vector<1x128xf32>
    %203 = vector.extract_strided_slice %2 {offsets = [8, 0], sizes = [1, 128], strides = [1, 1]} : vector<16x128xf32> to vector<1x128xf32>
    %204 = arith.addf %202, %203 : vector<1x128xf32>
    %c0_78 = arith.constant 0 : index
    %c0_79 = arith.constant 0 : index
    %c0_80 = arith.constant 0 : index
    %205 = vector.load %arg8[%c0_78, %c0_79, %c0_80] : memref<1x1x128xf32, #tpu.memory_space<vmem>>, vector<1x1x128xf32>
    %206 = vector.shape_cast %205 : vector<1x1x128xf32> to vector<1x128xf32>
    %207 = vector.shape_cast %200 : vector<1x128xf32> to vector<1x1x128xf32>
    tpu.vector_store %arg8[%c0_78, %c0_79, %c0_80], %207 {strides = array<i32>} : memref<1x1x128xf32, #tpu.memory_space<vmem>>, vector<1x1x128xf32>,
    %c0_81 = arith.constant 0 : index
    %c0_82 = arith.constant 0 : index
    %c0_83 = arith.constant 0 : index
    %208 = vector.load %arg9[%c0_81, %c0_82, %c0_83] : memref<1x1x128xf32, #tpu.memory_space<vmem>>, vector<1x1x128xf32>
    %209 = vector.shape_cast %208 : vector<1x1x128xf32> to vector<1x128xf32>
    %210 = vector.shape_cast %198 : vector<1x128xf32> to vector<1x1x128xf32>
    tpu.vector_store %arg9[%c0_81, %c0_82, %c0_83], %210 {strides = array<i32>} : memref<1x1x128xf32, #tpu.memory_space<vmem>>, vector<1x1x128xf32>,
    %c0_84 = arith.constant 0 : index
    %c0_85 = arith.constant 0 : index
    %c0_86 = arith.constant 0 : index
    %211 = vector.load %arg10[%c0_84, %c0_85, %c0_86] : memref<1x1x128xf32, #tpu.memory_space<vmem>>, vector<1x1x128xf32>
    %212 = vector.shape_cast %211 : vector<1x1x128xf32> to vector<1x128xf32>
    %213 = vector.shape_cast %204 : vector<1x128xf32> to vector<1x1x128xf32>
    tpu.vector_store %arg10[%c0_84, %c0_85, %c0_86], %213 {strides = array<i32>} : memref<1x1x128xf32, #tpu.memory_space<vmem>>, vector<1x1x128xf32>,
    return
  }
  func.func @transform_0(%arg0: i32) -> (i32, i32, i32) {
    %c0_i32 = arith.constant 0 : i32
    %c0_i32_0 = arith.constant 0 : i32
    %c0_i32_1 = arith.constant 0 : i32
    return %arg0, %c0_i32, %c0_i32_0 : i32, i32, i32
  }
  func.func @transform_1(%arg0: i32) -> (i32, i32, i32) {
    %c0_i32 = arith.constant 0 : i32
    %c0_i32_0 = arith.constant 0 : i32
    %c0_i32_1 = arith.constant 0 : i32
    return %arg0, %c0_i32, %c0_i32_0 : i32, i32, i32
  }
  func.func @transform_2(%arg0: i32) -> (i32, i32, i32) {
    %c0_i32 = arith.constant 0 : i32
    %c0_i32_0 = arith.constant 0 : i32
    %c0_i32_1 = arith.constant 0 : i32
    return %arg0, %c0_i32, %c0_i32_0 : i32, i32, i32
  }
  func.func @transform_3(%arg0: i32) -> (i32, i32) {
    %c0_i32 = arith.constant 0 : i32
    %c0_i32_0 = arith.constant 0 : i32
    %c0_i32_1 = arith.constant 0 : i32
    return %c0_i32, %c0_i32_0 : i32, i32
  }
  func.func @transform_4(%arg0: i32) -> (i32, i32) {
    %c0_i32 = arith.constant 0 : i32
    %c0_i32_0 = arith.constant 0 : i32
    %c0_i32_1 = arith.constant 0 : i32
    return %c0_i32, %c0_i32_0 : i32, i32
  }
  func.func @transform_5(%arg0: i32) -> (i32, i32) {
    %c0_i32 = arith.constant 0 : i32
    %c0_i32_0 = arith.constant 0 : i32
    %c0_i32_1 = arith.constant 0 : i32
    return %c0_i32, %c0_i32_0 : i32, i32
  }
  func.func @transform_6(%arg0: i32) -> (i32, i32) {
    %c0_i32 = arith.constant 0 : i32
    %c0_i32_0 = arith.constant 0 : i32
    %c0_i32_1 = arith.constant 0 : i32
    return %c0_i32, %c0_i32_0 : i32, i32
  }
  func.func @transform_7(%arg0: i32) -> (i32, i32, i32) {
    %c0_i32 = arith.constant 0 : i32
    %c0_i32_0 = arith.constant 0 : i32
    %c0_i32_1 = arith.constant 0 : i32
    return %arg0, %c0_i32, %c0_i32_0 : i32, i32, i32
  }
  func.func @transform_8(%arg0: i32) -> (i32, i32, i32) {
    %c0_i32 = arith.constant 0 : i32
    %c0_i32_0 = arith.constant 0 : i32
    %c0_i32_1 = arith.constant 0 : i32
    return %arg0, %c0_i32, %c0_i32_0 : i32, i32, i32
  }
  func.func @transform_9(%arg0: i32) -> (i32, i32, i32) {
    %c0_i32 = arith.constant 0 : i32
    %c0_i32_0 = arith.constant 0 : i32
    %c0_i32_1 = arith.constant 0 : i32
    return %arg0, %c0_i32, %c0_i32_0 : i32, i32, i32
  }
}

</mosaic_0001>

<llo_original>
// kernel: gcn_attn_forward.1
$region0: #{gcn_attn_forward.1}
  #allocation0 [shape = 'u32[]', space=smem, size = 0x4, offset = 0x4, fixed_abs, tag = 'smem constant byte address 0x4 - core index']
  #allocation1 [shape = 'u32[144,128]{1,0:T(1,128)}', space=vmem, size = 0x12000, scoped, tag = 'internal scratch']
  %s0 = inlined_call_operand.vmem [shape: f32[8,8,40], index: 0, kind: input, shape index: {}]
  %s1 = inlined_call_operand.vmem [shape: f32[8,1,128], index: 1, kind: input, shape index: {}]
  %s2 = inlined_call_operand.vmem [shape: f32[8,1,128], index: 2, kind: input, shape index: {}]
  %s3 = inlined_call_operand.vmem [shape: f32[40,128], index: 3, kind: input, shape index: {}]
  %s4 = inlined_call_operand.hbm [shape: f32[1024,128], index: 4, kind: input, shape index: {}]
  %s5 = inlined_call_operand.hbm [shape: f32[384,512], index: 5, kind: input, shape index: {}]
  %s6 = inlined_call_operand.vmem [shape: f32[16,128], index: 6, kind: input, shape index: {}]
  %s7 = inlined_call_operand.hbm [shape: f32[8,1,128], index: 7, kind: output, shape index: {0}]
  %s8 = inlined_call_operand.hbm [shape: f32[8,1,128], index: 8, kind: output, shape index: {1}]
  %s9 = inlined_call_operand.vmem [shape: f32[8,1,128], index: 9, kind: output, shape index: {2}]
  %10 = xla_tuple %s7, %s8, %s9
  %s11 = sld [smem:[#allocation0]]
  $region85: #{gcn_attn_forward.1} parent=0
    _
  %s13 = ssub.s32 1, %s11
  %s14 = scalar_select 0, %s13, %s11
  $region1: #{gcn_attn_forward.1} parent=0
    #allocation2 [shape = 'u8[524288]{0}', space=vmem, size = 0x80000, scoped, tag = 'input window, operand 4, single buffered']
    #allocation3 [shape = 's32[2]{0}', space=sflag, size = 0x8, scoped, tag = 'scoped memory for gcn_attn_forward.1']
    #allocation4 [shape = 's32[2]{0}', space=sflag, size = 0x8, scoped, tag = 'scoped memory for gcn_attn_forward.1']
    #allocation5 [shape = 'u8[786432]{0}', space=vmem, size = 0xc0000, scoped, tag = 'input window, operand 5, single buffered']
    #allocation6 [shape = 's32[1]{0}', space=sflag, size = 0x4, scoped, tag = 'scoped memory for gcn_attn_forward.1']
    #allocation7 [shape = 'u8[1024]{0}', space=vmem, size = 0x400, scoped, tag = 'output window, operand 0']
    #allocation8 [shape = 'u8[1024]{0}', space=vmem, size = 0x400, scoped, tag = 'output window, operand 1']
    #allocation9 [shape = 's32[2]{0}', space=sflag, size = 0x8, scoped, tag = 'scoped memory for gcn_attn_forward.1']
    %15 = vsyncpa [#allocation3], 0
    %16 = vsyncpa [#allocation6], 0
    %17 = vsyncpa [#allocation4], 0
    %s18 = scalar_lea.sflag [#allocation4], 1
    %19 = vsyncpa %s18, 0
    %20 = vsyncpa [#allocation9], 0
    %s21 = scalar_lea.sflag [#allocation9], 1
    %22 = vsyncpa %s21, 0
    loop: start=0, step=1, limit=10
    $region2: #{gcn_attn_forward.1} parent=1 // loop_pre_header
      _
    $region3: #{gcn_attn_forward.1} parent=1 // loop_header
      %s24 = sphi 0, %s28
      %p25 = scmp.ge.s32.totalorder %s24, 10
      %s34 = sphi 0, %s36
      %s37 = sphi 0, %s34
      %s38 = sphi 0, %s37
      %s54 = sphi 0, %s38
      %s60 = sphi 0, %s62
      %s63 = sphi 0, %s60
      %s64 = sphi 0, %s63
      %s80 = sphi 0, %s64
      %s86 = sphi 0, %s88
      %s89 = sphi 0, %s86
      %s90 = sphi 0, %s89
      %s106 = sphi 0, %s90
      %s110 = sphi 0, %s110
      %s112 = sphi 0, %s110
      %s113 = sphi 0, %s112
      %s127 = sphi 0, %s113
      %s131 = sphi 0, %s131
      %s133 = sphi 0, %s131
      %s134 = sphi 0, %s133
      %s148 = sphi 0, %s134
      %s152 = sphi 0, %s152
      %s154 = sphi 0, %s152
      %s155 = sphi 0, %s154
      %s169 = sphi 0, %s155
      %s173 = sphi 0, %s173
      %s175 = sphi 0, %s173
      %s176 = sphi 0, %s175
      %s190 = sphi 0, %s176
      %s196 = sphi 0, %s198
      %s199 = sphi 0, %s196
      %s200 = sphi 0, %s199
      %s216 = sphi 0, %s200
      %s222 = sphi 0, %s224
      %s225 = sphi 0, %s222
      %s226 = sphi 0, %s225
      %s242 = sphi 0, %s226
      %s248 = sphi 0, %s250
      %s251 = sphi 0, %s248
      %s252 = sphi 0, %s251
      %s268 = sphi 0, %s252
    $region4: #{gcn_attn_forward.1} parent=1 // loop_header_branch
      %27 = sbr.rel (%p25) target = $region8
    $region5: #{gcn_attn_forward.1} parent=1 // loop_body
      %s29 = ssub.s32 %s24, 1
      %s30 = ssub.s32 %s24, 2
      %s31 = sadd.s32 %s24, 1
      %s32 = ssub.s32 %s24, %s31
      %p33 = scmp.eq.s32.totalorder %s32, 0
      %s35 = sadd.s32 %s34, 1
      %s36 = scalar_select %p33, %s34, %s35
      %p39 = pneg %p33
      %p40 = scmp.eq.s32.totalorder %s24, 7
      %p41 = por %p39, %p40
      %p42 = scmp.ne.s32.totalorder %s34, %s37
      %p43 = scmp.eq.s32.totalorder %s24, 0
      %p44 = por %p42, %p43
      %p45 = scmp.ne.s32.totalorder %s34, %s37
      %p46 = scmp.eq.s32.totalorder %s29, 7
      %p47 = por %p45, %p46
      %p48 = scmp.ne.s32.totalorder %s37, %s38
      %p49 = scmp.eq.s32.totalorder %s29, 0
      %p50 = por %p48, %p49
      %p51 = scmp.ne.s32.totalorder %s37, %s38
      %p52 = scmp.eq.s32.totalorder %s30, 7
      %p53 = por %p51, %p52
      %p55 = scmp.ne.s32.totalorder %s38, %s54
      %p56 = scmp.eq.s32.totalorder %s30, 0
      %p57 = por %p55, %p56
      %s58 = ssub.s32 %s24, %s31
      %p59 = scmp.eq.s32.totalorder %s58, 0
      %s61 = sadd.s32 %s60, 1
      %s62 = scalar_select %p59, %s60, %s61
      %p65 = pneg %p59
      %p66 = scmp.eq.s32.totalorder %s24, 7
      %p67 = por %p65, %p66
      %p68 = scmp.ne.s32.totalorder %s60, %s63
      %p69 = scmp.eq.s32.totalorder %s24, 0
      %p70 = por %p68, %p69
      %p71 = scmp.ne.s32.totalorder %s60, %s63
      %p72 = scmp.eq.s32.totalorder %s29, 7
      %p73 = por %p71, %p72
      %p74 = scmp.ne.s32.totalorder %s63, %s64
      %p75 = scmp.eq.s32.totalorder %s29, 0
      %p76 = por %p74, %p75
      %p77 = scmp.ne.s32.totalorder %s63, %s64
      %p78 = scmp.eq.s32.totalorder %s30, 7
      %p79 = por %p77, %p78
      %p81 = scmp.ne.s32.totalorder %s64, %s80
      %p82 = scmp.eq.s32.totalorder %s30, 0
      %p83 = por %p81, %p82
      %s84 = ssub.s32 %s24, %s31
      %p85 = scmp.eq.s32.totalorder %s84, 0
      %s87 = sadd.s32 %s86, 1
      %s88 = scalar_select %p85, %s86, %s87
      %p91 = pneg %p85
      %p92 = scmp.eq.s32.totalorder %s24, 7
      %p93 = por %p91, %p92
      %p94 = scmp.ne.s32.totalorder %s86, %s89
      %p95 = scmp.eq.s32.totalorder %s24, 0
      %p96 = por %p94, %p95
      %p97 = scmp.ne.s32.totalorder %s86, %s89
      %p98 = scmp.eq.s32.totalorder %s29, 7
      %p99 = por %p97, %p98
      %p100 = scmp.ne.s32.totalorder %s89, %s90
      %p101 = scmp.eq.s32.totalorder %s29, 0
      %p102 = por %p100, %p101
      %p103 = scmp.ne.s32.totalorder %s89, %s90
      %p104 = scmp.eq.s32.totalorder %s30, 7
      %p105 = por %p103, %p104
      %p107 = scmp.ne.s32.totalorder %s90, %s106
      %p108 = scmp.eq.s32.totalorder %s30, 0
      %p109 = por %p107, %p108
      %s111 = sadd.s32 %s110, 1
      %p114 = scmp.eq.s32.totalorder %s24, 7
      %p115 = scmp.ne.s32.totalorder %s110, %s112
      %p116 = scmp.eq.s32.totalorder %s24, 0
      %p117 = por %p115, %p116
      %p118 = scmp.ne.s32.totalorder %s110, %s112
      %p119 = scmp.eq.s32.totalorder %s29, 7
      %p120 = por %p118, %p119
      %p121 = scmp.ne.s32.totalorder %s112, %s113
      %p122 = scmp.eq.s32.totalorder %s29, 0
      %p123 = por %p121, %p122
      %p124 = scmp.ne.s32.totalorder %s112, %s113
      %p125 = scmp.eq.s32.totalorder %s30, 7
      %p126 = por %p124, %p125
      %p128 = scmp.ne.s32.totalorder %s113, %s127
      %p129 = scmp.eq.s32.totalorder %s30, 0
      %p130 = por %p128, %p129
      %s132 = sadd.s32 %s131, 1
      %p135 = scmp.eq.s32.totalorder %s24, 7
      %p136 = scmp.ne.s32.totalorder %s131, %s133
      %p137 = scmp.eq.s32.totalorder %s24, 0
      %p138 = por %p136, %p137
      %p139 = scmp.ne.s32.totalorder %s131, %s133
      %p140 = scmp.eq.s32.totalorder %s29, 7
      %p141 = por %p139, %p140
      %p142 = scmp.ne.s32.totalorder %s133, %s134
      %p143 = scmp.eq.s32.totalorder %s29, 0
      %p144 = por %p142, %p143
      %p145 = scmp.ne.s32.totalorder %s133, %s134
      %p146 = scmp.eq.s32.totalorder %s30, 7
      %p147 = por %p145, %p146
      %p149 = scmp.ne.s32.totalorder %s134, %s148
      %p150 = scmp.eq.s32.totalorder %s30, 0
      %p151 = por %p149, %p150
      %s153 = sadd.s32 %s152, 1
      %p156 = scmp.eq.s32.totalorder %s24, 7
      %p157 = scmp.ne.s32.totalorder %s152, %s154
      %p158 = scmp.eq.s32.totalorder %s24, 0
      %p159 = por %p157, %p158
      %p160 = scmp.ne.s32.totalorder %s152, %s154
      %p161 = scmp.eq.s32.totalorder %s29, 7
      %p162 = por %p160, %p161
      %p163 = scmp.ne.s32.totalorder %s154, %s155
      %p164 = scmp.eq.s32.totalorder %s29, 0
      %p165 = por %p163, %p164
      %p166 = scmp.ne.s32.totalorder %s154, %s155
      %p167 = scmp.eq.s32.totalorder %s30, 7
      %p168 = por %p166, %p167
      %p170 = scmp.ne.s32.totalorder %s155, %s169
      %p171 = scmp.eq.s32.totalorder %s30, 0
      %p172 = por %p170, %p171
      %s174 = sadd.s32 %s173, 1
      %p177 = scmp.eq.s32.totalorder %s24, 7
      %p178 = scmp.ne.s32.totalorder %s173, %s175
      %p179 = scmp.eq.s32.totalorder %s24, 0
      %p180 = por %p178, %p179
      %p181 = scmp.ne.s32.totalorder %s173, %s175
      %p182 = scmp.eq.s32.totalorder %s29, 7
      %p183 = por %p181, %p182
      %p184 = scmp.ne.s32.totalorder %s175, %s176
      %p185 = scmp.eq.s32.totalorder %s29, 0
      %p186 = por %p184, %p185
      %p187 = scmp.ne.s32.totalorder %s175, %s176
      %p188 = scmp.eq.s32.totalorder %s30, 7
      %p189 = por %p187, %p188
      %p191 = scmp.ne.s32.totalorder %s176, %s190
      %p192 = scmp.eq.s32.totalorder %s30, 0
      %p193 = por %p191, %p192
      %s194 = ssub.s32 %s24, %s31
      %p195 = scmp.eq.s32.totalorder %s194, 0
      %s197 = sadd.s32 %s196, 1
      %s198 = scalar_select %p195, %s196, %s197
      %p201 = pneg %p195
      %p202 = scmp.eq.s32.totalorder %s24, 7
      %p203 = por %p201, %p202
      %p204 = scmp.ne.s32.totalorder %s196, %s199
      %p205 = scmp.eq.s32.totalorder %s24, 0
      %p206 = por %p204, %p205
      %p207 = scmp.ne.s32.totalorder %s196, %s199
      %p208 = scmp.eq.s32.totalorder %s29, 7
      %p209 = por %p207, %p208
      %p210 = scmp.ne.s32.totalorder %s199, %s200
      %p211 = scmp.eq.s32.totalorder %s29, 0
      %p212 = por %p210, %p211
      %p213 = scmp.ne.s32.totalorder %s199, %s200
      %p214 = scmp.eq.s32.totalorder %s30, 7
      %p215 = por %p213, %p214
      %p217 = scmp.ne.s32.totalorder %s200, %s216
      %p218 = scmp.eq.s32.totalorder %s30, 0
      %p219 = por %p217, %p218
      %s220 = ssub.s32 %s24, %s31
      %p221 = scmp.eq.s32.totalorder %s220, 0
      %s223 = sadd.s32 %s222, 1
      %s224 = scalar_select %p221, %s222, %s223
      %p227 = pneg %p221
      %p228 = scmp.eq.s32.totalorder %s24, 7
      %p229 = por %p227, %p228
      %p230 = scmp.ne.s32.totalorder %s222, %s225
      %p231 = scmp.eq.s32.totalorder %s24, 0
      %p232 = por %p230, %p231
      %p233 = scmp.ne.s32.totalorder %s222, %s225
      %p234 = scmp.eq.s32.totalorder %s29, 7
      %p235 = por %p233, %p234
      %p236 = scmp.ne.s32.totalorder %s225, %s226
      %p237 = scmp.eq.s32.totalorder %s29, 0
      %p238 = por %p236, %p237
      %p239 = scmp.ne.s32.totalorder %s225, %s226
      %p240 = scmp.eq.s32.totalorder %s30, 7
      %p241 = por %p239, %p240
      %p243 = scmp.ne.s32.totalorder %s226, %s242
      %p244 = scmp.eq.s32.totalorder %s30, 0
      %p245 = por %p243, %p244
      %s246 = ssub.s32 %s24, %s31
      %p247 = scmp.eq.s32.totalorder %s246, 0
      %s249 = sadd.s32 %s248, 1
      %s250 = scalar_select %p247, %s248, %s249
      %p253 = pneg %p247
      %p254 = scmp.eq.s32.totalorder %s24, 7
      %p255 = por %p253, %p254
      %p256 = scmp.ne.s32.totalorder %s248, %s251
      %p257 = scmp.eq.s32.totalorder %s24, 0
      %p258 = por %p256, %p257
      %p259 = scmp.ne.s32.totalorder %s248, %s251
      %p260 = scmp.eq.s32.totalorder %s29, 7
      %p261 = por %p259, %p260
      %p262 = scmp.ne.s32.totalorder %s251, %s252
      %p263 = scmp.eq.s32.totalorder %s29, 0
      %p264 = por %p262, %p263
      %p265 = scmp.ne.s32.totalorder %s251, %s252
      %p266 = scmp.eq.s32.totalorder %s30, 7
      %p267 = por %p265, %p266
      %p269 = scmp.ne.s32.totalorder %s252, %s268
      %p270 = scmp.eq.s32.totalorder %s30, 0
      %p271 = por %p269, %p270
      %p272 = scmp.le.s32.totalorder 1, %s24
      %p273 = scmp.lt.s32.totalorder %s24, 9
      %p274 = pnand %p272, %p273
      %p275 = pneg %p274
      // Predicated region
      $region9: #{gcn_attn_forward.1} parent=5 // pred_check
        _
      $region10: #{gcn_attn_forward.1} parent=5 // pred_check_branch
        %277 = sbr.rel (%p274) target = $region12
      $region11: #{gcn_attn_forward.1} parent=5 // pred_region
        %s278 = ssub.s32 %s24, 1
        // Predicated region
        $region13: #{gcn_attn_forward.1} parent=11 // pred_check
          %p279 = pneg %p123
        $region14: #{gcn_attn_forward.1} parent=11 // pred_check_branch
          %281 = sbr.rel (%p279) target = $region16
        $region15: #{gcn_attn_forward.1} parent=11 // pred_region
          _
        $region16: #{gcn_attn_forward.1} parent=11 // pred_fallthru
          _
        // Predicated region
        $region17: #{gcn_attn_forward.1} parent=11 // pred_check
          %p282 = pneg %p144
        $region18: #{gcn_attn_forward.1} parent=11 // pred_check_branch
          %284 = sbr.rel (%p282) target = $region20
        $region19: #{gcn_attn_forward.1} parent=11 // pred_region
          %s286 = ssub.s32 16384, 16384
          %287 = vsyncadd [#allocation3], %s286
          %s288 = sshll.u32 [#allocation2], 4
          %s289 = int_to_ptr.vmem [resolvable:$true] %s288
          %294 = dma.hbm_to_vmem [thread:$0]  %s4, 16384, %s289, [#allocation3], 128, 128, 8
        $region20: #{gcn_attn_forward.1} parent=11 // pred_fallthru
          _
        // Predicated region
        $region21: #{gcn_attn_forward.1} parent=11 // pred_check
          %p295 = pneg %p165
        $region22: #{gcn_attn_forward.1} parent=11 // pred_check_branch
          %297 = sbr.rel (%p295) target = $region24
        $region23: #{gcn_attn_forward.1} parent=11 // pred_region
          %s299 = ssub.s32 24576, 24576
          %300 = vsyncadd [#allocation6], %s299
          %s301 = sshll.u32 [#allocation5], 4
          %s302 = int_to_ptr.vmem [resolvable:$true] %s301
          %307 = dma.hbm_to_vmem [thread:$0]  %s5, 24576, %s302, [#allocation6], 512, 512, 32
        $region24: #{gcn_attn_forward.1} parent=11 // pred_fallthru
          _
        // Predicated region
        $region25: #{gcn_attn_forward.1} parent=11 // pred_check
          %p308 = pneg %p186
        $region26: #{gcn_attn_forward.1} parent=11 // pred_check_branch
          %310 = sbr.rel (%p308) target = $region28
        $region27: #{gcn_attn_forward.1} parent=11 // pred_region
          _
        $region28: #{gcn_attn_forward.1} parent=11 // pred_fallthru
          _
      $region12: #{gcn_attn_forward.1} parent=5 // pred_fallthru
        _
      %p311 = scmp.lt.s32.totalorder %s24, 8
      // Predicated region
      $region29: #{gcn_attn_forward.1} parent=5 // pred_check
        %p312 = pneg %p311
      $region30: #{gcn_attn_forward.1} parent=5 // pred_check_branch
        %314 = sbr.rel (%p312) target = $region32
      $region31: #{gcn_attn_forward.1} parent=5 // pred_region
        // Predicated region
        $region33: #{gcn_attn_forward.1} parent=31 // pred_check
          %p315 = pneg %p44
        $region34: #{gcn_attn_forward.1} parent=31 // pred_check_branch
          %317 = sbr.rel (%p315) target = $region36
        $region35: #{gcn_attn_forward.1} parent=31 // pred_region
          %p318 = scmp.lt.s32.totalorder %s24, 7
          %s319 = scalar_select %p318, %s24, 7
          %s320 = smul.addr %s319, 8
          %s321 = scalar_lea.vmem %s0, %s320
        $region36: #{gcn_attn_forward.1} parent=31 // pred_fallthru
          _
        // Predicated region
        $region37: #{gcn_attn_forward.1} parent=31 // pred_check
          %p322 = pneg %p70
        $region38: #{gcn_attn_forward.1} parent=31 // pred_check_branch
          %324 = sbr.rel (%p322) target = $region40
        $region39: #{gcn_attn_forward.1} parent=31 // pred_region
          %p325 = scmp.lt.s32.totalorder %s24, 7
          %s326 = scalar_select %p325, %s24, 7
          %s327 = scalar_lea.vmem %s1, %s326
        $region40: #{gcn_attn_forward.1} parent=31 // pred_fallthru
          _
        // Predicated region
        $region41: #{gcn_attn_forward.1} parent=31 // pred_check
          %p328 = pneg %p96
        $region42: #{gcn_attn_forward.1} parent=31 // pred_check_branch
          %330 = sbr.rel (%p328) target = $region44
        $region43: #{gcn_attn_forward.1} parent=31 // pred_region
          %p331 = scmp.lt.s32.totalorder %s24, 7
          %s332 = scalar_select %p331, %s24, 7
          %s333 = scalar_lea.vmem %s2, %s332
        $region44: #{gcn_attn_forward.1} parent=31 // pred_fallthru
          _
      $region32: #{gcn_attn_forward.1} parent=5 // pred_fallthru
        _
      %p334 = scmp.le.s32.totalorder 1, %s24
      %p335 = scmp.lt.s32.totalorder %s24, 9
      %p336 = pnand %p334, %p335
      %p337 = pneg %p336
      // Predicated region
      $region45: #{gcn_attn_forward.1} parent=5 // pred_check
        _
      $region46: #{gcn_attn_forward.1} parent=5 // pred_check_branch
        %339 = sbr.rel (%p336) target = $region48
      $region47: #{gcn_attn_forward.1} parent=5 // pred_region
        %s340 = ssub.s32 %s24, 1
        // Predicated region
        $region49: #{gcn_attn_forward.1} parent=47 // pred_check
          %p341 = pneg %p144
        $region50: #{gcn_attn_forward.1} parent=47 // pred_check_branch
          %343 = sbr.rel (%p341) target = $region52
        $region51: #{gcn_attn_forward.1} parent=47 // pred_region
          %344 = dma.done [#allocation3], 16384
        $region52: #{gcn_attn_forward.1} parent=47 // pred_fallthru
          _
        // Predicated region
        $region53: #{gcn_attn_forward.1} parent=47 // pred_check
          %p345 = pneg %p165
        $region54: #{gcn_attn_forward.1} parent=47 // pred_check_branch
          %347 = sbr.rel (%p345) target = $region56
        $region55: #{gcn_attn_forward.1} parent=47 // pred_region
          %348 = dma.done [#allocation6], 24576
        $region56: #{gcn_attn_forward.1} parent=47 // pred_fallthru
          _
        %p349 = scmp.lt.s32.totalorder %s29, 7
        %s350 = scalar_select %p349, %s29, 7
        %s351 = smul.addr %s350, 8
        %s352 = scalar_lea.vmem %s0, %s351
        %p353 = pneg %p50
        %p354 = pneg %p47
        %p355 = scmp.lt.s32.totalorder %s29, 7
        %s356 = scalar_select %p355, %s29, 7
        %s357 = scalar_lea.vmem %s1, %s356
        %p358 = pneg %p76
        %p359 = pneg %p73
        %p360 = scmp.lt.s32.totalorder %s29, 7
        %s361 = scalar_select %p360, %s29, 7
        %s362 = scalar_lea.vmem %s2, %s361
        %p363 = pneg %p102
        %p364 = pneg %p99
        %p365 = pneg %p123
        %p366 = pneg %p120
        %p367 = pneg %p144
        %p368 = pneg %p141
        %p369 = pneg %p165
        %p370 = pneg %p162
        %p371 = pneg %p186
        %p372 = pneg %p183
        %p373 = pneg %p212
        %p374 = pneg %p209
        %s375 = sand.u32 %s199, 1
        %s376 = scalar_lea.sflag [#allocation4], %s375
        %s377 = sand.u32 %s199, 1
        %s378 = scalar_lea.vmem [#allocation7], %s377
        %p379 = pneg %p238
        %p380 = pneg %p235
        %s381 = sand.u32 %s225, 1
        %s382 = scalar_lea.sflag [#allocation9], %s381
        %s383 = sand.u32 %s225, 1
        %s384 = scalar_lea.vmem [#allocation8], %s383
        %p385 = pneg %p264
        %p386 = pneg %p261
        %p387 = scmp.lt.s32.totalorder %s29, 7
        %s388 = scalar_select %p387, %s29, 7
        %s389 = scalar_lea.vmem %s9, %s388
        %p390 = scmp.lt.s32.totalorder %s29, 7
        %s391 = scalar_select %p390, %s29, 7
        %s392 = smul.addr %s391, 8
        %s393 = scalar_lea.vmem %s0, %s392
        %p394 = scmp.lt.s32.totalorder %s29, 7
        %s395 = scalar_select %p394, %s29, 7
        %s396 = scalar_lea.vmem %s1, %s395
        %p397 = scmp.lt.s32.totalorder %s29, 7
        %s398 = scalar_select %p397, %s29, 7
        %s399 = scalar_lea.vmem %s2, %s398
        %p400 = scmp.lt.s32.totalorder %s29, 7
        %s401 = scalar_select %p400, %s29, 7
        %s402 = scalar_lea.vmem %s9, %s401
        %v403 = vld [vmem:[%s393] sm:$0xff]
        %v404 = vld [vmem:[%s6] sm:$0xff]
        %v405 = vld [vmem:[%s6 + $0x8] sm:$0xff]
        %v406 = vld [vmem:[%s3] sm:$0xff]
        %v407 = vld [vmem:[%s3 + $0x8] sm:$0xff]
        %v408 = vld [vmem:[%s3 + $0x10] sm:$0xff]
        %v409 = vld [vmem:[%s3 + $0x18] sm:$0xff]
        %v410 = vld [vmem:[%s3 + $0x20] sm:$0xff]
        %vm411 = vcmask 326656
        %v413 = vsel %vm411, %v403, 0
        %415 = vmatprep.subr.mxu0 0.0
        %416 = vmatpush1.msra.mxu0 %v406
        %417 = vmatprep.subr.mxu0 0.0
        %418 = vmatpush1.msra.mxu0 %v407
        %419 = vmatprep.subr.mxu0 0.0
        %420 = vmatpush1.msra.mxu0 %v408
        %421 = vmatprep.subr.mxu0 0.0
        %422 = vmatpush1.msra.mxu0 %v409
        %423 = vmatprep.subr.mxu0 0.0
        %424 = vmatpush1.msra.mxu0 %v410
        %425 = vmatprep.subr.mxu0 0.0
        %426 = vmatpush1.msra.mxu0 0.0
        %427 = vmatprep.subr.mxu0 0.0
        %428 = vmatpush1.msra.mxu0 0.0
        %429 = vmatprep.subr.mxu0 0.0
        %430 = vmatpush1.msra.mxu0 0.0
        %431 = vmatprep.subr.mxu0 0.0
        %432 = vmatpush1.msra.mxu0 0.0
        %433 = vmatprep.subr.mxu0 0.0
        %434 = vmatpush1.msra.mxu0 0.0
        %435 = vmatprep.subr.mxu0 0.0
        %436 = vmatpush1.msra.mxu0 0.0
        %437 = vmatprep.subr.mxu0 0.0
        %438 = vmatpush1.msra.mxu0 0.0
        %439 = vmatprep.subr.mxu0 0.0
        %440 = vmatpush1.msra.mxu0 0.0
        %441 = vmatprep.subr.mxu0 0.0
        %442 = vmatpush1.msra.mxu0 0.0
        %443 = vmatprep.subr.mxu0 0.0
        %444 = vmatpush1.msra.mxu0 0.0
        %445 = vmatprep.subr.mxu0 0.0
        %446 = vmatpush1.msra.mxu0 0.0
        %447 = vmatprep.subr.mxu0 0.0
        %448 = vmatpush1.msra.mxu0 0.0
        %449 = vmatprep.subr.mxu0 0.0
        %450 = vmatpush1.msra.mxu0 0.0
        %451 = vmatprep.subr.mxu0 0.0
        %452 = vmatpush1.msra.mxu0 0.0
        %453 = vmatprep.subr.mxu0 0.0
        %454 = vmatpush1.msra.mxu0 0.0
        %455 = vmatprep.subr.mxu0 0.0
        %456 = vmatpush1.msra.mxu0 0.0
        %457 = vmatprep.subr.mxu0 0.0
        %458 = vmatpush1.msra.mxu0 0.0
        %459 = vmatprep.subr.mxu0 0.0
        %460 = vmatpush1.msra.mxu0 0.0
        %461 = vmatprep.subr.mxu0 0.0
        %462 = vmatpush1.msra.mxu0 0.0
        %463 = vmatprep.subr.mxu0 0.0
        %464 = vmatpush1.msra.mxu0 0.0
        %465 = vmatprep.subr.mxu0 0.0
        %466 = vmatpush1.msra.mxu0 0.0
        %467 = vmatprep.subr.mxu0 0.0
        %468 = vmatpush1.msra.mxu0 0.0
        %469 = vmatprep.subr.mxu0 0.0
        %470 = vmatpush1.msra.mxu0 0.0
        %471 = vmatprep.subr.mxu0 0.0
        %472 = vmatpush1.msra.mxu0 0.0
        %473 = vmatprep.subr.mxu0 0.0
        %474 = vmatpush1.msra.mxu0 0.0
        %475 = vmatprep.subr.mxu0 0.0
        %476 = vmatpush1.msra.mxu0 0.0
        %477 = vmatprep.subr.mxu0 0.0
        %478 = vmatpush1.msra.mxu0 0.0
        %479 = vmatprep.mubr.f32.mxu0 0.0
        %480 = vmatmul.mubr.f32.gmra.mrb[0].mxu0 %v413
        %v481 = vpop.f32.mrb[0].mxu0
        %v482 = vadd.f32 0.0, %v481
        %v483 = vpop.f32.mrb[0].mxu0
        %484 = vdwg.mxu0
        %v486 = vrot.slane %v404, 1
        %v488 = vadd.f32 %v482, %v486
        %v489 = vmax.f32 %v488, 0.0
        %v490 = vld [vmem:[#allocation2] sm:$0xff]
        %v491 = vld [vmem:[#allocation2 + $0x8] sm:$0xff]
        %v492 = vld [vmem:[#allocation2 + $0x10] sm:$0xff]
        %v493 = vld [vmem:[#allocation2 + $0x18] sm:$0xff]
        %v494 = vld [vmem:[#allocation2 + $0x20] sm:$0xff]
        %v495 = vld [vmem:[#allocation2 + $0x28] sm:$0xff]
        %v496 = vld [vmem:[#allocation2 + $0x30] sm:$0xff]
        %v497 = vld [vmem:[#allocation2 + $0x38] sm:$0xff]
        %v498 = vld [vmem:[#allocation2 + $0x40] sm:$0xff]
        %v499 = vld [vmem:[#allocation2 + $0x48] sm:$0xff]
        %v500 = vld [vmem:[#allocation2 + $0x50] sm:$0xff]
        %v501 = vld [vmem:[#allocation2 + $0x58] sm:$0xff]
        %v502 = vld [vmem:[#allocation2 + $0x60] sm:$0xff]
        %v503 = vld [vmem:[#allocation2 + $0x68] sm:$0xff]
        %v504 = vld [vmem:[#allocation2 + $0x70] sm:$0xff]
        %v505 = vld [vmem:[#allocation2 + $0x78] sm:$0xff]
        %v506 = vld [vmem:[#allocation2 + $0x80] sm:$0xff]
        %v507 = vld [vmem:[#allocation2 + $0x88] sm:$0xff]
        %v508 = vld [vmem:[#allocation2 + $0x90] sm:$0xff]
        %v509 = vld [vmem:[#allocation2 + $0x98] sm:$0xff]
        %v510 = vld [vmem:[#allocation2 + $0xa0] sm:$0xff]
        %v511 = vld [vmem:[#allocation2 + $0xa8] sm:$0xff]
        %v512 = vld [vmem:[#allocation2 + $0xb0] sm:$0xff]
        %v513 = vld [vmem:[#allocation2 + $0xb8] sm:$0xff]
        %v514 = vld [vmem:[#allocation2 + $0xc0] sm:$0xff]
        %v515 = vld [vmem:[#allocation2 + $0xc8] sm:$0xff]
        %v516 = vld [vmem:[#allocation2 + $0xd0] sm:$0xff]
        %v517 = vld [vmem:[#allocation2 + $0xd8] sm:$0xff]
        %v518 = vld [vmem:[#allocation2 + $0xe0] sm:$0xff]
        %v519 = vld [vmem:[#allocation2 + $0xe8] sm:$0xff]
        %v520 = vld [vmem:[#allocation2 + $0xf0] sm:$0xff]
        %v521 = vld [vmem:[#allocation2 + $0xf8] sm:$0xff]
        %v522 = vlaneseq
        %v523 = vshrl.u32 %v522, 7
        %vm524 = vcmp.lt.s32.totalorder %v523, 3
        %v525 = vsel %vm524, 1, 0
        %v526 = vcvt.s32.f32 %v525
        %vm527 = vcmp.ge.s32.totalorder %v523, 3
        %vm528 = vcmp.lt.s32.totalorder %v523, 7
        %vm529 = vmand %vm527, %vm528
        %v530 = vsel %vm529, 1, 0
        %v531 = vcvt.s32.f32 %v530
        %vm532 = vcmp.eq.s32.totalorder %v523, 7
        %v533 = vsel %vm532, 1, 0
        %v534 = vcvt.s32.f32 %v533
        %v536 = vrot.slane %v489, 7
        %538 = vmatprep.subr.mxu0 0.0
        %539 = vmatpush1.msra.mxu0 %v490
        %540 = vmatprep.subr.mxu0 0.0
        %541 = vmatpush1.msra.mxu0 %v491
        %542 = vmatprep.subr.mxu0 0.0
        %543 = vmatpush1.msra.mxu0 %v492
        %544 = vmatprep.subr.mxu0 0.0
        %545 = vmatpush1.msra.mxu0 %v493
        %546 = vmatprep.subr.mxu0 0.0
        %547 = vmatpush1.msra.mxu0 %v494
        %548 = vmatprep.subr.mxu0 0.0
        %549 = vmatpush1.msra.mxu0 %v495
        %550 = vmatprep.subr.mxu0 0.0
        %551 = vmatpush1.msra.mxu0 %v496
        %552 = vmatprep.subr.mxu0 0.0
        %553 = vmatpush1.msra.mxu0 %v497
        %554 = vmatprep.subr.mxu0 0.0
        %555 = vmatpush1.msra.mxu0 %v498
        %556 = vmatprep.subr.mxu0 0.0
        %557 = vmatpush1.msra.mxu0 %v499
        %558 = vmatprep.subr.mxu0 0.0
        %559 = vmatpush1.msra.mxu0 %v500
        %560 = vmatprep.subr.mxu0 0.0
        %561 = vmatpush1.msra.mxu0 %v501
        %562 = vmatprep.subr.mxu0 0.0
        %563 = vmatpush1.msra.mxu0 %v502
        %564 = vmatprep.subr.mxu0 0.0
        %565 = vmatpush1.msra.mxu0 %v503
        %566 = vmatprep.subr.mxu0 0.0
        %567 = vmatpush1.msra.mxu0 %v504
        %568 = vmatprep.subr.mxu0 0.0
        %569 = vmatpush1.msra.mxu0 %v505
        %570 = vmatprep.subr.mxu0 0.0
        %571 = vmatpush1.msra.mxu0 0.0
        %572 = vmatprep.subr.mxu0 0.0
        %573 = vmatpush1.msra.mxu0 0.0
        %574 = vmatprep.subr.mxu0 0.0
        %575 = vmatpush1.msra.mxu0 0.0
        %576 = vmatprep.subr.mxu0 0.0
        %577 = vmatpush1.msra.mxu0 0.0
        %578 = vmatprep.subr.mxu0 0.0
        %579 = vmatpush1.msra.mxu0 0.0
        %580 = vmatprep.subr.mxu0 0.0
        %581 = vmatpush1.msra.mxu0 0.0
        %582 = vmatprep.subr.mxu0 0.0
        %583 = vmatpush1.msra.mxu0 0.0
        %584 = vmatprep.subr.mxu0 0.0
        %585 = vmatpush1.msra.mxu0 0.0
        %586 = vmatprep.subr.mxu0 0.0
        %587 = vmatpush1.msra.mxu0 0.0
        %588 = vmatprep.subr.mxu0 0.0
        %589 = vmatpush1.msra.mxu0 0.0
        %590 = vmatprep.subr.mxu0 0.0
        %591 = vmatpush1.msra.mxu0 0.0
        %592 = vmatprep.subr.mxu0 0.0
        %593 = vmatpush1.msra.mxu0 0.0
        %594 = vmatprep.subr.mxu0 0.0
        %595 = vmatpush1.msra.mxu0 0.0
        %596 = vmatprep.subr.mxu0 0.0
        %597 = vmatpush1.msra.mxu0 0.0
        %598 = vmatprep.subr.mxu0 0.0
        %599 = vmatpush1.msra.mxu0 0.0
        %600 = vmatprep.subr.mxu0 0.0
        %601 = vmatpush1.msra.mxu0 0.0
        %602 = vmatprep.mubr.f32.mxu0 0.0
        %603 = vmatmul.mubr.f32.gmra.mrb[0].mxu0 %v536
        %v604 = vpop.f32.mrb[0].mxu0
        %v605 = vadd.f32 %v486, %v604
        %v606 = vpop.f32.mrb[0].mxu0
        %607 = vdwg.mxu0
        %v608 = vlaneseq
        %v609 = vshrl.u32 %v608, 7
        %v610 = vsub.s32 0, %v609
        %v611 = vrot.slane %v605, %v610
        %v612 = vmul.f32 %v526, %v611
        %v613 = vadd.f32 %v482, %v612
        %v614 = vrot.slane %v404, 2
        %616 = vmatprep.subr.mxu0 0.0
        %617 = vmatpush1.msra.mxu0 %v506
        %618 = vmatprep.subr.mxu0 0.0
        %619 = vmatpush1.msra.mxu0 %v507
        %620 = vmatprep.subr.mxu0 0.0
        %621 = vmatpush1.msra.mxu0 %v508
        %622 = vmatprep.subr.mxu0 0.0
        %623 = vmatpush1.msra.mxu0 %v509
        %624 = vmatprep.subr.mxu0 0.0
        %625 = vmatpush1.msra.mxu0 %v510
        %626 = vmatprep.subr.mxu0 0.0
        %627 = vmatpush1.msra.mxu0 %v511
        %628 = vmatprep.subr.mxu0 0.0
        %629 = vmatpush1.msra.mxu0 %v512
        %630 = vmatprep.subr.mxu0 0.0
        %631 = vmatpush1.msra.mxu0 %v513
        %632 = vmatprep.subr.mxu0 0.0
        %633 = vmatpush1.msra.mxu0 %v514
        %634 = vmatprep.subr.mxu0 0.0
        %635 = vmatpush1.msra.mxu0 %v515
        %636 = vmatprep.subr.mxu0 0.0
        %637 = vmatpush1.msra.mxu0 %v516
        %638 = vmatprep.subr.mxu0 0.0
        %639 = vmatpush1.msra.mxu0 %v517
        %640 = vmatprep.subr.mxu0 0.0
        %641 = vmatpush1.msra.mxu0 %v518
        %642 = vmatprep.subr.mxu0 0.0
        %643 = vmatpush1.msra.mxu0 %v519
        %644 = vmatprep.subr.mxu0 0.0
        %645 = vmatpush1.msra.mxu0 %v520
        %646 = vmatprep.subr.mxu0 0.0
        %647 = vmatpush1.msra.mxu0 %v521
        %648 = vmatprep.subr.mxu0 0.0
        %649 = vmatpush1.msra.mxu0 0.0
        %650 = vmatprep.subr.mxu0 0.0
        %651 = vmatpush1.msra.mxu0 0.0
        %652 = vmatprep.subr.mxu0 0.0
        %653 = vmatpush1.msra.mxu0 0.0
        %654 = vmatprep.subr.mxu0 0.0
        %655 = vmatpush1.msra.mxu0 0.0
        %656 = vmatprep.subr.mxu0 0.0
        %657 = vmatpush1.msra.mxu0 0.0
        %658 = vmatprep.subr.mxu0 0.0
        %659 = vmatpush1.msra.mxu0 0.0
        %660 = vmatprep.subr.mxu0 0.0
        %661 = vmatpush1.msra.mxu0 0.0
        %662 = vmatprep.subr.mxu0 0.0
        %663 = vmatpush1.msra.mxu0 0.0
        %664 = vmatprep.subr.mxu0 0.0
        %665 = vmatpush1.msra.mxu0 0.0
        %666 = vmatprep.subr.mxu0 0.0
        %667 = vmatpush1.msra.mxu0 0.0
        %668 = vmatprep.subr.mxu0 0.0
        %669 = vmatpush1.msra.mxu0 0.0
        %670 = vmatprep.subr.mxu0 0.0
        %671 = vmatpush1.msra.mxu0 0.0
        %672 = vmatprep.subr.mxu0 0.0
        %673 = vmatpush1.msra.mxu0 0.0
        %674 = vmatprep.subr.mxu0 0.0
        %675 = vmatpush1.msra.mxu0 0.0
        %676 = vmatprep.subr.mxu0 0.0
        %677 = vmatpush1.msra.mxu0 0.0
        %678 = vmatprep.subr.mxu0 0.0
        %679 = vmatpush1.msra.mxu0 0.0
        %680 = vmatprep.mubr.f32.mxu0 0.0
        %681 = vmatmul.mubr.f32.gmra.mrb[0].mxu0 %v536
        %v682 = vpop.f32.mrb[0].mxu0
        %v683 = vadd.f32 %v614, %v682
        %v684 = vpop.f32.mrb[0].mxu0
        %685 = vdwg.mxu0
        %v686 = vlaneseq
        %v687 = vshrl.u32 %v686, 7
        %v688 = vsub.s32 0, %v687
        %v689 = vrot.slane %v683, %v688
        %v690 = vmul.f32 %v531, %v689
        %v691 = vadd.f32 %v613, %v690
        %v692 = vlaneseq
        %v693 = vshrl.u32 %v692, 7
        %v694 = vsub.s32 0, %v693
        %v695 = vrot.slane %v404, %v694
        %v696 = vmul.f32 %v534, %v695
        %v697 = vadd.f32 %v691, %v696
        %v698 = vmax.f32 %v697, 0.0
        %v699 = vld [vmem:[#allocation2 + $0x100] sm:$0xff]
        %v700 = vld [vmem:[#allocation2 + $0x108] sm:$0xff]
        %v701 = vld [vmem:[#allocation2 + $0x110] sm:$0xff]
        %v702 = vld [vmem:[#allocation2 + $0x118] sm:$0xff]
        %v703 = vld [vmem:[#allocation2 + $0x120] sm:$0xff]
        %v704 = vld [vmem:[#allocation2 + $0x128] sm:$0xff]
        %v705 = vld [vmem:[#allocation2 + $0x130] sm:$0xff]
        %v706 = vld [vmem:[#allocation2 + $0x138] sm:$0xff]
        %v707 = vld [vmem:[#allocation2 + $0x140] sm:$0xff]
        %v708 = vld [vmem:[#allocation2 + $0x148] sm:$0xff]
        %v709 = vld [vmem:[#allocation2 + $0x150] sm:$0xff]
        %v710 = vld [vmem:[#allocation2 + $0x158] sm:$0xff]
        %v711 = vld [vmem:[#allocation2 + $0x160] sm:$0xff]
        %v712 = vld [vmem:[#allocation2 + $0x168] sm:$0xff]
        %v713 = vld [vmem:[#allocation2 + $0x170] sm:$0xff]
        %v714 = vld [vmem:[#allocation2 + $0x178] sm:$0xff]
        %v715 = vlaneseq
        %v716 = vshrl.u32 %v715, 7
        %v717 = vsub.s32 3, %v716
        %v718 = vrot.slane %v404, %v717
        %719 = vmatprep.subr.mxu0 0.0
        %720 = vmatpush1.msra.mxu0 %v699
        %721 = vmatprep.subr.mxu0 0.0
        %722 = vmatpush1.msra.mxu0 %v700
        %723 = vmatprep.subr.mxu0 0.0
        %724 = vmatpush1.msra.mxu0 %v701
        %725 = vmatprep.subr.mxu0 0.0
        %726 = vmatpush1.msra.mxu0 %v702
        %727 = vmatprep.subr.mxu0 0.0
        %728 = vmatpush1.msra.mxu0 %v703
        %729 = vmatprep.subr.mxu0 0.0
        %730 = vmatpush1.msra.mxu0 %v704
        %731 = vmatprep.subr.mxu0 0.0
        %732 = vmatpush1.msra.mxu0 %v705
        %733 = vmatprep.subr.mxu0 0.0
        %734 = vmatpush1.msra.mxu0 %v706
        %735 = vmatprep.subr.mxu0 0.0
        %736 = vmatpush1.msra.mxu0 %v707
        %737 = vmatprep.subr.mxu0 0.0
        %738 = vmatpush1.msra.mxu0 %v708
        %739 = vmatprep.subr.mxu0 0.0
        %740 = vmatpush1.msra.mxu0 %v709
        %741 = vmatprep.subr.mxu0 0.0
        %742 = vmatpush1.msra.mxu0 %v710
        %743 = vmatprep.subr.mxu0 0.0
        %744 = vmatpush1.msra.mxu0 %v711
        %745 = vmatprep.subr.mxu0 0.0
        %746 = vmatpush1.msra.mxu0 %v712
        %747 = vmatprep.subr.mxu0 0.0
        %748 = vmatpush1.msra.mxu0 %v713
        %749 = vmatprep.subr.mxu0 0.0
        %750 = vmatpush1.msra.mxu0 %v714
        %751 = vmatprep.subr.mxu0 0.0
        %752 = vmatpush1.msra.mxu0 0.0
        %753 = vmatprep.subr.mxu0 0.0
        %754 = vmatpush1.msra.mxu0 0.0
        %755 = vmatprep.subr.mxu0 0.0
        %756 = vmatpush1.msra.mxu0 0.0
        %757 = vmatprep.subr.mxu0 0.0
        %758 = vmatpush1.msra.mxu0 0.0
        %759 = vmatprep.subr.mxu0 0.0
        %760 = vmatpush1.msra.mxu0 0.0
        %761 = vmatprep.subr.mxu0 0.0
        %762 = vmatpush1.msra.mxu0 0.0
        %763 = vmatprep.subr.mxu0 0.0
        %764 = vmatpush1.msra.mxu0 0.0
        %765 = vmatprep.subr.mxu0 0.0
        %766 = vmatpush1.msra.mxu0 0.0
        %767 = vmatprep.subr.mxu0 0.0
        %768 = vmatpush1.msra.mxu0 0.0
        %769 = vmatprep.subr.mxu0 0.0
        %770 = vmatpush1.msra.mxu0 0.0
        %771 = vmatprep.subr.mxu0 0.0
        %772 = vmatpush1.msra.mxu0 0.0
        %773 = vmatprep.subr.mxu0 0.0
        %774 = vmatpush1.msra.mxu0 0.0
        %775 = vmatprep.subr.mxu0 0.0
        %776 = vmatpush1.msra.mxu0 0.0
        %777 = vmatprep.subr.mxu0 0.0
        %778 = vmatpush1.msra.mxu0 0.0
        %779 = vmatprep.subr.mxu0 0.0
        %780 = vmatpush1.msra.mxu0 0.0
        %781 = vmatprep.subr.mxu0 0.0
        %782 = vmatpush1.msra.mxu0 0.0
        %783 = vmatprep.mubr.f32.mxu0 0.0
        %784 = vmatmul.mubr.f32.gmra.mrb[0].mxu0 %v698
        %v785 = vpop.f32.mrb[0].mxu0
        %v786 = vadd.f32 %v718, %v785
        %v787 = vpop.f32.mrb[0].mxu0
        %788 = vdwg.mxu0
        %v789 = vld [vmem:[#allocation2 + $0x180] sm:$0xff]
        %v790 = vld [vmem:[#allocation2 + $0x188] sm:$0xff]
        %v791 = vld [vmem:[#allocation2 + $0x190] sm:$0xff]
        %v792 = vld [vmem:[#allocation2 + $0x198] sm:$0xff]
        %v793 = vld [vmem:[#allocation2 + $0x1a0] sm:$0xff]
        %v794 = vld [vmem:[#allocation2 + $0x1a8] sm:$0xff]
        %v795 = vld [vmem:[#allocation2 + $0x1b0] sm:$0xff]
        %v796 = vld [vmem:[#allocation2 + $0x1b8] sm:$0xff]
        %v797 = vld [vmem:[#allocation2 + $0x1c0] sm:$0xff]
        %v798 = vld [vmem:[#allocation2 + $0x1c8] sm:$0xff]
        %v799 = vld [vmem:[#allocation2 + $0x1d0] sm:$0xff]
        %v800 = vld [vmem:[#allocation2 + $0x1d8] sm:$0xff]
        %v801 = vld [vmem:[#allocation2 + $0x1e0] sm:$0xff]
        %v802 = vld [vmem:[#allocation2 + $0x1e8] sm:$0xff]
        %v803 = vld [vmem:[#allocation2 + $0x1f0] sm:$0xff]
        %v804 = vld [vmem:[#allocation2 + $0x1f8] sm:$0xff]
        %v805 = vlaneseq
        %v806 = vshrl.u32 %v805, 7
        %v807 = vsub.s32 4, %v806
        %v808 = vrot.slane %v404, %v807
        %809 = vmatprep.subr.mxu0 0.0
        %810 = vmatpush1.msra.mxu0 %v789
        %811 = vmatprep.subr.mxu0 0.0
        %812 = vmatpush1.msra.mxu0 %v790
        %813 = vmatprep.subr.mxu0 0.0
        %814 = vmatpush1.msra.mxu0 %v791
        %815 = vmatprep.subr.mxu0 0.0
        %816 = vmatpush1.msra.mxu0 %v792
        %817 = vmatprep.subr.mxu0 0.0
        %818 = vmatpush1.msra.mxu0 %v793
        %819 = vmatprep.subr.mxu0 0.0
        %820 = vmatpush1.msra.mxu0 %v794
        %821 = vmatprep.subr.mxu0 0.0
        %822 = vmatpush1.msra.mxu0 %v795
        %823 = vmatprep.subr.mxu0 0.0
        %824 = vmatpush1.msra.mxu0 %v796
        %825 = vmatprep.subr.mxu0 0.0
        %826 = vmatpush1.msra.mxu0 %v797
        %827 = vmatprep.subr.mxu0 0.0
        %828 = vmatpush1.msra.mxu0 %v798
        %829 = vmatprep.subr.mxu0 0.0
        %830 = vmatpush1.msra.mxu0 %v799
        %831 = vmatprep.subr.mxu0 0.0
        %832 = vmatpush1.msra.mxu0 %v800
        %833 = vmatprep.subr.mxu0 0.0
        %834 = vmatpush1.msra.mxu0 %v801
        %835 = vmatprep.subr.mxu0 0.0
        %836 = vmatpush1.msra.mxu0 %v802
        %837 = vmatprep.subr.mxu0 0.0
        %838 = vmatpush1.msra.mxu0 %v803
        %839 = vmatprep.subr.mxu0 0.0
        %840 = vmatpush1.msra.mxu0 %v804
        %841 = vmatprep.subr.mxu0 0.0
        %842 = vmatpush1.msra.mxu0 0.0
        %843 = vmatprep.subr.mxu0 0.0
        %844 = vmatpush1.msra.mxu0 0.0
        %845 = vmatprep.subr.mxu0 0.0
        %846 = vmatpush1.msra.mxu0 0.0
        %847 = vmatprep.subr.mxu0 0.0
        %848 = vmatpush1.msra.mxu0 0.0
        %849 = vmatprep.subr.mxu0 0.0
        %850 = vmatpush1.msra.mxu0 0.0
        %851 = vmatprep.subr.mxu0 0.0
        %852 = vmatpush1.msra.mxu0 0.0
        %853 = vmatprep.subr.mxu0 0.0
        %854 = vmatpush1.msra.mxu0 0.0
        %855 = vmatprep.subr.mxu0 0.0
        %856 = vmatpush1.msra.mxu0 0.0
        %857 = vmatprep.subr.mxu0 0.0
        %858 = vmatpush1.msra.mxu0 0.0
        %859 = vmatprep.subr.mxu0 0.0
        %860 = vmatpush1.msra.mxu0 0.0
        %861 = vmatprep.subr.mxu0 0.0
        %862 = vmatpush1.msra.mxu0 0.0
        %863 = vmatprep.subr.mxu0 0.0
        %864 = vmatpush1.msra.mxu0 0.0
        %865 = vmatprep.subr.mxu0 0.0
        %866 = vmatpush1.msra.mxu0 0.0
        %867 = vmatprep.subr.mxu0 0.0
        %868 = vmatpush1.msra.mxu0 0.0
        %869 = vmatprep.subr.mxu0 0.0
        %870 = vmatpush1.msra.mxu0 0.0
        %871 = vmatprep.subr.mxu0 0.0
        %872 = vmatpush1.msra.mxu0 0.0
        %873 = vmatprep.mubr.f32.mxu0 0.0
        %874 = vmatmul.mubr.f32.gmra.mrb[0].mxu0 %v698
        %v875 = vpop.f32.mrb[0].mxu0
        %v876 = vadd.f32 %v808, %v875
        %v877 = vpop.f32.mrb[0].mxu0
        %878 = vdwg.mxu0
        %v879 = vld [vmem:[#allocation2 + $0x200] sm:$0xff]
        %v880 = vld [vmem:[#allocation2 + $0x208] sm:$0xff]
        %v881 = vld [vmem:[#allocation2 + $0x210] sm:$0xff]
        %v882 = vld [vmem:[#allocation2 + $0x218] sm:$0xff]
        %v883 = vld [vmem:[#allocation2 + $0x220] sm:$0xff]
        %v884 = vld [vmem:[#allocation2 + $0x228] sm:$0xff]
        %v885 = vld [vmem:[#allocation2 + $0x230] sm:$0xff]
        %v886 = vld [vmem:[#allocation2 + $0x238] sm:$0xff]
        %v887 = vld [vmem:[#allocation2 + $0x240] sm:$0xff]
        %v888 = vld [vmem:[#allocation2 + $0x248] sm:$0xff]
        %v889 = vld [vmem:[#allocation2 + $0x250] sm:$0xff]
        %v890 = vld [vmem:[#allocation2 + $0x258] sm:$0xff]
        %v891 = vld [vmem:[#allocation2 + $0x260] sm:$0xff]
        %v892 = vld [vmem:[#allocation2 + $0x268] sm:$0xff]
        %v893 = vld [vmem:[#allocation2 + $0x270] sm:$0xff]
        %v894 = vld [vmem:[#allocation2 + $0x278] sm:$0xff]
        %v895 = vlaneseq
        %v896 = vshrl.u32 %v895, 7
        %v897 = vsub.s32 5, %v896
        %v898 = vrot.slane %v404, %v897
        %899 = vmatprep.subr.mxu0 0.0
        %900 = vmatpush1.msra.mxu0 %v879
        %901 = vmatprep.subr.mxu0 0.0
        %902 = vmatpush1.msra.mxu0 %v880
        %903 = vmatprep.subr.mxu0 0.0
        %904 = vmatpush1.msra.mxu0 %v881
        %905 = vmatprep.subr.mxu0 0.0
        %906 = vmatpush1.msra.mxu0 %v882
        %907 = vmatprep.subr.mxu0 0.0
        %908 = vmatpush1.msra.mxu0 %v883
        %909 = vmatprep.subr.mxu0 0.0
        %910 = vmatpush1.msra.mxu0 %v884
        %911 = vmatprep.subr.mxu0 0.0
        %912 = vmatpush1.msra.mxu0 %v885
        %913 = vmatprep.subr.mxu0 0.0
        %914 = vmatpush1.msra.mxu0 %v886
        %915 = vmatprep.subr.mxu0 0.0
        %916 = vmatpush1.msra.mxu0 %v887
        %917 = vmatprep.subr.mxu0 0.0
        %918 = vmatpush1.msra.mxu0 %v888
        %919 = vmatprep.subr.mxu0 0.0
        %920 = vmatpush1.msra.mxu0 %v889
        %921 = vmatprep.subr.mxu0 0.0
        %922 = vmatpush1.msra.mxu0 %v890
        %923 = vmatprep.subr.mxu0 0.0
        %924 = vmatpush1.msra.mxu0 %v891
        %925 = vmatprep.subr.mxu0 0.0
        %926 = vmatpush1.msra.mxu0 %v892
        %927 = vmatprep.subr.mxu0 0.0
        %928 = vmatpush1.msra.mxu0 %v893
        %929 = vmatprep.subr.mxu0 0.0
        %930 = vmatpush1.msra.mxu0 %v894
        %931 = vmatprep.subr.mxu0 0.0
        %932 = vmatpush1.msra.mxu0 0.0
        %933 = vmatprep.subr.mxu0 0.0
        %934 = vmatpush1.msra.mxu0 0.0
        %935 = vmatprep.subr.mxu0 0.0
        %936 = vmatpush1.msra.mxu0 0.0
        %937 = vmatprep.subr.mxu0 0.0
        %938 = vmatpush1.msra.mxu0 0.0
        %939 = vmatprep.subr.mxu0 0.0
        %940 = vmatpush1.msra.mxu0 0.0
        %941 = vmatprep.subr.mxu0 0.0
        %942 = vmatpush1.msra.mxu0 0.0
        %943 = vmatprep.subr.mxu0 0.0
        %944 = vmatpush1.msra.mxu0 0.0
        %945 = vmatprep.subr.mxu0 0.0
        %946 = vmatpush1.msra.mxu0 0.0
        %947 = vmatprep.subr.mxu0 0.0
        %948 = vmatpush1.msra.mxu0 0.0
        %949 = vmatprep.subr.mxu0 0.0
        %950 = vmatpush1.msra.mxu0 0.0
        %951 = vmatprep.subr.mxu0 0.0
        %952 = vmatpush1.msra.mxu0 0.0
        %953 = vmatprep.subr.mxu0 0.0
        %954 = vmatpush1.msra.mxu0 0.0
        %955 = vmatprep.subr.mxu0 0.0
        %956 = vmatpush1.msra.mxu0 0.0
        %957 = vmatprep.subr.mxu0 0.0
        %958 = vmatpush1.msra.mxu0 0.0
        %959 = vmatprep.subr.mxu0 0.0
        %960 = vmatpush1.msra.mxu0 0.0
        %961 = vmatprep.subr.mxu0 0.0
        %962 = vmatpush1.msra.mxu0 0.0
        %963 = vmatprep.mubr.f32.mxu0 0.0
        %964 = vmatmul.mubr.f32.gmra.mrb[0].mxu0 %v698
        %v965 = vpop.f32.mrb[0].mxu0
        %v966 = vadd.f32 %v898, %v965
        %v967 = vpop.f32.mrb[0].mxu0
        %968 = vdwg.mxu0
        %vm969 = vcmask 261120
        %v971 = vsel %vm969, %v786, 0
        %v974 = vsel %vm969, %v876, 0
        %976 = vmatprep.subr.mxu0 0.0
        %977 = vmatpush1.xpose.msra.mxu0 %v974
        %978 = vmatprep.subr.mxu0 0.0
        %979 = vmatpush1.xpose.msra.mxu0 0.0
        %980 = vmatprep.subr.mxu0 0.0
        %981 = vmatpush1.xpose.msra.mxu0 0.0
        %982 = vmatprep.subr.mxu0 0.0
        %983 = vmatpush1.xpose.msra.mxu0 0.0
        %984 = vmatprep.subr.mxu0 0.0
        %985 = vmatpush1.xpose.msra.mxu0 0.0
        %986 = vmatprep.subr.mxu0 0.0
        %987 = vmatpush1.xpose.msra.mxu0 0.0
        %988 = vmatprep.subr.mxu0 0.0
        %989 = vmatpush1.xpose.msra.mxu0 0.0
        %990 = vmatprep.subr.mxu0 0.0
        %991 = vmatpush1.xpose.msra.mxu0 0.0
        %992 = vmatprep.subr.mxu0 0.0
        %993 = vmatpush1.xpose.msra.mxu0 0.0
        %994 = vmatprep.subr.mxu0 0.0
        %995 = vmatpush1.xpose.msra.mxu0 0.0
        %996 = vmatprep.subr.mxu0 0.0
        %997 = vmatpush1.xpose.msra.mxu0 0.0
        %998 = vmatprep.subr.mxu0 0.0
        %999 = vmatpush1.xpose.msra.mxu0 0.0
        %1000 = vmatprep.subr.mxu0 0.0
        %1001 = vmatpush1.xpose.msra.mxu0 0.0
        %1002 = vmatprep.subr.mxu0 0.0
        %1003 = vmatpush1.xpose.msra.mxu0 0.0
        %1004 = vmatprep.subr.mxu0 0.0
        %1005 = vmatpush1.xpose.msra.mxu0 0.0
        %1006 = vmatprep.subr.mxu0 0.0
        %1007 = vmatpush1.xpose.msra.mxu0 0.0
        %1008 = vmatprep.subr.mxu0 0.0
        %1009 = vmatpush1.xpose.msra.mxu0 0.0
        %1010 = vmatprep.subr.mxu0 0.0
        %1011 = vmatpush1.xpose.msra.mxu0 0.0
        %1012 = vmatprep.subr.mxu0 0.0
        %1013 = vmatpush1.xpose.msra.mxu0 0.0
        %1014 = vmatprep.subr.mxu0 0.0
        %1015 = vmatpush1.xpose.msra.mxu0 0.0
        %1016 = vmatprep.subr.mxu0 0.0
        %1017 = vmatpush1.xpose.msra.mxu0 0.0
        %1018 = vmatprep.subr.mxu0 0.0
        %1019 = vmatpush1.xpose.msra.mxu0 0.0
        %1020 = vmatprep.subr.mxu0 0.0
        %1021 = vmatpush1.xpose.msra.mxu0 0.0
        %1022 = vmatprep.subr.mxu0 0.0
        %1023 = vmatpush1.xpose.msra.mxu0 0.0
        %1024 = vmatprep.subr.mxu0 0.0
        %1025 = vmatpush1.xpose.msra.mxu0 0.0
        %1026 = vmatprep.subr.mxu0 0.0
        %1027 = vmatpush1.xpose.msra.mxu0 0.0
        %1028 = vmatprep.subr.mxu0 0.0
        %1029 = vmatpush1.xpose.msra.mxu0 0.0
        %1030 = vmatprep.subr.mxu0 0.0
        %1031 = vmatpush1.xpose.msra.mxu0 0.0
        %1032 = vmatprep.subr.mxu0 0.0
        %1033 = vmatpush1.xpose.msra.mxu0 0.0
        %1034 = vmatprep.subr.mxu0 0.0
        %1035 = vmatpush1.xpose.msra.mxu0 0.0
        %1036 = vmatprep.subr.mxu0 0.0
        %1037 = vmatpush1.xpose.msra.mxu0 0.0
        %1038 = vmatprep.subr.mxu0 0.0
        %1039 = vmatpush1.xpose.msra.mxu0 0.0
        %1040 = vmatprep.mubr.f32.mxu0 0.0
        %1041 = vmatmul.mubr.f32.gmra.mrb[0].mxu0 %v971
        %v1042 = vpop.f32.mrb[0].mxu0
        %v1043 = vadd.f32 0.0, %v1042
        %v1044 = vpop.f32.mrb[0].mxu0
        %1045 = vdwg.mxu0
        %v1046 = vmul.f32 %v1043, 0.17677669
        %vm1047 = vcmask 64512
        %v1048 = vsel %vm1047, %v1046, -inf
        %1049 = vmax.xlane.f32.xlu0 %v1048
        %v1050 = vpop.xlane.xlu0 %1049
        %v1051 = vsub.f32 %v1046, %v1050
        %v1052 = vmul.f32 %v1051, 1.442695
        %v1053 = vpow.pop %v1052
        %v1054 = vsel %vm1047, %v1053, 0.0
        %1055 = vadd.xlane.f32.xlu0 %v1054
        %v1056 = vpop.xlane.xlu0 %1055
        %v1057 = vrcp.pop %v1056
        %v1058 = vmul.f32 %v1053, %v1057
        %v1060 = vsel %vm1047, %v1058, 0
        %1062 = vmatprep.subr.mxu0 0.0
        %1063 = vmatpush1.msra.mxu0 %v966
        %1064 = vmatprep.subr.mxu0 0.0
        %1065 = vmatpush1.msra.mxu0 0.0
        %1066 = vmatprep.subr.mxu0 0.0
        %1067 = vmatpush1.msra.mxu0 0.0
        %1068 = vmatprep.subr.mxu0 0.0
        %1069 = vmatpush1.msra.mxu0 0.0
        %1070 = vmatprep.subr.mxu0 0.0
        %1071 = vmatpush1.msra.mxu0 0.0
        %1072 = vmatprep.subr.mxu0 0.0
        %1073 = vmatpush1.msra.mxu0 0.0
        %1074 = vmatprep.subr.mxu0 0.0
        %1075 = vmatpush1.msra.mxu0 0.0
        %1076 = vmatprep.subr.mxu0 0.0
        %1077 = vmatpush1.msra.mxu0 0.0
        %1078 = vmatprep.subr.mxu0 0.0
        %1079 = vmatpush1.msra.mxu0 0.0
        %1080 = vmatprep.subr.mxu0 0.0
        %1081 = vmatpush1.msra.mxu0 0.0
        %1082 = vmatprep.subr.mxu0 0.0
        %1083 = vmatpush1.msra.mxu0 0.0
        %1084 = vmatprep.subr.mxu0 0.0
        %1085 = vmatpush1.msra.mxu0 0.0
        %1086 = vmatprep.subr.mxu0 0.0
        %1087 = vmatpush1.msra.mxu0 0.0
        %1088 = vmatprep.subr.mxu0 0.0
        %1089 = vmatpush1.msra.mxu0 0.0
        %1090 = vmatprep.subr.mxu0 0.0
        %1091 = vmatpush1.msra.mxu0 0.0
        %1092 = vmatprep.subr.mxu0 0.0
        %1093 = vmatpush1.msra.mxu0 0.0
        %1094 = vmatprep.subr.mxu0 0.0
        %1095 = vmatpush1.msra.mxu0 0.0
        %1096 = vmatprep.subr.mxu0 0.0
        %1097 = vmatpush1.msra.mxu0 0.0
        %1098 = vmatprep.subr.mxu0 0.0
        %1099 = vmatpush1.msra.mxu0 0.0
        %1100 = vmatprep.subr.mxu0 0.0
        %1101 = vmatpush1.msra.mxu0 0.0
        %1102 = vmatprep.subr.mxu0 0.0
        %1103 = vmatpush1.msra.mxu0 0.0
        %1104 = vmatprep.subr.mxu0 0.0
        %1105 = vmatpush1.msra.mxu0 0.0
        %1106 = vmatprep.subr.mxu0 0.0
        %1107 = vmatpush1.msra.mxu0 0.0
        %1108 = vmatprep.subr.mxu0 0.0
        %1109 = vmatpush1.msra.mxu0 0.0
        %1110 = vmatprep.subr.mxu0 0.0
        %1111 = vmatpush1.msra.mxu0 0.0
        %1112 = vmatprep.subr.mxu0 0.0
        %1113 = vmatpush1.msra.mxu0 0.0
        %1114 = vmatprep.subr.mxu0 0.0
        %1115 = vmatpush1.msra.mxu0 0.0
        %1116 = vmatprep.subr.mxu0 0.0
        %1117 = vmatpush1.msra.mxu0 0.0
        %1118 = vmatprep.subr.mxu0 0.0
        %1119 = vmatpush1.msra.mxu0 0.0
        %1120 = vmatprep.subr.mxu0 0.0
        %1121 = vmatpush1.msra.mxu0 0.0
        %1122 = vmatprep.subr.mxu0 0.0
        %1123 = vmatpush1.msra.mxu0 0.0
        %1124 = vmatprep.subr.mxu0 0.0
        %1125 = vmatpush1.msra.mxu0 0.0
        %1126 = vmatprep.mubr.f32.mxu0 0.0
        %1127 = vmatmul.mubr.f32.gmra.mrb[0].mxu0 %v1060
        %v1128 = vpop.f32.mrb[0].mxu0
        %v1129 = vadd.f32 0.0, %v1128
        %v1130 = vpop.f32.mrb[0].mxu0
        %1131 = vdwg.mxu0
        %v1132 = vld [vmem:[#allocation2 + $0x280] sm:$0xff]
        %v1133 = vld [vmem:[#allocation2 + $0x288] sm:$0xff]
        %v1134 = vld [vmem:[#allocation2 + $0x290] sm:$0xff]
        %v1135 = vld [vmem:[#allocation2 + $0x298] sm:$0xff]
        %1136 = vrot.lane.b32.xlu0 %v786, 96
        %v1137 = vpop.permute.xlu0 %1136
        %1138 = vrot.lane.b32.xlu0 %v876, 96
        %v1139 = vpop.permute.xlu0 %1138
        %v1140 = vsel %vm969, %v1137, 0
        %v1142 = vsel %vm969, %v1139, 0
        %1144 = vmatprep.subr.mxu0 0.0
        %1145 = vmatpush1.xpose.msra.mxu0 %v1142
        %1146 = vmatprep.subr.mxu0 0.0
        %1147 = vmatpush1.xpose.msra.mxu0 0.0
        %1148 = vmatprep.subr.mxu0 0.0
        %1149 = vmatpush1.xpose.msra.mxu0 0.0
        %1150 = vmatprep.subr.mxu0 0.0
        %1151 = vmatpush1.xpose.msra.mxu0 0.0
        %1152 = vmatprep.subr.mxu0 0.0
        %1153 = vmatpush1.xpose.msra.mxu0 0.0
        %1154 = vmatprep.subr.mxu0 0.0
        %1155 = vmatpush1.xpose.msra.mxu0 0.0
        %1156 = vmatprep.subr.mxu0 0.0
        %1157 = vmatpush1.xpose.msra.mxu0 0.0
        %1158 = vmatprep.subr.mxu0 0.0
        %1159 = vmatpush1.xpose.msra.mxu0 0.0
        %1160 = vmatprep.subr.mxu0 0.0
        %1161 = vmatpush1.xpose.msra.mxu0 0.0
        %1162 = vmatprep.subr.mxu0 0.0
        %1163 = vmatpush1.xpose.msra.mxu0 0.0
        %1164 = vmatprep.subr.mxu0 0.0
        %1165 = vmatpush1.xpose.msra.mxu0 0.0
        %1166 = vmatprep.subr.mxu0 0.0
        %1167 = vmatpush1.xpose.msra.mxu0 0.0
        %1168 = vmatprep.subr.mxu0 0.0
        %1169 = vmatpush1.xpose.msra.mxu0 0.0
        %1170 = vmatprep.subr.mxu0 0.0
        %1171 = vmatpush1.xpose.msra.mxu0 0.0
        %1172 = vmatprep.subr.mxu0 0.0
        %1173 = vmatpush1.xpose.msra.mxu0 0.0
        %1174 = vmatprep.subr.mxu0 0.0
        %1175 = vmatpush1.xpose.msra.mxu0 0.0
        %1176 = vmatprep.subr.mxu0 0.0
        %1177 = vmatpush1.xpose.msra.mxu0 0.0
        %1178 = vmatprep.subr.mxu0 0.0
        %1179 = vmatpush1.xpose.msra.mxu0 0.0
        %1180 = vmatprep.subr.mxu0 0.0
        %1181 = vmatpush1.xpose.msra.mxu0 0.0
        %1182 = vmatprep.subr.mxu0 0.0
        %1183 = vmatpush1.xpose.msra.mxu0 0.0
        %1184 = vmatprep.subr.mxu0 0.0
        %1185 = vmatpush1.xpose.msra.mxu0 0.0
        %1186 = vmatprep.subr.mxu0 0.0
        %1187 = vmatpush1.xpose.msra.mxu0 0.0
        %1188 = vmatprep.subr.mxu0 0.0
        %1189 = vmatpush1.xpose.msra.mxu0 0.0
        %1190 = vmatprep.subr.mxu0 0.0
        %1191 = vmatpush1.xpose.msra.mxu0 0.0
        %1192 = vmatprep.subr.mxu0 0.0
        %1193 = vmatpush1.xpose.msra.mxu0 0.0
        %1194 = vmatprep.subr.mxu0 0.0
        %1195 = vmatpush1.xpose.msra.mxu0 0.0
        %1196 = vmatprep.subr.mxu0 0.0
        %1197 = vmatpush1.xpose.msra.mxu0 0.0
        %1198 = vmatprep.subr.mxu0 0.0
        %1199 = vmatpush1.xpose.msra.mxu0 0.0
        %1200 = vmatprep.subr.mxu0 0.0
        %1201 = vmatpush1.xpose.msra.mxu0 0.0
        %1202 = vmatprep.subr.mxu0 0.0
        %1203 = vmatpush1.xpose.msra.mxu0 0.0
        %1204 = vmatprep.subr.mxu0 0.0
        %1205 = vmatpush1.xpose.msra.mxu0 0.0
        %1206 = vmatprep.subr.mxu0 0.0
        %1207 = vmatpush1.xpose.msra.mxu0 0.0
        %1208 = vmatprep.mubr.f32.mxu0 0.0
        %1209 = vmatmul.mubr.f32.gmra.mrb[0].mxu0 %v1140
        %v1210 = vpop.f32.mrb[0].mxu0
        %v1211 = vadd.f32 0.0, %v1210
        %v1212 = vpop.f32.mrb[0].mxu0
        %1213 = vdwg.mxu0
        %v1214 = vmul.f32 %v1211, 0.17677669
        %v1215 = vsel %vm1047, %v1214, -inf
        %1216 = vmax.xlane.f32.xlu0 %v1215
        %v1217 = vpop.xlane.xlu0 %1216
        %v1218 = vsub.f32 %v1214, %v1217
        %v1219 = vmul.f32 %v1218, 1.442695
        %v1220 = vpow.pop %v1219
        %v1221 = vsel %vm1047, %v1220, 0.0
        %1222 = vadd.xlane.f32.xlu0 %v1221
        %v1223 = vpop.xlane.xlu0 %1222
        %v1224 = vrcp.pop %v1223
        %v1225 = vmul.f32 %v1220, %v1224
        %1227 = vrot.lane.b32.xlu0 %v966, 96
        %v1228 = vpop.permute.xlu0 %1227
        %v1231 = vsel %vm1047, %v1225, 0
        %1233 = vmatprep.subr.mxu0 0.0
        %1234 = vmatpush1.msra.mxu0 %v1228
        %1235 = vmatprep.subr.mxu0 0.0
        %1236 = vmatpush1.msra.mxu0 0.0
        %1237 = vmatprep.subr.mxu0 0.0
        %1238 = vmatpush1.msra.mxu0 0.0
        %1239 = vmatprep.subr.mxu0 0.0
        %1240 = vmatpush1.msra.mxu0 0.0
        %1241 = vmatprep.subr.mxu0 0.0
        %1242 = vmatpush1.msra.mxu0 0.0
        %1243 = vmatprep.subr.mxu0 0.0
        %1244 = vmatpush1.msra.mxu0 0.0
        %1245 = vmatprep.subr.mxu0 0.0
        %1246 = vmatpush1.msra.mxu0 0.0
        %1247 = vmatprep.subr.mxu0 0.0
        %1248 = vmatpush1.msra.mxu0 0.0
        %1249 = vmatprep.subr.mxu0 0.0
        %1250 = vmatpush1.msra.mxu0 0.0
        %1251 = vmatprep.subr.mxu0 0.0
        %1252 = vmatpush1.msra.mxu0 0.0
        %1253 = vmatprep.subr.mxu0 0.0
        %1254 = vmatpush1.msra.mxu0 0.0
        %1255 = vmatprep.subr.mxu0 0.0
        %1256 = vmatpush1.msra.mxu0 0.0
        %1257 = vmatprep.subr.mxu0 0.0
        %1258 = vmatpush1.msra.mxu0 0.0
        %1259 = vmatprep.subr.mxu0 0.0
        %1260 = vmatpush1.msra.mxu0 0.0
        %1261 = vmatprep.subr.mxu0 0.0
        %1262 = vmatpush1.msra.mxu0 0.0
        %1263 = vmatprep.subr.mxu0 0.0
        %1264 = vmatpush1.msra.mxu0 0.0
        %1265 = vmatprep.subr.mxu0 0.0
        %1266 = vmatpush1.msra.mxu0 0.0
        %1267 = vmatprep.subr.mxu0 0.0
        %1268 = vmatpush1.msra.mxu0 0.0
        %1269 = vmatprep.subr.mxu0 0.0
        %1270 = vmatpush1.msra.mxu0 0.0
        %1271 = vmatprep.subr.mxu0 0.0
        %1272 = vmatpush1.msra.mxu0 0.0
        %1273 = vmatprep.subr.mxu0 0.0
        %1274 = vmatpush1.msra.mxu0 0.0
        %1275 = vmatprep.subr.mxu0 0.0
        %1276 = vmatpush1.msra.mxu0 0.0
        %1277 = vmatprep.subr.mxu0 0.0
        %1278 = vmatpush1.msra.mxu0 0.0
        %1279 = vmatprep.subr.mxu0 0.0
        %1280 = vmatpush1.msra.mxu0 0.0
        %1281 = vmatprep.subr.mxu0 0.0
        %1282 = vmatpush1.msra.mxu0 0.0
        %1283 = vmatprep.subr.mxu0 0.0
        %1284 = vmatpush1.msra.mxu0 0.0
        %1285 = vmatprep.subr.mxu0 0.0
        %1286 = vmatpush1.msra.mxu0 0.0
        %1287 = vmatprep.subr.mxu0 0.0
        %1288 = vmatpush1.msra.mxu0 0.0
        %1289 = vmatprep.subr.mxu0 0.0
        %1290 = vmatpush1.msra.mxu0 0.0
        %1291 = vmatprep.subr.mxu0 0.0
        %1292 = vmatpush1.msra.mxu0 0.0
        %1293 = vmatprep.subr.mxu0 0.0
        %1294 = vmatpush1.msra.mxu0 0.0
        %1295 = vmatprep.subr.mxu0 0.0
        %1296 = vmatpush1.msra.mxu0 0.0
        %1297 = vmatprep.mubr.f32.mxu0 0.0
        %1298 = vmatmul.mubr.f32.gmra.mrb[0].mxu0 %v1231
        %v1299 = vpop.f32.mrb[0].mxu0
        %v1300 = vadd.f32 0.0, %v1299
        %v1301 = vpop.f32.mrb[0].mxu0
        %1302 = vdwg.mxu0
        %v1303 = vld [vmem:[#allocation2 + $0x2a0] sm:$0xff]
        %v1304 = vld [vmem:[#allocation2 + $0x2a8] sm:$0xff]
        %v1305 = vld [vmem:[#allocation2 + $0x2b0] sm:$0xff]
        %v1306 = vld [vmem:[#allocation2 + $0x2b8] sm:$0xff]
        %v1308 = vsel %vm969, %v1300, 0
        %1310 = vmatprep.subr.mxu0 0.0
        %1311 = vmatpush1.msra.mxu0 %v1303
        %1312 = vmatprep.subr.mxu0 0.0
        %1313 = vmatpush1.msra.mxu0 %v1304
        %1314 = vmatprep.subr.mxu0 0.0
        %1315 = vmatpush1.msra.mxu0 %v1305
        %1316 = vmatprep.subr.mxu0 0.0
        %1317 = vmatpush1.msra.mxu0 %v1306
        %1318 = vmatprep.subr.mxu0 0.0
        %1319 = vmatpush1.msra.mxu0 0.0
        %1320 = vmatprep.subr.mxu0 0.0
        %1321 = vmatpush1.msra.mxu0 0.0
        %1322 = vmatprep.subr.mxu0 0.0
        %1323 = vmatpush1.msra.mxu0 0.0
        %1324 = vmatprep.subr.mxu0 0.0
        %1325 = vmatpush1.msra.mxu0 0.0
        %1326 = vmatprep.subr.mxu0 0.0
        %1327 = vmatpush1.msra.mxu0 0.0
        %1328 = vmatprep.subr.mxu0 0.0
        %1329 = vmatpush1.msra.mxu0 0.0
        %1330 = vmatprep.subr.mxu0 0.0
        %1331 = vmatpush1.msra.mxu0 0.0
        %1332 = vmatprep.subr.mxu0 0.0
        %1333 = vmatpush1.msra.mxu0 0.0
        %1334 = vmatprep.subr.mxu0 0.0
        %1335 = vmatpush1.msra.mxu0 0.0
        %1336 = vmatprep.subr.mxu0 0.0
        %1337 = vmatpush1.msra.mxu0 0.0
        %1338 = vmatprep.subr.mxu0 0.0
        %1339 = vmatpush1.msra.mxu0 0.0
        %1340 = vmatprep.subr.mxu0 0.0
        %1341 = vmatpush1.msra.mxu0 0.0
        %1342 = vmatprep.subr.mxu0 0.0
        %1343 = vmatpush1.msra.mxu0 0.0
        %1344 = vmatprep.subr.mxu0 0.0
        %1345 = vmatpush1.msra.mxu0 0.0
        %1346 = vmatprep.subr.mxu0 0.0
        %1347 = vmatpush1.msra.mxu0 0.0
        %1348 = vmatprep.subr.mxu0 0.0
        %1349 = vmatpush1.msra.mxu0 0.0
        %1350 = vmatprep.subr.mxu0 0.0
        %1351 = vmatpush1.msra.mxu0 0.0
        %1352 = vmatprep.subr.mxu0 0.0
        %1353 = vmatpush1.msra.mxu0 0.0
        %1354 = vmatprep.subr.mxu0 0.0
        %1355 = vmatpush1.msra.mxu0 0.0
        %1356 = vmatprep.subr.mxu0 0.0
        %1357 = vmatpush1.msra.mxu0 0.0
        %1358 = vmatprep.subr.mxu0 0.0
        %1359 = vmatpush1.msra.mxu0 0.0
        %1360 = vmatprep.subr.mxu0 0.0
        %1361 = vmatpush1.msra.mxu0 0.0
        %1362 = vmatprep.subr.mxu0 0.0
        %1363 = vmatpush1.msra.mxu0 0.0
        %1364 = vmatprep.subr.mxu0 0.0
        %1365 = vmatpush1.msra.mxu0 0.0
        %1366 = vmatprep.subr.mxu0 0.0
        %1367 = vmatpush1.msra.mxu0 0.0
        %1368 = vmatprep.subr.mxu0 0.0
        %1369 = vmatpush1.msra.mxu0 0.0
        %1370 = vmatprep.subr.mxu0 0.0
        %1371 = vmatpush1.msra.mxu0 0.0
        %1372 = vmatprep.subr.mxu0 0.0
        %1373 = vmatpush1.msra.mxu0 0.0
        %1374 = vmatprep.mubr.f32.mxu0 0.0
        %1375 = vmatmul.mubr.f32.gmra.mrb[0].mxu0 %v1308
        %v1376 = vpop.f32.mrb[0].mxu0
        %v1377 = vadd.f32 0.0, %v1376
        %v1378 = vpop.f32.mrb[0].mxu0
        %1379 = vdwg.mxu0
        %v1381 = vsel %vm969, %v1129, 0
        %1383 = vmatprep.subr.mxu0 0.0
        %1384 = vmatpush1.msra.mxu0 %v1132
        %1385 = vmatprep.subr.mxu0 0.0
        %1386 = vmatpush1.msra.mxu0 %v1133
        %1387 = vmatprep.subr.mxu0 0.0
        %1388 = vmatpush1.msra.mxu0 %v1134
        %1389 = vmatprep.subr.mxu0 0.0
        %1390 = vmatpush1.msra.mxu0 %v1135
        %1391 = vmatprep.subr.mxu0 0.0
        %1392 = vmatpush1.msra.mxu0 0.0
        %1393 = vmatprep.subr.mxu0 0.0
        %1394 = vmatpush1.msra.mxu0 0.0
        %1395 = vmatprep.subr.mxu0 0.0
        %1396 = vmatpush1.msra.mxu0 0.0
        %1397 = vmatprep.subr.mxu0 0.0
        %1398 = vmatpush1.msra.mxu0 0.0
        %1399 = vmatprep.subr.mxu0 0.0
        %1400 = vmatpush1.msra.mxu0 0.0
        %1401 = vmatprep.subr.mxu0 0.0
        %1402 = vmatpush1.msra.mxu0 0.0
        %1403 = vmatprep.subr.mxu0 0.0
        %1404 = vmatpush1.msra.mxu0 0.0
        %1405 = vmatprep.subr.mxu0 0.0
        %1406 = vmatpush1.msra.mxu0 0.0
        %1407 = vmatprep.subr.mxu0 0.0
        %1408 = vmatpush1.msra.mxu0 0.0
        %1409 = vmatprep.subr.mxu0 0.0
        %1410 = vmatpush1.msra.mxu0 0.0
        %1411 = vmatprep.subr.mxu0 0.0
        %1412 = vmatpush1.msra.mxu0 0.0
        %1413 = vmatprep.subr.mxu0 0.0
        %1414 = vmatpush1.msra.mxu0 0.0
        %1415 = vmatprep.subr.mxu0 0.0
        %1416 = vmatpush1.msra.mxu0 0.0
        %1417 = vmatprep.subr.mxu0 0.0
        %1418 = vmatpush1.msra.mxu0 0.0
        %1419 = vmatprep.subr.mxu0 0.0
        %1420 = vmatpush1.msra.mxu0 0.0
        %1421 = vmatprep.subr.mxu0 0.0
        %1422 = vmatpush1.msra.mxu0 0.0
        %1423 = vmatprep.subr.mxu0 0.0
        %1424 = vmatpush1.msra.mxu0 0.0
        %1425 = vmatprep.subr.mxu0 0.0
        %1426 = vmatpush1.msra.mxu0 0.0
        %1427 = vmatprep.subr.mxu0 0.0
        %1428 = vmatpush1.msra.mxu0 0.0
        %1429 = vmatprep.subr.mxu0 0.0
        %1430 = vmatpush1.msra.mxu0 0.0
        %1431 = vmatprep.subr.mxu0 0.0
        %1432 = vmatpush1.msra.mxu0 0.0
        %1433 = vmatprep.subr.mxu0 0.0
        %1434 = vmatpush1.msra.mxu0 0.0
        %1435 = vmatprep.subr.mxu0 0.0
        %1436 = vmatpush1.msra.mxu0 0.0
        %1437 = vmatprep.subr.mxu0 0.0
        %1438 = vmatpush1.msra.mxu0 0.0
        %1439 = vmatprep.subr.mxu0 0.0
        %1440 = vmatpush1.msra.mxu0 0.0
        %1441 = vmatprep.subr.mxu0 0.0
        %1442 = vmatpush1.msra.mxu0 0.0
        %1443 = vmatprep.subr.mxu0 0.0
        %1444 = vmatpush1.msra.mxu0 0.0
        %1445 = vmatprep.subr.mxu0 0.0
        %1446 = vmatpush1.msra.mxu0 0.0
        %1447 = vmatprep.mubr.f32.mxu0 0.0
        %1448 = vmatmul.mubr.f32.gmra.mrb[0].mxu0 %v1381
        %v1449 = vpop.f32.mrb[0].mxu0
        %v1450 = vadd.f32 %v1377, %v1449
        %v1451 = vpop.f32.mrb[0].mxu0
        %1452 = vdwg.mxu0
        %1453 = vrot.lane.b32.xlu0 %v786, 64
        %v1454 = vpop.permute.xlu0 %1453
        %1455 = vrot.lane.b32.xlu0 %v876, 64
        %v1456 = vpop.permute.xlu0 %1455
        %v1457 = vsel %vm969, %v1454, 0
        %v1459 = vsel %vm969, %v1456, 0
        %1461 = vmatprep.subr.mxu0 0.0
        %1462 = vmatpush1.xpose.msra.mxu0 %v1459
        %1463 = vmatprep.subr.mxu0 0.0
        %1464 = vmatpush1.xpose.msra.mxu0 0.0
        %1465 = vmatprep.subr.mxu0 0.0
        %1466 = vmatpush1.xpose.msra.mxu0 0.0
        %1467 = vmatprep.subr.mxu0 0.0
        %1468 = vmatpush1.xpose.msra.mxu0 0.0
        %1469 = vmatprep.subr.mxu0 0.0
        %1470 = vmatpush1.xpose.msra.mxu0 0.0
        %1471 = vmatprep.subr.mxu0 0.0
        %1472 = vmatpush1.xpose.msra.mxu0 0.0
        %1473 = vmatprep.subr.mxu0 0.0
        %1474 = vmatpush1.xpose.msra.mxu0 0.0
        %1475 = vmatprep.subr.mxu0 0.0
        %1476 = vmatpush1.xpose.msra.mxu0 0.0
        %1477 = vmatprep.subr.mxu0 0.0
        %1478 = vmatpush1.xpose.msra.mxu0 0.0
        %1479 = vmatprep.subr.mxu0 0.0
        %1480 = vmatpush1.xpose.msra.mxu0 0.0
        %1481 = vmatprep.subr.mxu0 0.0
        %1482 = vmatpush1.xpose.msra.mxu0 0.0
        %1483 = vmatprep.subr.mxu0 0.0
        %1484 = vmatpush1.xpose.msra.mxu0 0.0
        %1485 = vmatprep.subr.mxu0 0.0
        %1486 = vmatpush1.xpose.msra.mxu0 0.0
        %1487 = vmatprep.subr.mxu0 0.0
        %1488 = vmatpush1.xpose.msra.mxu0 0.0
        %1489 = vmatprep.subr.mxu0 0.0
        %1490 = vmatpush1.xpose.msra.mxu0 0.0
        %1491 = vmatprep.subr.mxu0 0.0
        %1492 = vmatpush1.xpose.msra.mxu0 0.0
        %1493 = vmatprep.subr.mxu0 0.0
        %1494 = vmatpush1.xpose.msra.mxu0 0.0
        %1495 = vmatprep.subr.mxu0 0.0
        %1496 = vmatpush1.xpose.msra.mxu0 0.0
        %1497 = vmatprep.subr.mxu0 0.0
        %1498 = vmatpush1.xpose.msra.mxu0 0.0
        %1499 = vmatprep.subr.mxu0 0.0
        %1500 = vmatpush1.xpose.msra.mxu0 0.0
        %1501 = vmatprep.subr.mxu0 0.0
        %1502 = vmatpush1.xpose.msra.mxu0 0.0
        %1503 = vmatprep.subr.mxu0 0.0
        %1504 = vmatpush1.xpose.msra.mxu0 0.0
        %1505 = vmatprep.subr.mxu0 0.0
        %1506 = vmatpush1.xpose.msra.mxu0 0.0
        %1507 = vmatprep.subr.mxu0 0.0
        %1508 = vmatpush1.xpose.msra.mxu0 0.0
        %1509 = vmatprep.subr.mxu0 0.0
        %1510 = vmatpush1.xpose.msra.mxu0 0.0
        %1511 = vmatprep.subr.mxu0 0.0
        %1512 = vmatpush1.xpose.msra.mxu0 0.0
        %1513 = vmatprep.subr.mxu0 0.0
        %1514 = vmatpush1.xpose.msra.mxu0 0.0
        %1515 = vmatprep.subr.mxu0 0.0
        %1516 = vmatpush1.xpose.msra.mxu0 0.0
        %1517 = vmatprep.subr.mxu0 0.0
        %1518 = vmatpush1.xpose.msra.mxu0 0.0
        %1519 = vmatprep.subr.mxu0 0.0
        %1520 = vmatpush1.xpose.msra.mxu0 0.0
        %1521 = vmatprep.subr.mxu0 0.0
        %1522 = vmatpush1.xpose.msra.mxu0 0.0
        %1523 = vmatprep.subr.mxu0 0.0
        %1524 = vmatpush1.xpose.msra.mxu0 0.0
        %1525 = vmatprep.mubr.f32.mxu0 0.0
        %1526 = vmatmul.mubr.f32.gmra.mrb[0].mxu0 %v1457
        %v1527 = vpop.f32.mrb[0].mxu0
        %v1528 = vadd.f32 0.0, %v1527
        %v1529 = vpop.f32.mrb[0].mxu0
        %1530 = vdwg.mxu0
        %v1531 = vmul.f32 %v1528, 0.17677669
        %v1532 = vsel %vm1047, %v1531, -inf
        %1533 = vmax.xlane.f32.xlu0 %v1532
        %v1534 = vpop.xlane.xlu0 %1533
        %v1535 = vsub.f32 %v1531, %v1534
        %v1536 = vmul.f32 %v1535, 1.442695
        %v1537 = vpow.pop %v1536
        %v1538 = vsel %vm1047, %v1537, 0.0
        %1539 = vadd.xlane.f32.xlu0 %v1538
        %v1540 = vpop.xlane.xlu0 %1539
        %v1541 = vrcp.pop %v1540
        %v1542 = vmul.f32 %v1537, %v1541
        %1543 = vrot.lane.b32.xlu0 %v966, 64
        %v1544 = vpop.permute.xlu0 %1543
        %v1547 = vsel %vm1047, %v1542, 0
        %1549 = vmatprep.subr.mxu0 0.0
        %1550 = vmatpush1.msra.mxu0 %v1544
        %1551 = vmatprep.subr.mxu0 0.0
        %1552 = vmatpush1.msra.mxu0 0.0
        %1553 = vmatprep.subr.mxu0 0.0
        %1554 = vmatpush1.msra.mxu0 0.0
        %1555 = vmatprep.subr.mxu0 0.0
        %1556 = vmatpush1.msra.mxu0 0.0
        %1557 = vmatprep.subr.mxu0 0.0
        %1558 = vmatpush1.msra.mxu0 0.0
        %1559 = vmatprep.subr.mxu0 0.0
        %1560 = vmatpush1.msra.mxu0 0.0
        %1561 = vmatprep.subr.mxu0 0.0
        %1562 = vmatpush1.msra.mxu0 0.0
        %1563 = vmatprep.subr.mxu0 0.0
        %1564 = vmatpush1.msra.mxu0 0.0
        %1565 = vmatprep.subr.mxu0 0.0
        %1566 = vmatpush1.msra.mxu0 0.0
        %1567 = vmatprep.subr.mxu0 0.0
        %1568 = vmatpush1.msra.mxu0 0.0
        %1569 = vmatprep.subr.mxu0 0.0
        %1570 = vmatpush1.msra.mxu0 0.0
        %1571 = vmatprep.subr.mxu0 0.0
        %1572 = vmatpush1.msra.mxu0 0.0
        %1573 = vmatprep.subr.mxu0 0.0
        %1574 = vmatpush1.msra.mxu0 0.0
        %1575 = vmatprep.subr.mxu0 0.0
        %1576 = vmatpush1.msra.mxu0 0.0
        %1577 = vmatprep.subr.mxu0 0.0
        %1578 = vmatpush1.msra.mxu0 0.0
        %1579 = vmatprep.subr.mxu0 0.0
        %1580 = vmatpush1.msra.mxu0 0.0
        %1581 = vmatprep.subr.mxu0 0.0
        %1582 = vmatpush1.msra.mxu0 0.0
        %1583 = vmatprep.subr.mxu0 0.0
        %1584 = vmatpush1.msra.mxu0 0.0
        %1585 = vmatprep.subr.mxu0 0.0
        %1586 = vmatpush1.msra.mxu0 0.0
        %1587 = vmatprep.subr.mxu0 0.0
        %1588 = vmatpush1.msra.mxu0 0.0
        %1589 = vmatprep.subr.mxu0 0.0
        %1590 = vmatpush1.msra.mxu0 0.0
        %1591 = vmatprep.subr.mxu0 0.0
        %1592 = vmatpush1.msra.mxu0 0.0
        %1593 = vmatprep.subr.mxu0 0.0
        %1594 = vmatpush1.msra.mxu0 0.0
        %1595 = vmatprep.subr.mxu0 0.0
        %1596 = vmatpush1.msra.mxu0 0.0
        %1597 = vmatprep.subr.mxu0 0.0
        %1598 = vmatpush1.msra.mxu0 0.0
        %1599 = vmatprep.subr.mxu0 0.0
        %1600 = vmatpush1.msra.mxu0 0.0
        %1601 = vmatprep.subr.mxu0 0.0
        %1602 = vmatpush1.msra.mxu0 0.0
        %1603 = vmatprep.subr.mxu0 0.0
        %1604 = vmatpush1.msra.mxu0 0.0
        %1605 = vmatprep.subr.mxu0 0.0
        %1606 = vmatpush1.msra.mxu0 0.0
        %1607 = vmatprep.subr.mxu0 0.0
        %1608 = vmatpush1.msra.mxu0 0.0
        %1609 = vmatprep.subr.mxu0 0.0
        %1610 = vmatpush1.msra.mxu0 0.0
        %1611 = vmatprep.subr.mxu0 0.0
        %1612 = vmatpush1.msra.mxu0 0.0
        %1613 = vmatprep.mubr.f32.mxu0 0.0
        %1614 = vmatmul.mubr.f32.gmra.mrb[0].mxu0 %v1547
        %v1615 = vpop.f32.mrb[0].mxu0
        %v1616 = vadd.f32 0.0, %v1615
        %v1617 = vpop.f32.mrb[0].mxu0
        %1618 = vdwg.mxu0
        %v1619 = vld [vmem:[#allocation2 + $0x2c0] sm:$0xff]
        %v1620 = vld [vmem:[#allocation2 + $0x2c8] sm:$0xff]
        %v1621 = vld [vmem:[#allocation2 + $0x2d0] sm:$0xff]
        %v1622 = vld [vmem:[#allocation2 + $0x2d8] sm:$0xff]
        %v1624 = vsel %vm969, %v1616, 0
        %1626 = vmatprep.subr.mxu0 0.0
        %1627 = vmatpush1.msra.mxu0 %v1619
        %1628 = vmatprep.subr.mxu0 0.0
        %1629 = vmatpush1.msra.mxu0 %v1620
        %1630 = vmatprep.subr.mxu0 0.0
        %1631 = vmatpush1.msra.mxu0 %v1621
        %1632 = vmatprep.subr.mxu0 0.0
        %1633 = vmatpush1.msra.mxu0 %v1622
        %1634 = vmatprep.subr.mxu0 0.0
        %1635 = vmatpush1.msra.mxu0 0.0
        %1636 = vmatprep.subr.mxu0 0.0
        %1637 = vmatpush1.msra.mxu0 0.0
        %1638 = vmatprep.subr.mxu0 0.0
        %1639 = vmatpush1.msra.mxu0 0.0
        %1640 = vmatprep.subr.mxu0 0.0
        %1641 = vmatpush1.msra.mxu0 0.0
        %1642 = vmatprep.subr.mxu0 0.0
        %1643 = vmatpush1.msra.mxu0 0.0
        %1644 = vmatprep.subr.mxu0 0.0
        %1645 = vmatpush1.msra.mxu0 0.0
        %1646 = vmatprep.subr.mxu0 0.0
        %1647 = vmatpush1.msra.mxu0 0.0
        %1648 = vmatprep.subr.mxu0 0.0
        %1649 = vmatpush1.msra.mxu0 0.0
        %1650 = vmatprep.subr.mxu0 0.0
        %1651 = vmatpush1.msra.mxu0 0.0
        %1652 = vmatprep.subr.mxu0 0.0
        %1653 = vmatpush1.msra.mxu0 0.0
        %1654 = vmatprep.subr.mxu0 0.0
        %1655 = vmatpush1.msra.mxu0 0.0
        %1656 = vmatprep.subr.mxu0 0.0
        %1657 = vmatpush1.msra.mxu0 0.0
        %1658 = vmatprep.subr.mxu0 0.0
        %1659 = vmatpush1.msra.mxu0 0.0
        %1660 = vmatprep.subr.mxu0 0.0
        %1661 = vmatpush1.msra.mxu0 0.0
        %1662 = vmatprep.subr.mxu0 0.0
        %1663 = vmatpush1.msra.mxu0 0.0
        %1664 = vmatprep.subr.mxu0 0.0
        %1665 = vmatpush1.msra.mxu0 0.0
        %1666 = vmatprep.subr.mxu0 0.0
        %1667 = vmatpush1.msra.mxu0 0.0
        %1668 = vmatprep.subr.mxu0 0.0
        %1669 = vmatpush1.msra.mxu0 0.0
        %1670 = vmatprep.subr.mxu0 0.0
        %1671 = vmatpush1.msra.mxu0 0.0
        %1672 = vmatprep.subr.mxu0 0.0
        %1673 = vmatpush1.msra.mxu0 0.0
        %1674 = vmatprep.subr.mxu0 0.0
        %1675 = vmatpush1.msra.mxu0 0.0
        %1676 = vmatprep.subr.mxu0 0.0
        %1677 = vmatpush1.msra.mxu0 0.0
        %1678 = vmatprep.subr.mxu0 0.0
        %1679 = vmatpush1.msra.mxu0 0.0
        %1680 = vmatprep.subr.mxu0 0.0
        %1681 = vmatpush1.msra.mxu0 0.0
        %1682 = vmatprep.subr.mxu0 0.0
        %1683 = vmatpush1.msra.mxu0 0.0
        %1684 = vmatprep.subr.mxu0 0.0
        %1685 = vmatpush1.msra.mxu0 0.0
        %1686 = vmatprep.subr.mxu0 0.0
        %1687 = vmatpush1.msra.mxu0 0.0
        %1688 = vmatprep.subr.mxu0 0.0
        %1689 = vmatpush1.msra.mxu0 0.0
        %1690 = vmatprep.mubr.f32.mxu0 0.0
        %1691 = vmatmul.mubr.f32.gmra.mrb[0].mxu0 %v1624
        %v1692 = vpop.f32.mrb[0].mxu0
        %v1693 = vadd.f32 0.0, %v1692
        %v1694 = vpop.f32.mrb[0].mxu0
        %1695 = vdwg.mxu0
        %v1696 = vadd.f32 %v1450, %v1693
        %1697 = vrot.lane.b32.xlu0 %v786, 32
        %v1698 = vpop.permute.xlu0 %1697
        %1699 = vrot.lane.b32.xlu0 %v876, 32
        %v1700 = vpop.permute.xlu0 %1699
        %v1701 = vsel %vm969, %v1698, 0
        %v1703 = vsel %vm969, %v1700, 0
        %1705 = vmatprep.subr.mxu0 0.0
        %1706 = vmatpush1.xpose.msra.mxu0 %v1703
        %1707 = vmatprep.subr.mxu0 0.0
        %1708 = vmatpush1.xpose.msra.mxu0 0.0
        %1709 = vmatprep.subr.mxu0 0.0
        %1710 = vmatpush1.xpose.msra.mxu0 0.0
        %1711 = vmatprep.subr.mxu0 0.0
        %1712 = vmatpush1.xpose.msra.mxu0 0.0
        %1713 = vmatprep.subr.mxu0 0.0
        %1714 = vmatpush1.xpose.msra.mxu0 0.0
        %1715 = vmatprep.subr.mxu0 0.0
        %1716 = vmatpush1.xpose.msra.mxu0 0.0
        %1717 = vmatprep.subr.mxu0 0.0
        %1718 = vmatpush1.xpose.msra.mxu0 0.0
        %1719 = vmatprep.subr.mxu0 0.0
        %1720 = vmatpush1.xpose.msra.mxu0 0.0
        %1721 = vmatprep.subr.mxu0 0.0
        %1722 = vmatpush1.xpose.msra.mxu0 0.0
        %1723 = vmatprep.subr.mxu0 0.0
        %1724 = vmatpush1.xpose.msra.mxu0 0.0
        %1725 = vmatprep.subr.mxu0 0.0
        %1726 = vmatpush1.xpose.msra.mxu0 0.0
        %1727 = vmatprep.subr.mxu0 0.0
        %1728 = vmatpush1.xpose.msra.mxu0 0.0
        %1729 = vmatprep.subr.mxu0 0.0
        %1730 = vmatpush1.xpose.msra.mxu0 0.0
        %1731 = vmatprep.subr.mxu0 0.0
        %1732 = vmatpush1.xpose.msra.mxu0 0.0
        %1733 = vmatprep.subr.mxu0 0.0
        %1734 = vmatpush1.xpose.msra.mxu0 0.0
        %1735 = vmatprep.subr.mxu0 0.0
        %1736 = vmatpush1.xpose.msra.mxu0 0.0
        %1737 = vmatprep.subr.mxu0 0.0
        %1738 = vmatpush1.xpose.msra.mxu0 0.0
        %1739 = vmatprep.subr.mxu0 0.0
        %1740 = vmatpush1.xpose.msra.mxu0 0.0
        %1741 = vmatprep.subr.mxu0 0.0
        %1742 = vmatpush1.xpose.msra.mxu0 0.0
        %1743 = vmatprep.subr.mxu0 0.0
        %1744 = vmatpush1.xpose.msra.mxu0 0.0
        %1745 = vmatprep.subr.mxu0 0.0
        %1746 = vmatpush1.xpose.msra.mxu0 0.0
        %1747 = vmatprep.subr.mxu0 0.0
        %1748 = vmatpush1.xpose.msra.mxu0 0.0
        %1749 = vmatprep.subr.mxu0 0.0
        %1750 = vmatpush1.xpose.msra.mxu0 0.0
        %1751 = vmatprep.subr.mxu0 0.0
        %1752 = vmatpush1.xpose.msra.mxu0 0.0
        %1753 = vmatprep.subr.mxu0 0.0
        %1754 = vmatpush1.xpose.msra.mxu0 0.0
        %1755 = vmatprep.subr.mxu0 0.0
        %1756 = vmatpush1.xpose.msra.mxu0 0.0
        %1757 = vmatprep.subr.mxu0 0.0
        %1758 = vmatpush1.xpose.msra.mxu0 0.0
        %1759 = vmatprep.subr.mxu0 0.0
        %1760 = vmatpush1.xpose.msra.mxu0 0.0
        %1761 = vmatprep.subr.mxu0 0.0
        %1762 = vmatpush1.xpose.msra.mxu0 0.0
        %1763 = vmatprep.subr.mxu0 0.0
        %1764 = vmatpush1.xpose.msra.mxu0 0.0
        %1765 = vmatprep.subr.mxu0 0.0
        %1766 = vmatpush1.xpose.msra.mxu0 0.0
        %1767 = vmatprep.subr.mxu0 0.0
        %1768 = vmatpush1.xpose.msra.mxu0 0.0
        %1769 = vmatprep.mubr.f32.mxu0 0.0
        %1770 = vmatmul.mubr.f32.gmra.mrb[0].mxu0 %v1701
        %v1771 = vpop.f32.mrb[0].mxu0
        %v1772 = vadd.f32 0.0, %v1771
        %v1773 = vpop.f32.mrb[0].mxu0
        %1774 = vdwg.mxu0
        %v1775 = vmul.f32 %v1772, 0.17677669
        %v1776 = vsel %vm1047, %v1775, -inf
        %1777 = vmax.xlane.f32.xlu0 %v1776
        %v1778 = vpop.xlane.xlu0 %1777
        %v1779 = vsub.f32 %v1775, %v1778
        %v1780 = vmul.f32 %v1779, 1.442695
        %v1781 = vpow.pop %v1780
        %v1782 = vsel %vm1047, %v1781, 0.0
        %1783 = vadd.xlane.f32.xlu0 %v1782
        %v1784 = vpop.xlane.xlu0 %1783
        %v1785 = vrcp.pop %v1784
        %v1786 = vmul.f32 %v1781, %v1785
        %1787 = vrot.lane.b32.xlu0 %v966, 32
        %v1788 = vpop.permute.xlu0 %1787
        %v1791 = vsel %vm1047, %v1786, 0
        %1793 = vmatprep.subr.mxu0 0.0
        %1794 = vmatpush1.msra.mxu0 %v1788
        %1795 = vmatprep.subr.mxu0 0.0
        %1796 = vmatpush1.msra.mxu0 0.0
        %1797 = vmatprep.subr.mxu0 0.0
        %1798 = vmatpush1.msra.mxu0 0.0
        %1799 = vmatprep.subr.mxu0 0.0
        %1800 = vmatpush1.msra.mxu0 0.0
        %1801 = vmatprep.subr.mxu0 0.0
        %1802 = vmatpush1.msra.mxu0 0.0
        %1803 = vmatprep.subr.mxu0 0.0
        %1804 = vmatpush1.msra.mxu0 0.0
        %1805 = vmatprep.subr.mxu0 0.0
        %1806 = vmatpush1.msra.mxu0 0.0
        %1807 = vmatprep.subr.mxu0 0.0
        %1808 = vmatpush1.msra.mxu0 0.0
        %1809 = vmatprep.subr.mxu0 0.0
        %1810 = vmatpush1.msra.mxu0 0.0
        %1811 = vmatprep.subr.mxu0 0.0
        %1812 = vmatpush1.msra.mxu0 0.0
        %1813 = vmatprep.subr.mxu0 0.0
        %1814 = vmatpush1.msra.mxu0 0.0
        %1815 = vmatprep.subr.mxu0 0.0
        %1816 = vmatpush1.msra.mxu0 0.0
        %1817 = vmatprep.subr.mxu0 0.0
        %1818 = vmatpush1.msra.mxu0 0.0
        %1819 = vmatprep.subr.mxu0 0.0
        %1820 = vmatpush1.msra.mxu0 0.0
        %1821 = vmatprep.subr.mxu0 0.0
        %1822 = vmatpush1.msra.mxu0 0.0
        %1823 = vmatprep.subr.mxu0 0.0
        %1824 = vmatpush1.msra.mxu0 0.0
        %1825 = vmatprep.subr.mxu0 0.0
        %1826 = vmatpush1.msra.mxu0 0.0
        %1827 = vmatprep.subr.mxu0 0.0
        %1828 = vmatpush1.msra.mxu0 0.0
        %1829 = vmatprep.subr.mxu0 0.0
        %1830 = vmatpush1.msra.mxu0 0.0
        %1831 = vmatprep.subr.mxu0 0.0
        %1832 = vmatpush1.msra.mxu0 0.0
        %1833 = vmatprep.subr.mxu0 0.0
        %1834 = vmatpush1.msra.mxu0 0.0
        %1835 = vmatprep.subr.mxu0 0.0
        %1836 = vmatpush1.msra.mxu0 0.0
        %1837 = vmatprep.subr.mxu0 0.0
        %1838 = vmatpush1.msra.mxu0 0.0
        %1839 = vmatprep.subr.mxu0 0.0
        %1840 = vmatpush1.msra.mxu0 0.0
        %1841 = vmatprep.subr.mxu0 0.0
        %1842 = vmatpush1.msra.mxu0 0.0
        %1843 = vmatprep.subr.mxu0 0.0
        %1844 = vmatpush1.msra.mxu0 0.0
        %1845 = vmatprep.subr.mxu0 0.0
        %1846 = vmatpush1.msra.mxu0 0.0
        %1847 = vmatprep.subr.mxu0 0.0
        %1848 = vmatpush1.msra.mxu0 0.0
        %1849 = vmatprep.subr.mxu0 0.0
        %1850 = vmatpush1.msra.mxu0 0.0
        %1851 = vmatprep.subr.mxu0 0.0
        %1852 = vmatpush1.msra.mxu0 0.0
        %1853 = vmatprep.subr.mxu0 0.0
        %1854 = vmatpush1.msra.mxu0 0.0
        %1855 = vmatprep.subr.mxu0 0.0
        %1856 = vmatpush1.msra.mxu0 0.0
        %1857 = vmatprep.mubr.f32.mxu0 0.0
        %1858 = vmatmul.mubr.f32.gmra.mrb[0].mxu0 %v1791
        %v1859 = vpop.f32.mrb[0].mxu0
        %v1860 = vadd.f32 0.0, %v1859
        %v1861 = vpop.f32.mrb[0].mxu0
        %1862 = vdwg.mxu0
        %v1863 = vld [vmem:[#allocation2 + $0x2e0] sm:$0xff]
        %v1864 = vld [vmem:[#allocation2 + $0x2e8] sm:$0xff]
        %v1865 = vld [vmem:[#allocation2 + $0x2f0] sm:$0xff]
        %v1866 = vld [vmem:[#allocation2 + $0x2f8] sm:$0xff]
        %v1868 = vsel %vm969, %v1860, 0
        %1870 = vmatprep.subr.mxu0 0.0
        %1871 = vmatpush1.msra.mxu0 %v1863
        %1872 = vmatprep.subr.mxu0 0.0
        %1873 = vmatpush1.msra.mxu0 %v1864
        %1874 = vmatprep.subr.mxu0 0.0
        %1875 = vmatpush1.msra.mxu0 %v1865
        %1876 = vmatprep.subr.mxu0 0.0
        %1877 = vmatpush1.msra.mxu0 %v1866
        %1878 = vmatprep.subr.mxu0 0.0
        %1879 = vmatpush1.msra.mxu0 0.0
        %1880 = vmatprep.subr.mxu0 0.0
        %1881 = vmatpush1.msra.mxu0 0.0
        %1882 = vmatprep.subr.mxu0 0.0
        %1883 = vmatpush1.msra.mxu0 0.0
        %1884 = vmatprep.subr.mxu0 0.0
        %1885 = vmatpush1.msra.mxu0 0.0
        %1886 = vmatprep.subr.mxu0 0.0
        %1887 = vmatpush1.msra.mxu0 0.0
        %1888 = vmatprep.subr.mxu0 0.0
        %1889 = vmatpush1.msra.mxu0 0.0
        %1890 = vmatprep.subr.mxu0 0.0
        %1891 = vmatpush1.msra.mxu0 0.0
        %1892 = vmatprep.subr.mxu0 0.0
        %1893 = vmatpush1.msra.mxu0 0.0
        %1894 = vmatprep.subr.mxu0 0.0
        %1895 = vmatpush1.msra.mxu0 0.0
        %1896 = vmatprep.subr.mxu0 0.0
        %1897 = vmatpush1.msra.mxu0 0.0
        %1898 = vmatprep.subr.mxu0 0.0
        %1899 = vmatpush1.msra.mxu0 0.0
        %1900 = vmatprep.subr.mxu0 0.0
        %1901 = vmatpush1.msra.mxu0 0.0
        %1902 = vmatprep.subr.mxu0 0.0
        %1903 = vmatpush1.msra.mxu0 0.0
        %1904 = vmatprep.subr.mxu0 0.0
        %1905 = vmatpush1.msra.mxu0 0.0
        %1906 = vmatprep.subr.mxu0 0.0
        %1907 = vmatpush1.msra.mxu0 0.0
        %1908 = vmatprep.subr.mxu0 0.0
        %1909 = vmatpush1.msra.mxu0 0.0
        %1910 = vmatprep.subr.mxu0 0.0
        %1911 = vmatpush1.msra.mxu0 0.0
        %1912 = vmatprep.subr.mxu0 0.0
        %1913 = vmatpush1.msra.mxu0 0.0
        %1914 = vmatprep.subr.mxu0 0.0
        %1915 = vmatpush1.msra.mxu0 0.0
        %1916 = vmatprep.subr.mxu0 0.0
        %1917 = vmatpush1.msra.mxu0 0.0
        %1918 = vmatprep.subr.mxu0 0.0
        %1919 = vmatpush1.msra.mxu0 0.0
        %1920 = vmatprep.subr.mxu0 0.0
        %1921 = vmatpush1.msra.mxu0 0.0
        %1922 = vmatprep.subr.mxu0 0.0
        %1923 = vmatpush1.msra.mxu0 0.0
        %1924 = vmatprep.subr.mxu0 0.0
        %1925 = vmatpush1.msra.mxu0 0.0
        %1926 = vmatprep.subr.mxu0 0.0
        %1927 = vmatpush1.msra.mxu0 0.0
        %1928 = vmatprep.subr.mxu0 0.0
        %1929 = vmatpush1.msra.mxu0 0.0
        %1930 = vmatprep.subr.mxu0 0.0
        %1931 = vmatpush1.msra.mxu0 0.0
        %1932 = vmatprep.subr.mxu0 0.0
        %1933 = vmatpush1.msra.mxu0 0.0
        %1934 = vmatprep.mubr.f32.mxu0 0.0
        %1935 = vmatmul.mubr.f32.gmra.mrb[0].mxu0 %v1868
        %v1936 = vpop.f32.mrb[0].mxu0
        %v1937 = vadd.f32 0.0, %v1936
        %v1938 = vpop.f32.mrb[0].mxu0
        %1939 = vdwg.mxu0
        %v1940 = vadd.f32 %v1696, %v1937
        %v1941 = vlaneseq
        %v1942 = vshrl.u32 %v1941, 7
        %v1943 = vsub.s32 6, %v1942
        %v1944 = vrot.slane %v404, %v1943
        %v1945 = vadd.f32 %v1940, %v1944
        %v1946 = vld [vmem:[#allocation2 + $0x300] sm:$0xff]
        %v1947 = vld [vmem:[#allocation2 + $0x308] sm:$0xff]
        %v1948 = vld [vmem:[#allocation2 + $0x310] sm:$0xff]
        %v1949 = vld [vmem:[#allocation2 + $0x318] sm:$0xff]
        %v1950 = vld [vmem:[#allocation2 + $0x320] sm:$0xff]
        %v1951 = vld [vmem:[#allocation2 + $0x328] sm:$0xff]
        %v1952 = vld [vmem:[#allocation2 + $0x330] sm:$0xff]
        %v1953 = vld [vmem:[#allocation2 + $0x338] sm:$0xff]
        %v1954 = vld [vmem:[#allocation2 + $0x340] sm:$0xff]
        %v1955 = vld [vmem:[#allocation2 + $0x348] sm:$0xff]
        %v1956 = vld [vmem:[#allocation2 + $0x350] sm:$0xff]
        %v1957 = vld [vmem:[#allocation2 + $0x358] sm:$0xff]
        %v1958 = vld [vmem:[#allocation2 + $0x360] sm:$0xff]
        %v1959 = vld [vmem:[#allocation2 + $0x368] sm:$0xff]
        %v1960 = vld [vmem:[#allocation2 + $0x370] sm:$0xff]
        %v1961 = vld [vmem:[#allocation2 + $0x378] sm:$0xff]
        %1962 = vmatprep.subr.mxu0 0.0
        %1963 = vmatpush1.msra.mxu0 %v1946
        %1964 = vmatprep.subr.mxu0 0.0
        %1965 = vmatpush1.msra.mxu0 %v1947
        %1966 = vmatprep.subr.mxu0 0.0
        %1967 = vmatpush1.msra.mxu0 %v1948
        %1968 = vmatprep.subr.mxu0 0.0
        %1969 = vmatpush1.msra.mxu0 %v1949
        %1970 = vmatprep.subr.mxu0 0.0
        %1971 = vmatpush1.msra.mxu0 %v1950
        %1972 = vmatprep.subr.mxu0 0.0
        %1973 = vmatpush1.msra.mxu0 %v1951
        %1974 = vmatprep.subr.mxu0 0.0
        %1975 = vmatpush1.msra.mxu0 %v1952
        %1976 = vmatprep.subr.mxu0 0.0
        %1977 = vmatpush1.msra.mxu0 %v1953
        %1978 = vmatprep.subr.mxu0 0.0
        %1979 = vmatpush1.msra.mxu0 %v1954
        %1980 = vmatprep.subr.mxu0 0.0
        %1981 = vmatpush1.msra.mxu0 %v1955
        %1982 = vmatprep.subr.mxu0 0.0
        %1983 = vmatpush1.msra.mxu0 %v1956
        %1984 = vmatprep.subr.mxu0 0.0
        %1985 = vmatpush1.msra.mxu0 %v1957
        %1986 = vmatprep.subr.mxu0 0.0
        %1987 = vmatpush1.msra.mxu0 %v1958
        %1988 = vmatprep.subr.mxu0 0.0
        %1989 = vmatpush1.msra.mxu0 %v1959
        %1990 = vmatprep.subr.mxu0 0.0
        %1991 = vmatpush1.msra.mxu0 %v1960
        %1992 = vmatprep.subr.mxu0 0.0
        %1993 = vmatpush1.msra.mxu0 %v1961
        %1994 = vmatprep.subr.mxu0 0.0
        %1995 = vmatpush1.msra.mxu0 0.0
        %1996 = vmatprep.subr.mxu0 0.0
        %1997 = vmatpush1.msra.mxu0 0.0
        %1998 = vmatprep.subr.mxu0 0.0
        %1999 = vmatpush1.msra.mxu0 0.0
        %2000 = vmatprep.subr.mxu0 0.0
        %2001 = vmatpush1.msra.mxu0 0.0
        %2002 = vmatprep.subr.mxu0 0.0
        %2003 = vmatpush1.msra.mxu0 0.0
        %2004 = vmatprep.subr.mxu0 0.0
        %2005 = vmatpush1.msra.mxu0 0.0
        %2006 = vmatprep.subr.mxu0 0.0
        %2007 = vmatpush1.msra.mxu0 0.0
        %2008 = vmatprep.subr.mxu0 0.0
        %2009 = vmatpush1.msra.mxu0 0.0
        %2010 = vmatprep.subr.mxu0 0.0
        %2011 = vmatpush1.msra.mxu0 0.0
        %2012 = vmatprep.subr.mxu0 0.0
        %2013 = vmatpush1.msra.mxu0 0.0
        %2014 = vmatprep.subr.mxu0 0.0
        %2015 = vmatpush1.msra.mxu0 0.0
        %2016 = vmatprep.subr.mxu0 0.0
        %2017 = vmatpush1.msra.mxu0 0.0
        %2018 = vmatprep.subr.mxu0 0.0
        %2019 = vmatpush1.msra.mxu0 0.0
        %2020 = vmatprep.subr.mxu0 0.0
        %2021 = vmatpush1.msra.mxu0 0.0
        %2022 = vmatprep.subr.mxu0 0.0
        %2023 = vmatpush1.msra.mxu0 0.0
        %2024 = vmatprep.subr.mxu0 0.0
        %2025 = vmatpush1.msra.mxu0 0.0
        %2026 = vmatprep.mubr.f32.mxu0 0.0
        %2027 = vmatmul.mubr.f32.gmra.mrb[0].mxu0 %v1945
        %v2028 = vpop.f32.mrb[0].mxu0
        %v2029 = vadd.f32 0.0, %v2028
        %v2030 = vpop.f32.mrb[0].mxu0
        %2031 = vdwg.mxu0
        %v2032 = vadd.f32 %v1945, %v2029
        %v2033 = vlaneseq
        %v2034 = vshrl.u32 %v2033, 7
        %v2035 = vsub.s32 7, %v2034
        %v2036 = vrot.slane %v404, %v2035
        %v2037 = vadd.f32 %v2032, %v2036
        %v2038 = vrot.slane %v2037, 4
        %v2039 = vadd.f32 %v2037, %v2038
        %v2040 = vrot.slane %v2039, 2
        %v2041 = vadd.f32 %v2039, %v2040
        %v2042 = vrot.slane %v2041, 1
        %v2043 = vadd.f32 %v2041, %v2042
        %v2044 = vld [vmem:[#allocation5] sm:$0xff]
        %v2045 = vld [vmem:[#allocation5 + $0x8] sm:$0xff]
        %v2046 = vld [vmem:[#allocation5 + $0x10] sm:$0xff]
        %v2047 = vld [vmem:[#allocation5 + $0x18] sm:$0xff]
        %v2048 = vld [vmem:[#allocation5 + $0x20] sm:$0xff]
        %v2049 = vld [vmem:[#allocation5 + $0x28] sm:$0xff]
        %v2050 = vld [vmem:[#allocation5 + $0x30] sm:$0xff]
        %v2051 = vld [vmem:[#allocation5 + $0x38] sm:$0xff]
        %v2052 = vld [vmem:[#allocation5 + $0x40] sm:$0xff]
        %v2053 = vld [vmem:[#allocation5 + $0x48] sm:$0xff]
        %v2054 = vld [vmem:[#allocation5 + $0x50] sm:$0xff]
        %v2055 = vld [vmem:[#allocation5 + $0x58] sm:$0xff]
        %v2056 = vld [vmem:[#allocation5 + $0x60] sm:$0xff]
        %v2057 = vld [vmem:[#allocation5 + $0x68] sm:$0xff]
        %v2058 = vld [vmem:[#allocation5 + $0x70] sm:$0xff]
        %v2059 = vld [vmem:[#allocation5 + $0x78] sm:$0xff]
        %v2060 = vld [vmem:[#allocation5 + $0x80] sm:$0xff]
        %v2061 = vld [vmem:[#allocation5 + $0x88] sm:$0xff]
        %v2062 = vld [vmem:[#allocation5 + $0x90] sm:$0xff]
        %v2063 = vld [vmem:[#allocation5 + $0x98] sm:$0xff]
        %v2064 = vld [vmem:[#allocation5 + $0xa0] sm:$0xff]
        %v2065 = vld [vmem:[#allocation5 + $0xa8] sm:$0xff]
        %v2066 = vld [vmem:[#allocation5 + $0xb0] sm:$0xff]
        %v2067 = vld [vmem:[#allocation5 + $0xb8] sm:$0xff]
        %v2068 = vld [vmem:[#allocation5 + $0xc0] sm:$0xff]
        %v2069 = vld [vmem:[#allocation5 + $0xc8] sm:$0xff]
        %v2070 = vld [vmem:[#allocation5 + $0xd0] sm:$0xff]
        %v2071 = vld [vmem:[#allocation5 + $0xd8] sm:$0xff]
        %v2072 = vld [vmem:[#allocation5 + $0xe0] sm:$0xff]
        %v2073 = vld [vmem:[#allocation5 + $0xe8] sm:$0xff]
        %v2074 = vld [vmem:[#allocation5 + $0xf0] sm:$0xff]
        %v2075 = vld [vmem:[#allocation5 + $0xf8] sm:$0xff]
        %v2076 = vld [vmem:[#allocation5 + $0x100] sm:$0xff]
        %v2077 = vld [vmem:[#allocation5 + $0x108] sm:$0xff]
        %v2078 = vld [vmem:[#allocation5 + $0x110] sm:$0xff]
        %v2079 = vld [vmem:[#allocation5 + $0x118] sm:$0xff]
        %v2080 = vld [vmem:[#allocation5 + $0x120] sm:$0xff]
        %v2081 = vld [vmem:[#allocation5 + $0x128] sm:$0xff]
        %v2082 = vld [vmem:[#allocation5 + $0x130] sm:$0xff]
        %v2083 = vld [vmem:[#allocation5 + $0x138] sm:$0xff]
        %v2084 = vld [vmem:[#allocation5 + $0x140] sm:$0xff]
        %v2085 = vld [vmem:[#allocation5 + $0x148] sm:$0xff]
        %v2086 = vld [vmem:[#allocation5 + $0x150] sm:$0xff]
        %v2087 = vld [vmem:[#allocation5 + $0x158] sm:$0xff]
        %v2088 = vld [vmem:[#allocation5 + $0x160] sm:$0xff]
        %v2089 = vld [vmem:[#allocation5 + $0x168] sm:$0xff]
        %v2090 = vld [vmem:[#allocation5 + $0x170] sm:$0xff]
        %v2091 = vld [vmem:[#allocation5 + $0x178] sm:$0xff]
        %v2092 = vld [vmem:[#allocation5 + $0x180] sm:$0xff]
        %v2093 = vld [vmem:[#allocation5 + $0x188] sm:$0xff]
        %v2094 = vld [vmem:[#allocation5 + $0x190] sm:$0xff]
        %v2095 = vld [vmem:[#allocation5 + $0x198] sm:$0xff]
        %v2096 = vld [vmem:[#allocation5 + $0x1a0] sm:$0xff]
        %v2097 = vld [vmem:[#allocation5 + $0x1a8] sm:$0xff]
        %v2098 = vld [vmem:[#allocation5 + $0x1b0] sm:$0xff]
        %v2099 = vld [vmem:[#allocation5 + $0x1b8] sm:$0xff]
        %v2100 = vld [vmem:[#allocation5 + $0x1c0] sm:$0xff]
        %v2101 = vld [vmem:[#allocation5 + $0x1c8] sm:$0xff]
        %v2102 = vld [vmem:[#allocation5 + $0x1d0] sm:$0xff]
        %v2103 = vld [vmem:[#allocation5 + $0x1d8] sm:$0xff]
        %v2104 = vld [vmem:[#allocation5 + $0x1e0] sm:$0xff]
        %v2105 = vld [vmem:[#allocation5 + $0x1e8] sm:$0xff]
        %v2106 = vld [vmem:[#allocation5 + $0x1f0] sm:$0xff]
        %v2107 = vld [vmem:[#allocation5 + $0x1f8] sm:$0xff]
        %v2108 = vld [vmem:[#allocation5 + $0x200] sm:$0xff]
        %v2109 = vld [vmem:[#allocation5 + $0x208] sm:$0xff]
        %v2110 = vld [vmem:[#allocation5 + $0x210] sm:$0xff]
        %v2111 = vld [vmem:[#allocation5 + $0x218] sm:$0xff]
        %v2112 = vld [vmem:[#allocation5 + $0x220] sm:$0xff]
        %v2113 = vld [vmem:[#allocation5 + $0x228] sm:$0xff]
        %v2114 = vld [vmem:[#allocation5 + $0x230] sm:$0xff]
        %v2115 = vld [vmem:[#allocation5 + $0x238] sm:$0xff]
        %v2116 = vld [vmem:[#allocation5 + $0x240] sm:$0xff]
        %v2117 = vld [vmem:[#allocation5 + $0x248] sm:$0xff]
        %v2118 = vld [vmem:[#allocation5 + $0x250] sm:$0xff]
        %v2119 = vld [vmem:[#allocation5 + $0x258] sm:$0xff]
        %v2120 = vld [vmem:[#allocation5 + $0x260] sm:$0xff]
        %v2121 = vld [vmem:[#allocation5 + $0x268] sm:$0xff]
        %v2122 = vld [vmem:[#allocation5 + $0x270] sm:$0xff]
        %v2123 = vld [vmem:[#allocation5 + $0x278] sm:$0xff]
        %v2124 = vld [vmem:[#allocation5 + $0x280] sm:$0xff]
        %v2125 = vld [vmem:[#allocation5 + $0x288] sm:$0xff]
        %v2126 = vld [vmem:[#allocation5 + $0x290] sm:$0xff]
        %v2127 = vld [vmem:[#allocation5 + $0x298] sm:$0xff]
        %v2128 = vld [vmem:[#allocation5 + $0x2a0] sm:$0xff]
        %v2129 = vld [vmem:[#allocation5 + $0x2a8] sm:$0xff]
        %v2130 = vld [vmem:[#allocation5 + $0x2b0] sm:$0xff]
        %v2131 = vld [vmem:[#allocation5 + $0x2b8] sm:$0xff]
        %v2132 = vld [vmem:[#allocation5 + $0x2c0] sm:$0xff]
        %v2133 = vld [vmem:[#allocation5 + $0x2c8] sm:$0xff]
        %v2134 = vld [vmem:[#allocation5 + $0x2d0] sm:$0xff]
        %v2135 = vld [vmem:[#allocation5 + $0x2d8] sm:$0xff]
        %v2136 = vld [vmem:[#allocation5 + $0x2e0] sm:$0xff]
        %v2137 = vld [vmem:[#allocation5 + $0x2e8] sm:$0xff]
        %v2138 = vld [vmem:[#allocation5 + $0x2f0] sm:$0xff]
        %v2139 = vld [vmem:[#allocation5 + $0x2f8] sm:$0xff]
        %v2140 = vld [vmem:[#allocation5 + $0x300] sm:$0xff]
        %v2141 = vld [vmem:[#allocation5 + $0x308] sm:$0xff]
        %v2142 = vld [vmem:[#allocation5 + $0x310] sm:$0xff]
        %v2143 = vld [vmem:[#allocation5 + $0x318] sm:$0xff]
        %v2144 = vld [vmem:[#allocation5 + $0x320] sm:$0xff]
        %v2145 = vld [vmem:[#allocation5 + $0x328] sm:$0xff]
        %v2146 = vld [vmem:[#allocation5 + $0x330] sm:$0xff]
        %v2147 = vld [vmem:[#allocation5 + $0x338] sm:$0xff]
        %v2148 = vld [vmem:[#allocation5 + $0x340] sm:$0xff]
        %v2149 = vld [vmem:[#allocation5 + $0x348] sm:$0xff]
        %v2150 = vld [vmem:[#allocation5 + $0x350] sm:$0xff]
        %v2151 = vld [vmem:[#allocation5 + $0x358] sm:$0xff]
        %v2152 = vld [vmem:[#allocation5 + $0x360] sm:$0xff]
        %v2153 = vld [vmem:[#allocation5 + $0x368] sm:$0xff]
        %v2154 = vld [vmem:[#allocation5 + $0x370] sm:$0xff]
        %v2155 = vld [vmem:[#allocation5 + $0x378] sm:$0xff]
        %v2156 = vld [vmem:[#allocation5 + $0x380] sm:$0xff]
        %v2157 = vld [vmem:[#allocation5 + $0x388] sm:$0xff]
        %v2158 = vld [vmem:[#allocation5 + $0x390] sm:$0xff]
        %v2159 = vld [vmem:[#allocation5 + $0x398] sm:$0xff]
        %v2160 = vld [vmem:[#allocation5 + $0x3a0] sm:$0xff]
        %v2161 = vld [vmem:[#allocation5 + $0x3a8] sm:$0xff]
        %v2162 = vld [vmem:[#allocation5 + $0x3b0] sm:$0xff]
        %v2163 = vld [vmem:[#allocation5 + $0x3b8] sm:$0xff]
        %v2164 = vld [vmem:[#allocation5 + $0x3c0] sm:$0xff]
        %v2165 = vld [vmem:[#allocation5 + $0x3c8] sm:$0xff]
        %v2166 = vld [vmem:[#allocation5 + $0x3d0] sm:$0xff]
        %v2167 = vld [vmem:[#allocation5 + $0x3d8] sm:$0xff]
        %v2168 = vld [vmem:[#allocation5 + $0x3e0] sm:$0xff]
        %v2169 = vld [vmem:[#allocation5 + $0x3e8] sm:$0xff]
        %v2170 = vld [vmem:[#allocation5 + $0x3f0] sm:$0xff]
        %v2171 = vld [vmem:[#allocation5 + $0x3f8] sm:$0xff]
        %2172 = vmatprep.subr.mxu0 %v2109
        %2173 = vmatpush1.msra.mxu0 %v2108
        %2174 = vmatprep.subr.mxu0 %v2113
        %2175 = vmatpush1.msra.mxu0 %v2112
        %2176 = vmatprep.subr.mxu0 %v2117
        %2177 = vmatpush1.msra.mxu0 %v2116
        %2178 = vmatprep.subr.mxu0 %v2121
        %2179 = vmatpush1.msra.mxu0 %v2120
        %2180 = vmatprep.subr.mxu0 %v2125
        %2181 = vmatpush1.msra.mxu0 %v2124
        %2182 = vmatprep.subr.mxu0 %v2129
        %2183 = vmatpush1.msra.mxu0 %v2128
        %2184 = vmatprep.subr.mxu0 %v2133
        %2185 = vmatpush1.msra.mxu0 %v2132
        %2186 = vmatprep.subr.mxu0 %v2137
        %2187 = vmatpush1.msra.mxu0 %v2136
        %2188 = vmatprep.subr.mxu0 %v2141
        %2189 = vmatpush1.msra.mxu0 %v2140
        %2190 = vmatprep.subr.mxu0 %v2145
        %2191 = vmatpush1.msra.mxu0 %v2144
        %2192 = vmatprep.subr.mxu0 %v2149
        %2193 = vmatpush1.msra.mxu0 %v2148
        %2194 = vmatprep.subr.mxu0 %v2153
        %2195 = vmatpush1.msra.mxu0 %v2152
        %2196 = vmatprep.subr.mxu0 %v2157
        %2197 = vmatpush1.msra.mxu0 %v2156
        %2198 = vmatprep.subr.mxu0 %v2161
        %2199 = vmatpush1.msra.mxu0 %v2160
        %2200 = vmatprep.subr.mxu0 %v2165
        %2201 = vmatpush1.msra.mxu0 %v2164
        %2202 = vmatprep.subr.mxu0 %v2169
        %2203 = vmatpush1.msra.mxu0 %v2168
        %2204 = vmatprep.subr.mxu0 0.0
        %2205 = vmatpush1.msra.mxu0 0.0
        %2206 = vmatprep.subr.mxu0 0.0
        %2207 = vmatpush1.msra.mxu0 0.0
        %2208 = vmatprep.subr.mxu0 0.0
        %2209 = vmatpush1.msra.mxu0 0.0
        %2210 = vmatprep.subr.mxu0 0.0
        %2211 = vmatpush1.msra.mxu0 0.0
        %2212 = vmatprep.subr.mxu0 0.0
        %2213 = vmatpush1.msra.mxu0 0.0
        %2214 = vmatprep.subr.mxu0 0.0
        %2215 = vmatpush1.msra.mxu0 0.0
        %2216 = vmatprep.subr.mxu0 0.0
        %2217 = vmatpush1.msra.mxu0 0.0
        %2218 = vmatprep.subr.mxu0 0.0
        %2219 = vmatpush1.msra.mxu0 0.0
        %2220 = vmatprep.subr.mxu0 0.0
        %2221 = vmatpush1.msra.mxu0 0.0
        %2222 = vmatprep.subr.mxu0 0.0
        %2223 = vmatpush1.msra.mxu0 0.0
        %2224 = vmatprep.subr.mxu0 0.0
        %2225 = vmatpush1.msra.mxu0 0.0
        %2226 = vmatprep.subr.mxu0 0.0
        %2227 = vmatpush1.msra.mxu0 0.0
        %2228 = vmatprep.subr.mxu0 0.0
        %2229 = vmatpush1.msra.mxu0 0.0
        %2230 = vmatprep.subr.mxu0 0.0
        %2231 = vmatpush1.msra.mxu0 0.0
        %2232 = vmatprep.subr.mxu0 0.0
        %2233 = vmatpush1.msra.mxu0 0.0
        %2234 = vmatprep.subr.mxu0 0.0
        %2235 = vmatpush1.msra.mxu0 0.0
        %2236 = vmatprep.mubr.f32.mxu0 0.0
        %2237 = vmatmul.mubr.f32.gmra.mrb[0].mxu0 %v536
        %v2238 = vpop.f32.mrb[0].mxu0
        %v2239 = vadd.f32 0.0, %v2238
        %v2240 = vpop.f32.mrb[0].mxu0
        %v2241 = vadd.f32 0.0, %v2240
        %2242 = vdwg.mxu0
        %2243 = vmatprep.subr.mxu0 %v2111
        %2244 = vmatpush1.msra.mxu0 %v2110
        %2245 = vmatprep.subr.mxu0 %v2115
        %2246 = vmatpush1.msra.mxu0 %v2114
        %2247 = vmatprep.subr.mxu0 %v2119
        %2248 = vmatpush1.msra.mxu0 %v2118
        %2249 = vmatprep.subr.mxu0 %v2123
        %2250 = vmatpush1.msra.mxu0 %v2122
        %2251 = vmatprep.subr.mxu0 %v2127
        %2252 = vmatpush1.msra.mxu0 %v2126
        %2253 = vmatprep.subr.mxu0 %v2131
        %2254 = vmatpush1.msra.mxu0 %v2130
        %2255 = vmatprep.subr.mxu0 %v2135
        %2256 = vmatpush1.msra.mxu0 %v2134
        %2257 = vmatprep.subr.mxu0 %v2139
        %2258 = vmatpush1.msra.mxu0 %v2138
        %2259 = vmatprep.subr.mxu0 %v2143
        %2260 = vmatpush1.msra.mxu0 %v2142
        %2261 = vmatprep.subr.mxu0 %v2147
        %2262 = vmatpush1.msra.mxu0 %v2146
        %2263 = vmatprep.subr.mxu0 %v2151
        %2264 = vmatpush1.msra.mxu0 %v2150
        %2265 = vmatprep.subr.mxu0 %v2155
        %2266 = vmatpush1.msra.mxu0 %v2154
        %2267 = vmatprep.subr.mxu0 %v2159
        %2268 = vmatpush1.msra.mxu0 %v2158
        %2269 = vmatprep.subr.mxu0 %v2163
        %2270 = vmatpush1.msra.mxu0 %v2162
        %2271 = vmatprep.subr.mxu0 %v2167
        %2272 = vmatpush1.msra.mxu0 %v2166
        %2273 = vmatprep.subr.mxu0 %v2171
        %2274 = vmatpush1.msra.mxu0 %v2170
        %2275 = vmatprep.subr.mxu0 0.0
        %2276 = vmatpush1.msra.mxu0 0.0
        %2277 = vmatprep.subr.mxu0 0.0
        %2278 = vmatpush1.msra.mxu0 0.0
        %2279 = vmatprep.subr.mxu0 0.0
        %2280 = vmatpush1.msra.mxu0 0.0
        %2281 = vmatprep.subr.mxu0 0.0
        %2282 = vmatpush1.msra.mxu0 0.0
        %2283 = vmatprep.subr.mxu0 0.0
        %2284 = vmatpush1.msra.mxu0 0.0
        %2285 = vmatprep.subr.mxu0 0.0
        %2286 = vmatpush1.msra.mxu0 0.0
        %2287 = vmatprep.subr.mxu0 0.0
        %2288 = vmatpush1.msra.mxu0 0.0
        %2289 = vmatprep.subr.mxu0 0.0
        %2290 = vmatpush1.msra.mxu0 0.0
        %2291 = vmatprep.subr.mxu0 0.0
        %2292 = vmatpush1.msra.mxu0 0.0
        %2293 = vmatprep.subr.mxu0 0.0
        %2294 = vmatpush1.msra.mxu0 0.0
        %2295 = vmatprep.subr.mxu0 0.0
        %2296 = vmatpush1.msra.mxu0 0.0
        %2297 = vmatprep.subr.mxu0 0.0
        %2298 = vmatpush1.msra.mxu0 0.0
        %2299 = vmatprep.subr.mxu0 0.0
        %2300 = vmatpush1.msra.mxu0 0.0
        %2301 = vmatprep.subr.mxu0 0.0
        %2302 = vmatpush1.msra.mxu0 0.0
        %2303 = vmatprep.subr.mxu0 0.0
        %2304 = vmatpush1.msra.mxu0 0.0
        %2305 = vmatprep.subr.mxu0 0.0
        %2306 = vmatpush1.msra.mxu0 0.0
        %2307 = vmatprep.mubr.f32.mxu0 0.0
        %2308 = vmatmul.mubr.f32.gmra.mrb[0].mxu0 %v536
        %v2309 = vpop.f32.mrb[0].mxu0
        %v2310 = vadd.f32 0.0, %v2309
        %v2311 = vpop.f32.mrb[0].mxu0
        %v2312 = vadd.f32 0.0, %v2311
        %2313 = vdwg.mxu0
        %2314 = vmatprep.subr.mxu0 %v2045
        %2315 = vmatpush1.msra.mxu0 %v2044
        %2316 = vmatprep.subr.mxu0 %v2049
        %2317 = vmatpush1.msra.mxu0 %v2048
        %2318 = vmatprep.subr.mxu0 %v2053
        %2319 = vmatpush1.msra.mxu0 %v2052
        %2320 = vmatprep.subr.mxu0 %v2057
        %2321 = vmatpush1.msra.mxu0 %v2056
        %2322 = vmatprep.subr.mxu0 %v2061
        %2323 = vmatpush1.msra.mxu0 %v2060
        %2324 = vmatprep.subr.mxu0 %v2065
        %2325 = vmatpush1.msra.mxu0 %v2064
        %2326 = vmatprep.subr.mxu0 %v2069
        %2327 = vmatpush1.msra.mxu0 %v2068
        %2328 = vmatprep.subr.mxu0 %v2073
        %2329 = vmatpush1.msra.mxu0 %v2072
        %2330 = vmatprep.subr.mxu0 %v2077
        %2331 = vmatpush1.msra.mxu0 %v2076
        %2332 = vmatprep.subr.mxu0 %v2081
        %2333 = vmatpush1.msra.mxu0 %v2080
        %2334 = vmatprep.subr.mxu0 %v2085
        %2335 = vmatpush1.msra.mxu0 %v2084
        %2336 = vmatprep.subr.mxu0 %v2089
        %2337 = vmatpush1.msra.mxu0 %v2088
        %2338 = vmatprep.subr.mxu0 %v2093
        %2339 = vmatpush1.msra.mxu0 %v2092
        %2340 = vmatprep.subr.mxu0 %v2097
        %2341 = vmatpush1.msra.mxu0 %v2096
        %2342 = vmatprep.subr.mxu0 %v2101
        %2343 = vmatpush1.msra.mxu0 %v2100
        %2344 = vmatprep.subr.mxu0 %v2105
        %2345 = vmatpush1.msra.mxu0 %v2104
        %2346 = vmatprep.subr.mxu0 0.0
        %2347 = vmatpush1.msra.mxu0 0.0
        %2348 = vmatprep.subr.mxu0 0.0
        %2349 = vmatpush1.msra.mxu0 0.0
        %2350 = vmatprep.subr.mxu0 0.0
        %2351 = vmatpush1.msra.mxu0 0.0
        %2352 = vmatprep.subr.mxu0 0.0
        %2353 = vmatpush1.msra.mxu0 0.0
        %2354 = vmatprep.subr.mxu0 0.0
        %2355 = vmatpush1.msra.mxu0 0.0
        %2356 = vmatprep.subr.mxu0 0.0
        %2357 = vmatpush1.msra.mxu0 0.0
        %2358 = vmatprep.subr.mxu0 0.0
        %2359 = vmatpush1.msra.mxu0 0.0
        %2360 = vmatprep.subr.mxu0 0.0
        %2361 = vmatpush1.msra.mxu0 0.0
        %2362 = vmatprep.subr.mxu0 0.0
        %2363 = vmatpush1.msra.mxu0 0.0
        %2364 = vmatprep.subr.mxu0 0.0
        %2365 = vmatpush1.msra.mxu0 0.0
        %2366 = vmatprep.subr.mxu0 0.0
        %2367 = vmatpush1.msra.mxu0 0.0
        %2368 = vmatprep.subr.mxu0 0.0
        %2369 = vmatpush1.msra.mxu0 0.0
        %2370 = vmatprep.subr.mxu0 0.0
        %2371 = vmatpush1.msra.mxu0 0.0
        %2372 = vmatprep.subr.mxu0 0.0
        %2373 = vmatpush1.msra.mxu0 0.0
        %2374 = vmatprep.subr.mxu0 0.0
        %2375 = vmatpush1.msra.mxu0 0.0
        %2376 = vmatprep.subr.mxu0 0.0
        %2377 = vmatpush1.msra.mxu0 0.0
        %2378 = vmatprep.mubr.f32.mxu0 0.0
        %2379 = vmatmul.mubr.f32.gmra.mrb[0].mxu0 %v2043
        %v2380 = vpop.f32.mrb[0].mxu0
        %v2381 = vadd.f32 %v2239, %v2380
        %v2382 = vpop.f32.mrb[0].mxu0
        %v2383 = vadd.f32 %v2241, %v2382
        %2384 = vdwg.mxu0
        %2385 = vmatprep.subr.mxu0 %v2047
        %2386 = vmatpush1.msra.mxu0 %v2046
        %2387 = vmatprep.subr.mxu0 %v2051
        %2388 = vmatpush1.msra.mxu0 %v2050
        %2389 = vmatprep.subr.mxu0 %v2055
        %2390 = vmatpush1.msra.mxu0 %v2054
        %2391 = vmatprep.subr.mxu0 %v2059
        %2392 = vmatpush1.msra.mxu0 %v2058
        %2393 = vmatprep.subr.mxu0 %v2063
        %2394 = vmatpush1.msra.mxu0 %v2062
        %2395 = vmatprep.subr.mxu0 %v2067
        %2396 = vmatpush1.msra.mxu0 %v2066
        %2397 = vmatprep.subr.mxu0 %v2071
        %2398 = vmatpush1.msra.mxu0 %v2070
        %2399 = vmatprep.subr.mxu0 %v2075
        %2400 = vmatpush1.msra.mxu0 %v2074
        %2401 = vmatprep.subr.mxu0 %v2079
        %2402 = vmatpush1.msra.mxu0 %v2078
        %2403 = vmatprep.subr.mxu0 %v2083
        %2404 = vmatpush1.msra.mxu0 %v2082
        %2405 = vmatprep.subr.mxu0 %v2087
        %2406 = vmatpush1.msra.mxu0 %v2086
        %2407 = vmatprep.subr.mxu0 %v2091
        %2408 = vmatpush1.msra.mxu0 %v2090
        %2409 = vmatprep.subr.mxu0 %v2095
        %2410 = vmatpush1.msra.mxu0 %v2094
        %2411 = vmatprep.subr.mxu0 %v2099
        %2412 = vmatpush1.msra.mxu0 %v2098
        %2413 = vmatprep.subr.mxu0 %v2103
        %2414 = vmatpush1.msra.mxu0 %v2102
        %2415 = vmatprep.subr.mxu0 %v2107
        %2416 = vmatpush1.msra.mxu0 %v2106
        %2417 = vmatprep.subr.mxu0 0.0
        %2418 = vmatpush1.msra.mxu0 0.0
        %2419 = vmatprep.subr.mxu0 0.0
        %2420 = vmatpush1.msra.mxu0 0.0
        %2421 = vmatprep.subr.mxu0 0.0
        %2422 = vmatpush1.msra.mxu0 0.0
        %2423 = vmatprep.subr.mxu0 0.0
        %2424 = vmatpush1.msra.mxu0 0.0
        %2425 = vmatprep.subr.mxu0 0.0
        %2426 = vmatpush1.msra.mxu0 0.0
        %2427 = vmatprep.subr.mxu0 0.0
        %2428 = vmatpush1.msra.mxu0 0.0
        %2429 = vmatprep.subr.mxu0 0.0
        %2430 = vmatpush1.msra.mxu0 0.0
        %2431 = vmatprep.subr.mxu0 0.0
        %2432 = vmatpush1.msra.mxu0 0.0
        %2433 = vmatprep.subr.mxu0 0.0
        %2434 = vmatpush1.msra.mxu0 0.0
        %2435 = vmatprep.subr.mxu0 0.0
        %2436 = vmatpush1.msra.mxu0 0.0
        %2437 = vmatprep.subr.mxu0 0.0
        %2438 = vmatpush1.msra.mxu0 0.0
        %2439 = vmatprep.subr.mxu0 0.0
        %2440 = vmatpush1.msra.mxu0 0.0
        %2441 = vmatprep.subr.mxu0 0.0
        %2442 = vmatpush1.msra.mxu0 0.0
        %2443 = vmatprep.subr.mxu0 0.0
        %2444 = vmatpush1.msra.mxu0 0.0
        %2445 = vmatprep.subr.mxu0 0.0
        %2446 = vmatpush1.msra.mxu0 0.0
        %2447 = vmatprep.subr.mxu0 0.0
        %2448 = vmatpush1.msra.mxu0 0.0
        %2449 = vmatprep.mubr.f32.mxu0 0.0
        %2450 = vmatmul.mubr.f32.gmra.mrb[0].mxu0 %v2043
        %v2451 = vpop.f32.mrb[0].mxu0
        %v2452 = vadd.f32 %v2310, %v2451
        %v2453 = vpop.f32.mrb[0].mxu0
        %v2454 = vadd.f32 %v2312, %v2453
        %2455 = vdwg.mxu0
        %v2456 = vld [vmem:[%s396] sm:$0x1]
        %v2457 = vld [vmem:[#allocation5 + $0x400] sm:$0xff]
        %v2458 = vld [vmem:[#allocation5 + $0x408] sm:$0xff]
        %v2459 = vld [vmem:[#allocation5 + $0x410] sm:$0xff]
        %v2460 = vld [vmem:[#allocation5 + $0x418] sm:$0xff]
        %v2461 = vld [vmem:[#allocation5 + $0x420] sm:$0xff]
        %v2462 = vld [vmem:[#allocation5 + $0x428] sm:$0xff]
        %v2463 = vld [vmem:[#allocation5 + $0x430] sm:$0xff]
        %v2464 = vld [vmem:[#allocation5 + $0x438] sm:$0xff]
        %v2465 = vld [vmem:[#allocation5 + $0x440] sm:$0xff]
        %v2466 = vld [vmem:[#allocation5 + $0x448] sm:$0xff]
        %v2467 = vld [vmem:[#allocation5 + $0x450] sm:$0xff]
        %v2468 = vld [vmem:[#allocation5 + $0x458] sm:$0xff]
        %v2469 = vld [vmem:[#allocation5 + $0x460] sm:$0xff]
        %v2470 = vld [vmem:[#allocation5 + $0x468] sm:$0xff]
        %v2471 = vld [vmem:[#allocation5 + $0x470] sm:$0xff]
        %v2472 = vld [vmem:[#allocation5 + $0x478] sm:$0xff]
        %v2473 = vld [vmem:[#allocation5 + $0x480] sm:$0xff]
        %v2474 = vld [vmem:[#allocation5 + $0x488] sm:$0xff]
        %v2475 = vld [vmem:[#allocation5 + $0x490] sm:$0xff]
        %v2476 = vld [vmem:[#allocation5 + $0x498] sm:$0xff]
        %v2477 = vld [vmem:[#allocation5 + $0x4a0] sm:$0xff]
        %v2478 = vld [vmem:[#allocation5 + $0x4a8] sm:$0xff]
        %v2479 = vld [vmem:[#allocation5 + $0x4b0] sm:$0xff]
        %v2480 = vld [vmem:[#allocation5 + $0x4b8] sm:$0xff]
        %v2481 = vld [vmem:[#allocation5 + $0x4c0] sm:$0xff]
        %v2482 = vld [vmem:[#allocation5 + $0x4c8] sm:$0xff]
        %v2483 = vld [vmem:[#allocation5 + $0x4d0] sm:$0xff]
        %v2484 = vld [vmem:[#allocation5 + $0x4d8] sm:$0xff]
        %v2485 = vld [vmem:[#allocation5 + $0x4e0] sm:$0xff]
        %v2486 = vld [vmem:[#allocation5 + $0x4e8] sm:$0xff]
        %v2487 = vld [vmem:[#allocation5 + $0x4f0] sm:$0xff]
        %v2488 = vld [vmem:[#allocation5 + $0x4f8] sm:$0xff]
        %v2489 = vld [vmem:[#allocation5 + $0x500] sm:$0xff]
        %v2490 = vld [vmem:[#allocation5 + $0x508] sm:$0xff]
        %v2491 = vld [vmem:[#allocation5 + $0x510] sm:$0xff]
        %v2492 = vld [vmem:[#allocation5 + $0x518] sm:$0xff]
        %v2493 = vld [vmem:[#allocation5 + $0x520] sm:$0xff]
        %v2494 = vld [vmem:[#allocation5 + $0x528] sm:$0xff]
        %v2495 = vld [vmem:[#allocation5 + $0x530] sm:$0xff]
        %v2496 = vld [vmem:[#allocation5 + $0x538] sm:$0xff]
        %v2497 = vld [vmem:[#allocation5 + $0x540] sm:$0xff]
        %v2498 = vld [vmem:[#allocation5 + $0x548] sm:$0xff]
        %v2499 = vld [vmem:[#allocation5 + $0x550] sm:$0xff]
        %v2500 = vld [vmem:[#allocation5 + $0x558] sm:$0xff]
        %v2501 = vld [vmem:[#allocation5 + $0x560] sm:$0xff]
        %v2502 = vld [vmem:[#allocation5 + $0x568] sm:$0xff]
        %v2503 = vld [vmem:[#allocation5 + $0x570] sm:$0xff]
        %v2504 = vld [vmem:[#allocation5 + $0x578] sm:$0xff]
        %v2505 = vld [vmem:[#allocation5 + $0x580] sm:$0xff]
        %v2506 = vld [vmem:[#allocation5 + $0x588] sm:$0xff]
        %v2507 = vld [vmem:[#allocation5 + $0x590] sm:$0xff]
        %v2508 = vld [vmem:[#allocation5 + $0x598] sm:$0xff]
        %v2509 = vld [vmem:[#allocation5 + $0x5a0] sm:$0xff]
        %v2510 = vld [vmem:[#allocation5 + $0x5a8] sm:$0xff]
        %v2511 = vld [vmem:[#allocation5 + $0x5b0] sm:$0xff]
        %v2512 = vld [vmem:[#allocation5 + $0x5b8] sm:$0xff]
        %v2513 = vld [vmem:[#allocation5 + $0x5c0] sm:$0xff]
        %v2514 = vld [vmem:[#allocation5 + $0x5c8] sm:$0xff]
        %v2515 = vld [vmem:[#allocation5 + $0x5d0] sm:$0xff]
        %v2516 = vld [vmem:[#allocation5 + $0x5d8] sm:$0xff]
        %v2517 = vld [vmem:[#allocation5 + $0x5e0] sm:$0xff]
        %v2518 = vld [vmem:[#allocation5 + $0x5e8] sm:$0xff]
        %v2519 = vld [vmem:[#allocation5 + $0x5f0] sm:$0xff]
        %v2520 = vld [vmem:[#allocation5 + $0x5f8] sm:$0xff]
        %2521 = vmatprep.subr.mxu0 %v2458
        %2522 = vmatpush1.msra.mxu0 %v2457
        %2523 = vmatprep.subr.mxu0 %v2462
        %2524 = vmatpush1.msra.mxu0 %v2461
        %2525 = vmatprep.subr.mxu0 %v2466
        %2526 = vmatpush1.msra.mxu0 %v2465
        %2527 = vmatprep.subr.mxu0 %v2470
        %2528 = vmatpush1.msra.mxu0 %v2469
        %2529 = vmatprep.subr.mxu0 %v2474
        %2530 = vmatpush1.msra.mxu0 %v2473
        %2531 = vmatprep.subr.mxu0 %v2478
        %2532 = vmatpush1.msra.mxu0 %v2477
        %2533 = vmatprep.subr.mxu0 %v2482
        %2534 = vmatpush1.msra.mxu0 %v2481
        %2535 = vmatprep.subr.mxu0 %v2486
        %2536 = vmatpush1.msra.mxu0 %v2485
        %2537 = vmatprep.subr.mxu0 %v2490
        %2538 = vmatpush1.msra.mxu0 %v2489
        %2539 = vmatprep.subr.mxu0 %v2494
        %2540 = vmatpush1.msra.mxu0 %v2493
        %2541 = vmatprep.subr.mxu0 %v2498
        %2542 = vmatpush1.msra.mxu0 %v2497
        %2543 = vmatprep.subr.mxu0 %v2502
        %2544 = vmatpush1.msra.mxu0 %v2501
        %2545 = vmatprep.subr.mxu0 %v2506
        %2546 = vmatpush1.msra.mxu0 %v2505
        %2547 = vmatprep.subr.mxu0 %v2510
        %2548 = vmatpush1.msra.mxu0 %v2509
        %2549 = vmatprep.subr.mxu0 %v2514
        %2550 = vmatpush1.msra.mxu0 %v2513
        %2551 = vmatprep.subr.mxu0 %v2518
        %2552 = vmatpush1.msra.mxu0 %v2517
        %2553 = vmatprep.subr.mxu0 0.0
        %2554 = vmatpush1.msra.mxu0 0.0
        %2555 = vmatprep.subr.mxu0 0.0
        %2556 = vmatpush1.msra.mxu0 0.0
        %2557 = vmatprep.subr.mxu0 0.0
        %2558 = vmatpush1.msra.mxu0 0.0
        %2559 = vmatprep.subr.mxu0 0.0
        %2560 = vmatpush1.msra.mxu0 0.0
        %2561 = vmatprep.subr.mxu0 0.0
        %2562 = vmatpush1.msra.mxu0 0.0
        %2563 = vmatprep.subr.mxu0 0.0
        %2564 = vmatpush1.msra.mxu0 0.0
        %2565 = vmatprep.subr.mxu0 0.0
        %2566 = vmatpush1.msra.mxu0 0.0
        %2567 = vmatprep.subr.mxu0 0.0
        %2568 = vmatpush1.msra.mxu0 0.0
        %2569 = vmatprep.subr.mxu0 0.0
        %2570 = vmatpush1.msra.mxu0 0.0
        %2571 = vmatprep.subr.mxu0 0.0
        %2572 = vmatpush1.msra.mxu0 0.0
        %2573 = vmatprep.subr.mxu0 0.0
        %2574 = vmatpush1.msra.mxu0 0.0
        %2575 = vmatprep.subr.mxu0 0.0
        %2576 = vmatpush1.msra.mxu0 0.0
        %2577 = vmatprep.subr.mxu0 0.0
        %2578 = vmatpush1.msra.mxu0 0.0
        %2579 = vmatprep.subr.mxu0 0.0
        %2580 = vmatpush1.msra.mxu0 0.0
        %2581 = vmatprep.subr.mxu0 0.0
        %2582 = vmatpush1.msra.mxu0 0.0
        %2583 = vmatprep.subr.mxu0 0.0
        %2584 = vmatpush1.msra.mxu0 0.0
        %2585 = vmatprep.mubr.f32.mxu0 0.0
        %2586 = vmatmul.mubr.f32.gmra.mrb[0].mxu0 %v2456
        %v2587 = vpop.f32.mrb[0].mxu0
        %v2588 = vadd.f32 0.0, %v2587
        %v2589 = vpop.f32.mrb[0].mxu0
        %v2590 = vadd.f32 0.0, %v2589
        %2591 = vdwg.mxu0
        %2592 = vmatprep.subr.mxu0 %v2460
        %2593 = vmatpush1.msra.mxu0 %v2459
        %2594 = vmatprep.subr.mxu0 %v2464
        %2595 = vmatpush1.msra.mxu0 %v2463
        %2596 = vmatprep.subr.mxu0 %v2468
        %2597 = vmatpush1.msra.mxu0 %v2467
        %2598 = vmatprep.subr.mxu0 %v2472
        %2599 = vmatpush1.msra.mxu0 %v2471
        %2600 = vmatprep.subr.mxu0 %v2476
        %2601 = vmatpush1.msra.mxu0 %v2475
        %2602 = vmatprep.subr.mxu0 %v2480
        %2603 = vmatpush1.msra.mxu0 %v2479
        %2604 = vmatprep.subr.mxu0 %v2484
        %2605 = vmatpush1.msra.mxu0 %v2483
        %2606 = vmatprep.subr.mxu0 %v2488
        %2607 = vmatpush1.msra.mxu0 %v2487
        %2608 = vmatprep.subr.mxu0 %v2492
        %2609 = vmatpush1.msra.mxu0 %v2491
        %2610 = vmatprep.subr.mxu0 %v2496
        %2611 = vmatpush1.msra.mxu0 %v2495
        %2612 = vmatprep.subr.mxu0 %v2500
        %2613 = vmatpush1.msra.mxu0 %v2499
        %2614 = vmatprep.subr.mxu0 %v2504
        %2615 = vmatpush1.msra.mxu0 %v2503
        %2616 = vmatprep.subr.mxu0 %v2508
        %2617 = vmatpush1.msra.mxu0 %v2507
        %2618 = vmatprep.subr.mxu0 %v2512
        %2619 = vmatpush1.msra.mxu0 %v2511
        %2620 = vmatprep.subr.mxu0 %v2516
        %2621 = vmatpush1.msra.mxu0 %v2515
        %2622 = vmatprep.subr.mxu0 %v2520
        %2623 = vmatpush1.msra.mxu0 %v2519
        %2624 = vmatprep.subr.mxu0 0.0
        %2625 = vmatpush1.msra.mxu0 0.0
        %2626 = vmatprep.subr.mxu0 0.0
        %2627 = vmatpush1.msra.mxu0 0.0
        %2628 = vmatprep.subr.mxu0 0.0
        %2629 = vmatpush1.msra.mxu0 0.0
        %2630 = vmatprep.subr.mxu0 0.0
        %2631 = vmatpush1.msra.mxu0 0.0
        %2632 = vmatprep.subr.mxu0 0.0
        %2633 = vmatpush1.msra.mxu0 0.0
        %2634 = vmatprep.subr.mxu0 0.0
        %2635 = vmatpush1.msra.mxu0 0.0
        %2636 = vmatprep.subr.mxu0 0.0
        %2637 = vmatpush1.msra.mxu0 0.0
        %2638 = vmatprep.subr.mxu0 0.0
        %2639 = vmatpush1.msra.mxu0 0.0
        %2640 = vmatprep.subr.mxu0 0.0
        %2641 = vmatpush1.msra.mxu0 0.0
        %2642 = vmatprep.subr.mxu0 0.0
        %2643 = vmatpush1.msra.mxu0 0.0
        %2644 = vmatprep.subr.mxu0 0.0
        %2645 = vmatpush1.msra.mxu0 0.0
        %2646 = vmatprep.subr.mxu0 0.0
        %2647 = vmatpush1.msra.mxu0 0.0
        %2648 = vmatprep.subr.mxu0 0.0
        %2649 = vmatpush1.msra.mxu0 0.0
        %2650 = vmatprep.subr.mxu0 0.0
        %2651 = vmatpush1.msra.mxu0 0.0
        %2652 = vmatprep.subr.mxu0 0.0
        %2653 = vmatpush1.msra.mxu0 0.0
        %2654 = vmatprep.subr.mxu0 0.0
        %2655 = vmatpush1.msra.mxu0 0.0
        %2656 = vmatprep.mubr.f32.mxu0 0.0
        %2657 = vmatmul.mubr.f32.gmra.mrb[0].mxu0 %v2456
        %v2658 = vpop.f32.mrb[0].mxu0
        %v2659 = vadd.f32 0.0, %v2658
        %v2660 = vpop.f32.mrb[0].mxu0
        %v2661 = vadd.f32 0.0, %v2660
        %2662 = vdwg.mxu0
        %v2663 = vadd.f32 %v2381, %v2588
        %v2664 = vadd.f32 %v2383, %v2590
        %v2665 = vadd.f32 %v2452, %v2659
        %v2666 = vadd.f32 %v2454, %v2661
        %v2668 = vrot.slane %v405, 1
        %v2670 = vadd.f32 %v2663, %v2668
        %v2671 = vsub.f32 0.0, %v2670
        %v2672 = vmul.f32 %v2671, 1.442695
        %v2673 = vpow.pop %v2672
        %v2674 = vadd.f32 %v2673, 1.0
        %v2675 = vrcp.pop %v2674
        %v2676 = vmul.f32 1.0, %v2675
        %v2677 = vrot.slane %v405, 2
        %v2679 = vadd.f32 %v2664, %v2677
        %v2680 = vsub.f32 0.0, %v2679
        %v2681 = vmul.f32 %v2680, 1.442695
        %v2682 = vpow.pop %v2681
        %v2683 = vadd.f32 %v2682, 1.0
        %v2684 = vrcp.pop %v2683
        %v2685 = vmul.f32 1.0, %v2684
        %v2686 = vrot.slane %v405, 3
        %v2688 = vadd.f32 %v2665, %v2686
        %v2689 = vtanh.pop %v2688
        %v2690 = vrot.slane %v405, 4
        %v2692 = vadd.f32 %v2666, %v2690
        %v2693 = vsub.f32 0.0, %v2692
        %v2694 = vmul.f32 %v2693, 1.442695
        %v2695 = vpow.pop %v2694
        %v2696 = vadd.f32 %v2695, 1.0
        %v2697 = vrcp.pop %v2696
        %v2698 = vmul.f32 1.0, %v2697
        %v2699 = vld [vmem:[%s399] sm:$0x1]
        %v2700 = vmul.f32 %v2685, %v2699
        %v2701 = vmul.f32 %v2676, %v2689
        %v2702 = vadd.f32 %v2700, %v2701
        %v2703 = vtanh.pop %v2702
        %v2704 = vmul.f32 %v2698, %v2703
        %v2705 = vld [vmem:[#allocation2 + $0x380] sm:$0xff]
        %v2706 = vld [vmem:[#allocation2 + $0x388] sm:$0xff]
        %v2707 = vld [vmem:[#allocation2 + $0x390] sm:$0xff]
        %v2708 = vld [vmem:[#allocation2 + $0x398] sm:$0xff]
        %v2709 = vld [vmem:[#allocation2 + $0x3a0] sm:$0xff]
        %v2710 = vld [vmem:[#allocation2 + $0x3a8] sm:$0xff]
        %v2711 = vld [vmem:[#allocation2 + $0x3b0] sm:$0xff]
        %v2712 = vld [vmem:[#allocation2 + $0x3b8] sm:$0xff]
        %v2713 = vld [vmem:[#allocation2 + $0x3c0] sm:$0xff]
        %v2714 = vld [vmem:[#allocation2 + $0x3c8] sm:$0xff]
        %v2715 = vld [vmem:[#allocation2 + $0x3d0] sm:$0xff]
        %v2716 = vld [vmem:[#allocation2 + $0x3d8] sm:$0xff]
        %v2717 = vld [vmem:[#allocation2 + $0x3e0] sm:$0xff]
        %v2718 = vld [vmem:[#allocation2 + $0x3e8] sm:$0xff]
        %v2719 = vld [vmem:[#allocation2 + $0x3f0] sm:$0xff]
        %v2720 = vld [vmem:[#allocation2 + $0x3f8] sm:$0xff]
        %2721 = vmatprep.subr.mxu0 0.0
        %2722 = vmatpush1.msra.mxu0 %v2705
        %2723 = vmatprep.subr.mxu0 0.0
        %2724 = vmatpush1.msra.mxu0 %v2706
        %2725 = vmatprep.subr.mxu0 0.0
        %2726 = vmatpush1.msra.mxu0 %v2707
        %2727 = vmatprep.subr.mxu0 0.0
        %2728 = vmatpush1.msra.mxu0 %v2708
        %2729 = vmatprep.subr.mxu0 0.0
        %2730 = vmatpush1.msra.mxu0 %v2709
        %2731 = vmatprep.subr.mxu0 0.0
        %2732 = vmatpush1.msra.mxu0 %v2710
        %2733 = vmatprep.subr.mxu0 0.0
        %2734 = vmatpush1.msra.mxu0 %v2711
        %2735 = vmatprep.subr.mxu0 0.0
        %2736 = vmatpush1.msra.mxu0 %v2712
        %2737 = vmatprep.subr.mxu0 0.0
        %2738 = vmatpush1.msra.mxu0 %v2713
        %2739 = vmatprep.subr.mxu0 0.0
        %2740 = vmatpush1.msra.mxu0 %v2714
        %2741 = vmatprep.subr.mxu0 0.0
        %2742 = vmatpush1.msra.mxu0 %v2715
        %2743 = vmatprep.subr.mxu0 0.0
        %2744 = vmatpush1.msra.mxu0 %v2716
        %2745 = vmatprep.subr.mxu0 0.0
        %2746 = vmatpush1.msra.mxu0 %v2717
        %2747 = vmatprep.subr.mxu0 0.0
        %2748 = vmatpush1.msra.mxu0 %v2718
        %2749 = vmatprep.subr.mxu0 0.0
        %2750 = vmatpush1.msra.mxu0 %v2719
        %2751 = vmatprep.subr.mxu0 0.0
        %2752 = vmatpush1.msra.mxu0 %v2720
        %2753 = vmatprep.subr.mxu0 0.0
        %2754 = vmatpush1.msra.mxu0 0.0
        %2755 = vmatprep.subr.mxu0 0.0
        %2756 = vmatpush1.msra.mxu0 0.0
        %2757 = vmatprep.subr.mxu0 0.0
        %2758 = vmatpush1.msra.mxu0 0.0
        %2759 = vmatprep.subr.mxu0 0.0
        %2760 = vmatpush1.msra.mxu0 0.0
        %2761 = vmatprep.subr.mxu0 0.0
        %2762 = vmatpush1.msra.mxu0 0.0
        %2763 = vmatprep.subr.mxu0 0.0
        %2764 = vmatpush1.msra.mxu0 0.0
        %2765 = vmatprep.subr.mxu0 0.0
        %2766 = vmatpush1.msra.mxu0 0.0
        %2767 = vmatprep.subr.mxu0 0.0
        %2768 = vmatpush1.msra.mxu0 0.0
        %2769 = vmatprep.subr.mxu0 0.0
        %2770 = vmatpush1.msra.mxu0 0.0
        %2771 = vmatprep.subr.mxu0 0.0
        %2772 = vmatpush1.msra.mxu0 0.0
        %2773 = vmatprep.subr.mxu0 0.0
        %2774 = vmatpush1.msra.mxu0 0.0
        %2775 = vmatprep.subr.mxu0 0.0
        %2776 = vmatpush1.msra.mxu0 0.0
        %2777 = vmatprep.subr.mxu0 0.0
        %2778 = vmatpush1.msra.mxu0 0.0
        %2779 = vmatprep.subr.mxu0 0.0
        %2780 = vmatpush1.msra.mxu0 0.0
        %2781 = vmatprep.subr.mxu0 0.0
        %2782 = vmatpush1.msra.mxu0 0.0
        %2783 = vmatprep.subr.mxu0 0.0
        %2784 = vmatpush1.msra.mxu0 0.0
        %2785 = vmatprep.mubr.f32.mxu0 0.0
        %2786 = vmatmul.mubr.f32.gmra.mrb[0].mxu0 %v2704
        %v2787 = vpop.f32.mrb[0].mxu0
        %v2788 = vadd.f32 %v405, %v2787
        %v2789 = vpop.f32.mrb[0].mxu0
        %2790 = vdwg.mxu0
        %2791 = vst [vmem:[%s378] sm:$0x1] %v2704
        %2792 = vst [vmem:[%s384] sm:$0x1] %v2702
        %2793 = vst [vmem:[%s402] sm:$0x1] %v2788
        %s2794 = sand.u32 %s199, 1
        %s2795 = scalar_lea.sflag [#allocation4], %s2794
        %s2796 = sand.u32 %s199, 1
        %s2797 = scalar_lea.vmem [#allocation7], %s2796
        %s2798 = sand.u32 %s225, 1
        %s2799 = scalar_lea.sflag [#allocation9], %s2798
        %s2800 = sand.u32 %s225, 1
        %s2801 = scalar_lea.vmem [#allocation8], %s2800
        %p2802 = scmp.lt.s32.totalorder %s29, 7
        %s2803 = scalar_select %p2802, %s29, 7
        %s2804 = scalar_lea.vmem %s9, %s2803
        // Predicated region
        $region57: #{gcn_attn_forward.1} parent=47 // pred_check
          %p2805 = pneg %p209
        $region58: #{gcn_attn_forward.1} parent=47 // pred_check_branch
          %2807 = sbr.rel (%p2805) target = $region60
        $region59: #{gcn_attn_forward.1} parent=47 // pred_region
          %s2809 = ssub.s32 16, 16
          %2810 = vsyncadd %s2795, %s2809
          %s2811 = smul.addr %s29, 16
          %s2812 = scalar_lea.hbm %s7, %s2811
          %s2814 = sshll.u32 %s2797, 4
          %s2815 = int_to_ptr.vmem [resolvable:$true] %s2814
          %2817 = dma.vmem_to_hbm [thread:$0]  %s2815, 16, %s2812, %s2795
        $region60: #{gcn_attn_forward.1} parent=47 // pred_fallthru
          _
        // Predicated region
        $region61: #{gcn_attn_forward.1} parent=47 // pred_check
          %p2818 = pneg %p235
        $region62: #{gcn_attn_forward.1} parent=47 // pred_check_branch
          %2820 = sbr.rel (%p2818) target = $region64
        $region63: #{gcn_attn_forward.1} parent=47 // pred_region
          %s2822 = ssub.s32 16, 16
          %2823 = vsyncadd %s2799, %s2822
          %s2824 = smul.addr %s29, 16
          %s2825 = scalar_lea.hbm %s8, %s2824
          %s2827 = sshll.u32 %s2801, 4
          %s2828 = int_to_ptr.vmem [resolvable:$true] %s2827
          %2830 = dma.vmem_to_hbm [thread:$0]  %s2828, 16, %s2825, %s2799
        $region64: #{gcn_attn_forward.1} parent=47 // pred_fallthru
          _
        // Predicated region
        $region65: #{gcn_attn_forward.1} parent=47 // pred_check
          %p2831 = pneg %p261
        $region66: #{gcn_attn_forward.1} parent=47 // pred_check_branch
          %2833 = sbr.rel (%p2831) target = $region68
        $region67: #{gcn_attn_forward.1} parent=47 // pred_region
          _
        $region68: #{gcn_attn_forward.1} parent=47 // pred_fallthru
          _
      $region48: #{gcn_attn_forward.1} parent=5 // pred_fallthru
        _
      %p2834 = scmp.le.s32.totalorder 2, %s24
      // Predicated region
      $region69: #{gcn_attn_forward.1} parent=5 // pred_check
        %p2835 = pneg %p2834
      $region70: #{gcn_attn_forward.1} parent=5 // pred_check_branch
        %2837 = sbr.rel (%p2835) target = $region72
      $region71: #{gcn_attn_forward.1} parent=5 // pred_region
        %s2838 = ssub.s32 %s24, 2
        // Predicated region
        $region73: #{gcn_attn_forward.1} parent=71 // pred_check
          %p2839 = pneg %p215
        $region74: #{gcn_attn_forward.1} parent=71 // pred_check_branch
          %2841 = sbr.rel (%p2839) target = $region76
        $region75: #{gcn_attn_forward.1} parent=71 // pred_region
          %s2842 = sand.u32 %s200, 1
          %s2843 = scalar_lea.sflag [#allocation4], %s2842
          %s2844 = sand.u32 %s200, 1
          %s2845 = scalar_lea.vmem [#allocation7], %s2844
          %2846 = dma.done %s2843, 16
        $region76: #{gcn_attn_forward.1} parent=71 // pred_fallthru
          _
        // Predicated region
        $region77: #{gcn_attn_forward.1} parent=71 // pred_check
          %p2847 = pneg %p241
        $region78: #{gcn_attn_forward.1} parent=71 // pred_check_branch
          %2849 = sbr.rel (%p2847) target = $region80
        $region79: #{gcn_attn_forward.1} parent=71 // pred_region
          %s2850 = sand.u32 %s226, 1
          %s2851 = scalar_lea.sflag [#allocation9], %s2850
          %s2852 = sand.u32 %s226, 1
          %s2853 = scalar_lea.vmem [#allocation8], %s2852
          %2854 = dma.done %s2851, 16
        $region80: #{gcn_attn_forward.1} parent=71 // pred_fallthru
          _
        // Predicated region
        $region81: #{gcn_attn_forward.1} parent=71 // pred_check
          %p2855 = pneg %p267
        $region82: #{gcn_attn_forward.1} parent=71 // pred_check_branch
          %2857 = sbr.rel (%p2855) target = $region84
        $region83: #{gcn_attn_forward.1} parent=71 // pred_region
          %p2858 = scmp.lt.s32.totalorder %s30, 7
          %s2859 = scalar_select %p2858, %s30, 7
          %s2860 = scalar_lea.vmem %s9, %s2859
        $region84: #{gcn_attn_forward.1} parent=71 // pred_fallthru
          _
      $region72: #{gcn_attn_forward.1} parent=5 // pred_fallthru
        _
    $region6: #{gcn_attn_forward.1} parent=1 // loop_footer
      %s28 = sadd.s32 1, %s24
    $region7: #{gcn_attn_forward.1} parent=1 // loop_footer_branch
      %23 = sbr.rel target = $region3
    $region8: #{gcn_attn_forward.1} parent=1 // loop_exit
      _
    %2861 = vsyncpa [#allocation3], 1
    %s2862 = scalar_lea.sflag [#allocation3], 1
    %2863 = vsyncpa %s2862, 1
    %2864 = vsyncpa [#allocation6], 1
    %2865 = vsyncpa [#allocation4], 1
    %s2866 = scalar_lea.sflag [#allocation4], 1
    %2867 = vsyncpa %s2866, 1
    %2868 = vsyncpa [#allocation9], 1
    %s2869 = scalar_lea.sflag [#allocation9], 1
    %2870 = vsyncpa %s2869, 1

</llo_original>
